<compile_context>
chip_gen: v7x
topology: tpu7x:2x2x1
jax: 0.10.0
libtpu: 0.0.40
codegen_flags: <defaults>
</compile_context>

<pallas_src>
import functools

import jax
import jax.numpy as jnp
from jax.experimental import pallas as pl
from jax.experimental.pallas import tpu as pltpu

LN_EPS = 1e-5  # torch.nn.LayerNorm default eps


# ------------------------------ in-kernel math ------------------------------

def _layer_norm(x, gamma, beta):
    # x: (N, D) or (B, N, D); gamma/beta: (1, D) — broadcast over leading dims.
    mean = jnp.mean(x, axis=-1, keepdims=True)
    var = jnp.mean(jnp.square(x - mean), axis=-1, keepdims=True)
    return (x - mean) * jax.lax.rsqrt(var + LN_EPS) * gamma + beta


def _erf(x):
    # Abramowitz & Stegun 7.1.26 rational approximation, |err| <= 1.5e-7
    # (uses only exp / arithmetic, guaranteed to lower on Mosaic).
    a1, a2, a3, a4, a5 = 0.254829592, -0.284496736, 1.421413741, -1.453152027, 1.061405429
    p = 0.3275911
    s = jnp.where(x >= 0.0, 1.0, -1.0)
    z = jnp.abs(x)
    t = 1.0 / (1.0 + p * z)
    poly = ((((a5 * t + a4) * t + a3) * t + a2) * t + a1) * t
    return s * (1.0 - poly * jnp.exp(-z * z))


def _gelu_exact(x):
    # PyTorch nn.GELU() default ("none" approximation): 0.5*x*(1+erf(x/sqrt(2)))
    return 0.5 * x * (1.0 + _erf(x * 0.7071067811865476))


# ------------------------------ fused layer kernel ---------------------------

def layer_kernel(x_ref, ln1g_ref, ln1b_ref, wq_ref, wk_ref, wv_ref,
                 wo_ref, bo_ref, ln2g_ref, ln2b_ref,
                 w1_ref, bh_ref, w2_ref, b2_ref, o_ref):
    """One full transformer layer for one batch element:
       x = x + to_out(Attention(LN1(x)));  x = x + MLP(LN2(x))."""
    f32, bf16 = jnp.float32, jnp.bfloat16

    x = x_ref[0]                                      # (N, D) f32 residual stream
    N, D = x.shape
    heads = wq_ref.shape[0]

    # ---- attention sub-block ------------------------------------------------
    xn = _layer_norm(x, ln1g_ref[...], ln1b_ref[...]).astype(bf16)   # (N, D)
    xb = jnp.broadcast_to(xn, (heads, N, D))                         # (H, N, D)

    # Head-batched projections; softmax scale already folded into Wq.
    q = jnp.einsum('hnd,hde->hne', xb, wq_ref[...], preferred_element_type=f32)
    k = jnp.einsum('hnd,hde->hne', xb, wk_ref[...], preferred_element_type=f32)
    v = jnp.einsum('hnd,hde->hne', xb, wv_ref[...], preferred_element_type=f32)

    dots = jnp.einsum('hne,hme->hnm', q.astype(bf16), k.astype(bf16),
                      preferred_element_type=f32)                    # (H, N, N)
    attn = jax.nn.softmax(dots, axis=-1)                             # f32
    outh = jnp.einsum('hnm,hme->hne', attn.astype(bf16), v.astype(bf16),
                      preferred_element_type=f32)                    # (H, N, dh)

    # Per-head output projection then sum over heads == concat(out) @ Wout.
    projh = jnp.einsum('hne,hed->hnd', outh.astype(bf16), wo_ref[...],
                       preferred_element_type=f32)                   # (H, N, D)
    x = x + projh.sum(axis=0) + bo_ref[...]                          # residual

    # ---- feed-forward sub-block --------------------------------------------
    xn2 = _layer_norm(x, ln2g_ref[...], ln2b_ref[...]).astype(bf16)
    h = jnp.dot(xn2, w1_ref[...], preferred_element_type=f32) + bh_ref[...]
    h = _gelu_exact(h).astype(bf16)
    y = jnp.dot(h, w2_ref[...], preferred_element_type=f32) + b2_ref[...]
    # TODO(synk): nn.Dropout with dropout=0.0 is the identity; omitted.

    o_ref[0] = (x + y).astype(o_ref.dtype)


# ------------------------------ host wrappers -------------------------------

def _full(shape):
    return pl.BlockSpec(shape, lambda b: tuple(0 for _ in shape))


def transformer_layer(x, lp, heads, dim_head, mlp_dim):
    """One fused (attention + FF) layer; grid over batch only."""
    B, N, D = x.shape
    dh = dim_head
    return pl.pallas_call(
        layer_kernel,
        out_shape=jax.ShapeDtypeStruct((B, N, D), x.dtype),
        grid=(B,),
        in_specs=[
            pl.BlockSpec((1, N, D), lambda b: (b, 0, 0)),   # x
            _full((1, D)), _full((1, D)),                   # ln1 gamma/beta
            _full((heads, D, dh)),                          # Wq (scaled)
            _full((heads, D, dh)),                          # Wk
            _full((heads, D, dh)),                          # Wv
            _full((heads, dh, D)),                          # Wout (head-major)
            _full((1, D)),                                  # bout
            _full((1, D)), _full((1, D)),                   # ln2 gamma/beta
            _full((D, mlp_dim)), _full((1, mlp_dim)),       # W1, b1
            _full((mlp_dim, D)), _full((1, D)),             # W2, b2
        ],
        out_specs=pl.BlockSpec((1, N, D), lambda b: (b, 0, 0)),
        input_output_aliases={0: 0},                        # reuse x's buffer
        compiler_params=pltpu.CompilerParams(
            dimension_semantics=("parallel",),              # megacore on v7x
            vmem_limit_bytes=48 * 1024 * 1024,
        ),
    )(x, lp["ln1_g"], lp["ln1_b"], lp["wq"], lp["wk"], lp["wv"],
      lp["wo"], lp["bo"], lp["ln2_g"], lp["ln2_b"],
      lp["w1"], lp["b1"], lp["w2"], lp["b2"])


def transformer_forward(x, layer_params, heads, dim_head, mlp_dim):
    for lp in layer_params:
        x = transformer_layer(x, lp, heads, dim_head, mlp_dim)
    return x


# -------------------- one-time host-side parameter prep ---------------------

def prepare_layer(p, heads, dim_head):
    """Head-major, bf16 weights with the softmax scale folded into Wq.
       Done once on the host (plain JAX) — no in-kernel relayouts needed."""
    D = p["wqkv"].shape[0]
    inner = heads * dim_head
    scale = dim_head ** (-0.5)

    def head_major(w):  # (D, inner) -> (heads, D, dim_head)
        return jnp.transpose(w.reshape(D, heads, dim_head), (1, 0, 2))

    wqkv = p["wqkv"]
    return dict(
        ln1_g=p["ln1_g"], ln1_b=p["ln1_b"],
        wq=head_major(wqkv[:, 0 * inner:1 * inner] * scale).astype(jnp.bfloat16),
        wk=head_major(wqkv[:, 1 * inner:2 * inner]).astype(jnp.bfloat16),
        wv=head_major(wqkv[:, 2 * inner:3 * inner]).astype(jnp.bfloat16),
        wo=p["wout"].reshape(heads, dim_head, D).astype(jnp.bfloat16),
        bo=p["bout"],
        ln2_g=p["ln2_g"], ln2_b=p["ln2_b"],
        w1=p["w1"].astype(jnp.bfloat16), b1=p["b1"],
        w2=p["w2"].astype(jnp.bfloat16), b2=p["b2"],
    )


# -------------------------- deterministic parameters ------------------------

def init_params(key, dim, depth, heads, dim_head, mlp_dim):
    inner = heads * dim_head
    params = []
    for _ in range(depth):
        key, k0, k1, k2, k3, k4, k5, k6 = jax.random.split(key, 8)
        params.append(dict(
            ln1_g=jnp.ones((1, dim), jnp.float32),
            ln1_b=jnp.zeros((1, dim), jnp.float32),
            wqkv=0.02 * jax.random.normal(k0, (dim, 3 * inner), jnp.float32),
            wout=0.02 * jax.random.normal(k1, (inner, dim), jnp.float32),
            bout=0.02 * jax.random.normal(k2, (1, dim), jnp.float32),
            ln2_g=jnp.ones((1, dim), jnp.float32),
            ln2_b=jnp.zeros((1, dim), jnp.float32),
            w1=0.02 * jax.random.normal(k3, (dim, mlp_dim), jnp.float32),
            b1=0.02 * jax.random.normal(k4, (1, mlp_dim), jnp.float32),
            w2=0.02 * jax.random.normal(k5, (mlp_dim, dim), jnp.float32),
            b2=0.02 * jax.random.normal(k6, (1, dim), jnp.float32),
        ))
    return params


# ------------------------------ pure-JAX reference --------------------------

def transformer_reference(x, params, heads, dim_head):
    B, N, _ = x.shape
    for p in params:
        xn = _layer_norm(x, p["ln1_g"], p["ln1_b"])
        qkv = xn @ p["wqkv"]
        q, k, v = jnp.split(qkv, 3, axis=-1)
        split = lambda t: t.reshape(B, N, heads, dim_head).transpose(0, 2, 1, 3)
        q, k, v = split(q), split(k), split(v)
        dots = jnp.einsum("bhnd,bhmd->bhnm", q, k) * dim_head ** (-0.5)
        attn = jax.nn.softmax(dots, axis=-1)
        out = jnp.einsum("bhnm,bhmd->bhnd", attn, v)
        out = out.transpose(0, 2, 1, 3).reshape(B, N, heads * dim_head)
        x = out @ p["wout"] + p["bout"] + x
        xn = _layer_norm(x, p["ln2_g"], p["ln2_b"])
        h = jax.nn.gelu(xn @ p["w1"] + p["b1"], approximate=False)
        x = h @ p["w2"] + p["b2"] + x
    return x


# ----------------------------------- main ------------------------------------

if __name__ == "__main__":
    B, N = 2, 8
    dim, depth, heads, dim_head, mlp_dim = 32, 2, 4, 8, 64

    key = jax.random.PRNGKey(0)
    kx, kp = jax.random.split(key)
    x = jax.random.normal(kx, (B, N, dim), jnp.float32)
    params = init_params(kp, dim, depth, heads, dim_head, mlp_dim)
    kernel_params = [prepare_layer(p, heads, dim_head) for p in params]

    fwd = jax.jit(functools.partial(transformer_forward, heads=heads,
                                    dim_head=dim_head, mlp_dim=mlp_dim))
    out = jax.block_until_ready(fwd(x, kernel_params))

    ref = jax.block_until_ready(transformer_reference(x, params, heads, dim_head))
    assert out.shape == (B, N, dim)
    assert bool(jnp.all(jnp.isfinite(out)))
    # bf16 matmul operands (f32 accumulation) vs. the all-f32 reference.
    assert bool(jnp.allclose(out, ref, atol=2e-2, rtol=2e-2)), "mismatch vs reference"

    print("KERNEL_OK")
</pallas_src>

<mosaic_0001>
module attributes {stable_mosaic.version = 11 : i64} {
  func.func @layer_kernel(%arg0: i32, %arg1: memref<1x8x32xf32, #tpu.memory_space<vmem>>, %arg2: memref<1x32xf32, #tpu.memory_space<vmem>>, %arg3: memref<1x32xf32, #tpu.memory_space<vmem>>, %arg4: memref<4x32x8xbf16, #tpu.memory_space<vmem>>, %arg5: memref<4x32x8xbf16, #tpu.memory_space<vmem>>, %arg6: memref<4x32x8xbf16, #tpu.memory_space<vmem>>, %arg7: memref<4x8x32xbf16, #tpu.memory_space<vmem>>, %arg8: memref<1x32xf32, #tpu.memory_space<vmem>>, %arg9: memref<1x32xf32, #tpu.memory_space<vmem>>, %arg10: memref<1x32xf32, #tpu.memory_space<vmem>>, %arg11: memref<32x64xbf16, #tpu.memory_space<vmem>>, %arg12: memref<1x64xf32, #tpu.memory_space<vmem>>, %arg13: memref<64x32xbf16, #tpu.memory_space<vmem>>, %arg14: memref<1x32xf32, #tpu.memory_space<vmem>>, %arg15: memref<1x8x32xf32, #tpu.memory_space<vmem>>) attributes {dimension_semantics = [#tpu.dimension_semantics<parallel>], iteration_bounds = array<i64: 2>, scalar_prefetch = 0 : i64, scratch_operands = 0 : i64, tpu.core_type = #tpu.core_type<tc>, window_params = [{transform_indices = @transform_0, window_bounds = array<i64: 1, 8, 32>}, {pipeline_mode = #tpu.pipeline_mode<synchronous>, transform_indices = @transform_1, window_bounds = array<i64: 1, 32>}, {pipeline_mode = #tpu.pipeline_mode<synchronous>, transform_indices = @transform_2, window_bounds = array<i64: 1, 32>}, {pipeline_mode = #tpu.pipeline_mode<synchronous>, transform_indices = @transform_3, window_bounds = array<i64: 4, 32, 8>}, {pipeline_mode = #tpu.pipeline_mode<synchronous>, transform_indices = @transform_4, window_bounds = array<i64: 4, 32, 8>}, {pipeline_mode = #tpu.pipeline_mode<synchronous>, transform_indices = @transform_5, window_bounds = array<i64: 4, 32, 8>}, {pipeline_mode = #tpu.pipeline_mode<synchronous>, transform_indices = @transform_6, window_bounds = array<i64: 4, 8, 32>}, {pipeline_mode = #tpu.pipeline_mode<synchronous>, transform_indices = @transform_7, window_bounds = array<i64: 1, 32>}, {pipeline_mode = #tpu.pipeline_mode<synchronous>, transform_indices = @transform_8, window_bounds = array<i64: 1, 32>}, {pipeline_mode = #tpu.pipeline_mode<synchronous>, transform_indices = @transform_9, window_bounds = array<i64: 1, 32>}, {pipeline_mode = #tpu.pipeline_mode<synchronous>, transform_indices = @transform_10, window_bounds = array<i64: 32, 64>}, {pipeline_mode = #tpu.pipeline_mode<synchronous>, transform_indices = @transform_11, window_bounds = array<i64: 1, 64>}, {pipeline_mode = #tpu.pipeline_mode<synchronous>, transform_indices = @transform_12, window_bounds = array<i64: 64, 32>}, {pipeline_mode = #tpu.pipeline_mode<synchronous>, transform_indices = @transform_13, window_bounds = array<i64: 1, 32>}, {transform_indices = @transform_14, window_bounds = array<i64: 1, 8, 32>}]} {
    %c0 = arith.constant 0 : index
    %c0_0 = arith.constant 0 : index
    %c0_1 = arith.constant 0 : index
    %0 = vector.load %arg1[%c0, %c0_0, %c0_1] : memref<1x8x32xf32, #tpu.memory_space<vmem>>, vector<1x8x32xf32>
    %1 = vector.shape_cast %0 : vector<1x8x32xf32> to vector<8x32xf32>
    %c0_2 = arith.constant 0 : index
    %c0_3 = arith.constant 0 : index
    %2 = vector.load %arg2[%c0_2, %c0_3] : memref<1x32xf32, #tpu.memory_space<vmem>>, vector<1x32xf32>
    %c0_4 = arith.constant 0 : index
    %c0_5 = arith.constant 0 : index
    %3 = vector.load %arg3[%c0_4, %c0_5] : memref<1x32xf32, #tpu.memory_space<vmem>>, vector<1x32xf32>
    %cst = arith.constant dense<0.000000e+00> : vector<8xf32>
    %4 = vector.multi_reduction <add>, %1, %cst [1] : vector<8x32xf32> to vector<8xf32>
    %5 = vector.shape_cast %4 : vector<8xf32> to vector<8x1xf32>
    %cst_6 = arith.constant 3.200000e+01 : f32
    %6 = vector.broadcast %cst_6 : f32 to vector<8x1xf32>
    %7 = arith.divf %5, %6 : vector<8x1xf32>
    %8 = vector.broadcast %7 : vector<8x1xf32> to vector<8x32xf32>
    %9 = arith.subf %1, %8 : vector<8x32xf32>
    %10 = arith.mulf %9, %9 : vector<8x32xf32>
    %cst_7 = arith.constant dense<0.000000e+00> : vector<8xf32>
    %11 = vector.multi_reduction <add>, %10, %cst_7 [1] : vector<8x32xf32> to vector<8xf32>
    %12 = vector.shape_cast %11 : vector<8xf32> to vector<8x1xf32>
    %cst_8 = arith.constant 3.200000e+01 : f32
    %13 = vector.broadcast %cst_8 : f32 to vector<8x1xf32>
    %14 = arith.divf %12, %13 : vector<8x1xf32>
    %15 = vector.broadcast %7 : vector<8x1xf32> to vector<8x32xf32>
    %16 = arith.subf %1, %15 : vector<8x32xf32>
    %cst_9 = arith.constant 9.99999974E-6 : f32
    %17 = vector.broadcast %cst_9 : f32 to vector<8x1xf32>
    %18 = arith.addf %14, %17 : vector<8x1xf32>
    %19 = math.rsqrt %18 : vector<8x1xf32>
    %20 = vector.broadcast %19 : vector<8x1xf32> to vector<8x32xf32>
    %21 = arith.mulf %16, %20 : vector<8x32xf32>
    %22 = vector.broadcast %2 : vector<1x32xf32> to vector<8x32xf32>
    %23 = arith.mulf %21, %22 : vector<8x32xf32>
    %24 = vector.broadcast %3 : vector<1x32xf32> to vector<8x32xf32>
    %25 = arith.addf %23, %24 : vector<8x32xf32>
    %26 = arith.truncf %25 : vector<8x32xf32> to vector<8x32xbf16>
    %27 = vector.shape_cast %26 : vector<8x32xbf16> to vector<1x8x32xbf16>
    %28 = vector.broadcast %27 : vector<1x8x32xbf16> to vector<4x8x32xbf16>
    %c0_10 = arith.constant 0 : index
    %c0_11 = arith.constant 0 : index
    %c0_12 = arith.constant 0 : index
    %29 = vector.load %arg4[%c0_10, %c0_11, %c0_12] : memref<4x32x8xbf16, #tpu.memory_space<vmem>>, vector<4x32x8xbf16>
    "tpu.trace_start"() <{level = 10 : i32, message = "hnd,hde->hne"}> : () -> ()
    %cst_13 = arith.constant dense<0.000000e+00> : vector<4x8x8xf32>
    %30 = tpu.matmul %28, %29, %cst_13 {dimension_numbers = #tpu.dot_dimension_numbers<[2], [1], [1], [2], [0, 0, 0, 1, 1, 2], [0], [0]>} : vector<4x8x32xbf16>, vector<4x32x8xbf16>, vector<4x8x8xf32> -> vector<4x8x8xf32>
    "tpu.trace_stop"() : () -> ()
    %c0_14 = arith.constant 0 : index
    %c0_15 = arith.constant 0 : index
    %c0_16 = arith.constant 0 : index
    %31 = vector.load %arg5[%c0_14, %c0_15, %c0_16] : memref<4x32x8xbf16, #tpu.memory_space<vmem>>, vector<4x32x8xbf16>
    "tpu.trace_start"() <{level = 10 : i32, message = "hnd,hde->hne"}> : () -> ()
    %cst_17 = arith.constant dense<0.000000e+00> : vector<4x8x8xf32>
    %32 = tpu.matmul %28, %31, %cst_17 {dimension_numbers = #tpu.dot_dimension_numbers<[2], [1], [1], [2], [0, 0, 0, 1, 1, 2], [0], [0]>} : vector<4x8x32xbf16>, vector<4x32x8xbf16>, vector<4x8x8xf32> -> vector<4x8x8xf32>
    "tpu.trace_stop"() : () -> ()
    %c0_18 = arith.constant 0 : index
    %c0_19 = arith.constant 0 : index
    %c0_20 = arith.constant 0 : index
    %33 = vector.load %arg6[%c0_18, %c0_19, %c0_20] : memref<4x32x8xbf16, #tpu.memory_space<vmem>>, vector<4x32x8xbf16>
    "tpu.trace_start"() <{level = 10 : i32, message = "hnd,hde->hne"}> : () -> ()
    %cst_21 = arith.constant dense<0.000000e+00> : vector<4x8x8xf32>
    %34 = tpu.matmul %28, %33, %cst_21 {dimension_numbers = #tpu.dot_dimension_numbers<[2], [1], [1], [2], [0, 0, 0, 1, 1, 2], [0], [0]>} : vector<4x8x32xbf16>, vector<4x32x8xbf16>, vector<4x8x8xf32> -> vector<4x8x8xf32>
    "tpu.trace_stop"() : () -> ()
    %35 = arith.truncf %30 : vector<4x8x8xf32> to vector<4x8x8xbf16>
    %36 = arith.truncf %32 : vector<4x8x8xf32> to vector<4x8x8xbf16>
    "tpu.trace_start"() <{level = 10 : i32, message = "hne,hme->hnm"}> : () -> ()
    %cst_22 = arith.constant dense<0.000000e+00> : vector<4x8x8xf32>
    %37 = tpu.matmul %35, %36, %cst_22 {dimension_numbers = #tpu.dot_dimension_numbers<[2], [2], [1], [1], [0, 0, 0, 1, 1, 1], [0], [0]>} : vector<4x8x8xbf16>, vector<4x8x8xbf16>, vector<4x8x8xf32> -> vector<4x8x8xf32>
    "tpu.trace_stop"() : () -> ()
    %cst_23 = arith.constant dense<0xFF800000> : vector<4x8xf32>
    %38 = vector.multi_reduction <maximumf>, %37, %cst_23 [2] : vector<4x8x8xf32> to vector<4x8xf32>
    %cst_24 = arith.constant 0xFF800000 : f32
    %39 = vector.broadcast %cst_24 : f32 to vector<4x8xf32>
    %40 = arith.maximumf %39, %38 : vector<4x8xf32>
    %41 = vector.shape_cast %40 : vector<4x8xf32> to vector<4x8x1xf32>
    %42 = vector.broadcast %41 : vector<4x8x1xf32> to vector<4x8x8xf32>
    %43 = arith.subf %37, %42 : vector<4x8x8xf32>
    %44 = math.exp %43 : vector<4x8x8xf32>
    %cst_25 = arith.constant dense<0.000000e+00> : vector<4x8xf32>
    %45 = vector.multi_reduction <add>, %44, %cst_25 [2] : vector<4x8x8xf32> to vector<4x8xf32>
    %46 = vector.shape_cast %45 : vector<4x8xf32> to vector<4x8x1xf32>
    %47 = vector.broadcast %46 : vector<4x8x1xf32> to vector<4x8x8xf32>
    %48 = arith.divf %44, %47 : vector<4x8x8xf32>
    %49 = arith.truncf %48 : vector<4x8x8xf32> to vector<4x8x8xbf16>
    %50 = arith.truncf %34 : vector<4x8x8xf32> to vector<4x8x8xbf16>
    "tpu.trace_start"() <{level = 10 : i32, message = "hnm,hme->hne"}> : () -> ()
    %cst_26 = arith.constant dense<0.000000e+00> : vector<4x8x8xf32>
    %51 = tpu.matmul %49, %50, %cst_26 {dimension_numbers = #tpu.dot_dimension_numbers<[2], [1], [1], [2], [0, 0, 0, 1, 1, 2], [0], [0]>} : vector<4x8x8xbf16>, vector<4x8x8xbf16>, vector<4x8x8xf32> -> vector<4x8x8xf32>
    "tpu.trace_stop"() : () -> ()
    %52 = arith.truncf %51 : vector<4x8x8xf32> to vector<4x8x8xbf16>
    %c0_27 = arith.constant 0 : index
    %c0_28 = arith.constant 0 : index
    %c0_29 = arith.constant 0 : index
    %53 = vector.load %arg7[%c0_27, %c0_28, %c0_29] : memref<4x8x32xbf16, #tpu.memory_space<vmem>>, vector<4x8x32xbf16>
    "tpu.trace_start"() <{level = 10 : i32, message = "hne,hed->hnd"}> : () -> ()
    %cst_30 = arith.constant dense<0.000000e+00> : vector<4x8x32xf32>
    %54 = tpu.matmul %52, %53, %cst_30 {dimension_numbers = #tpu.dot_dimension_numbers<[2], [1], [1], [2], [0, 0, 0, 1, 1, 2], [0], [0]>} : vector<4x8x8xbf16>, vector<4x8x32xbf16>, vector<4x8x32xf32> -> vector<4x8x32xf32>
    "tpu.trace_stop"() : () -> ()
    %cst_31 = arith.constant dense<0.000000e+00> : vector<8x32xf32>
    %55 = vector.multi_reduction <add>, %54, %cst_31 [0] : vector<4x8x32xf32> to vector<8x32xf32>
    %56 = arith.addf %1, %55 : vector<8x32xf32>
    %c0_32 = arith.constant 0 : index
    %c0_33 = arith.constant 0 : index
    %57 = vector.load %arg8[%c0_32, %c0_33] : memref<1x32xf32, #tpu.memory_space<vmem>>, vector<1x32xf32>
    %58 = vector.broadcast %57 : vector<1x32xf32> to vector<8x32xf32>
    %59 = arith.addf %56, %58 : vector<8x32xf32>
    %c0_34 = arith.constant 0 : index
    %c0_35 = arith.constant 0 : index
    %60 = vector.load %arg9[%c0_34, %c0_35] : memref<1x32xf32, #tpu.memory_space<vmem>>, vector<1x32xf32>
    %c0_36 = arith.constant 0 : index
    %c0_37 = arith.constant 0 : index
    %61 = vector.load %arg10[%c0_36, %c0_37] : memref<1x32xf32, #tpu.memory_space<vmem>>, vector<1x32xf32>
    %cst_38 = arith.constant dense<0.000000e+00> : vector<8xf32>
    %62 = vector.multi_reduction <add>, %59, %cst_38 [1] : vector<8x32xf32> to vector<8xf32>
    %63 = vector.shape_cast %62 : vector<8xf32> to vector<8x1xf32>
    %cst_39 = arith.constant 3.200000e+01 : f32
    %64 = vector.broadcast %cst_39 : f32 to vector<8x1xf32>
    %65 = arith.divf %63, %64 : vector<8x1xf32>
    %66 = vector.broadcast %65 : vector<8x1xf32> to vector<8x32xf32>
    %67 = arith.subf %59, %66 : vector<8x32xf32>
    %68 = arith.mulf %67, %67 : vector<8x32xf32>
    %cst_40 = arith.constant dense<0.000000e+00> : vector<8xf32>
    %69 = vector.multi_reduction <add>, %68, %cst_40 [1] : vector<8x32xf32> to vector<8xf32>
    %70 = vector.shape_cast %69 : vector<8xf32> to vector<8x1xf32>
    %cst_41 = arith.constant 3.200000e+01 : f32
    %71 = vector.broadcast %cst_41 : f32 to vector<8x1xf32>
    %72 = arith.divf %70, %71 : vector<8x1xf32>
    %73 = vector.broadcast %65 : vector<8x1xf32> to vector<8x32xf32>
    %74 = arith.subf %59, %73 : vector<8x32xf32>
    %cst_42 = arith.constant 9.99999974E-6 : f32
    %75 = vector.broadcast %cst_42 : f32 to vector<8x1xf32>
    %76 = arith.addf %72, %75 : vector<8x1xf32>
    %77 = math.rsqrt %76 : vector<8x1xf32>
    %78 = vector.broadcast %77 : vector<8x1xf32> to vector<8x32xf32>
    %79 = arith.mulf %74, %78 : vector<8x32xf32>
    %80 = vector.broadcast %60 : vector<1x32xf32> to vector<8x32xf32>
    %81 = arith.mulf %79, %80 : vector<8x32xf32>
    %82 = vector.broadcast %61 : vector<1x32xf32> to vector<8x32xf32>
    %83 = arith.addf %81, %82 : vector<8x32xf32>
    %84 = arith.truncf %83 : vector<8x32xf32> to vector<8x32xbf16>
    %c0_43 = arith.constant 0 : index
    %c0_44 = arith.constant 0 : index
    %85 = vector.load %arg11[%c0_43, %c0_44] : memref<32x64xbf16, #tpu.memory_space<vmem>>, vector<32x64xbf16>
    %cst_45 = arith.constant dense<0.000000e+00> : vector<8x64xf32>
    %86 = tpu.matmul %84, %85, %cst_45 {dimension_numbers = #tpu.dot_dimension_numbers<[1], [0], [0], [1], [0, 0, 1, 1], [], []>} : vector<8x32xbf16>, vector<32x64xbf16>, vector<8x64xf32> -> vector<8x64xf32>
    %c0_46 = arith.constant 0 : index
    %c0_47 = arith.constant 0 : index
    %87 = vector.load %arg12[%c0_46, %c0_47] : memref<1x64xf32, #tpu.memory_space<vmem>>, vector<1x64xf32>
    %88 = vector.broadcast %87 : vector<1x64xf32> to vector<8x64xf32>
    %89 = arith.addf %86, %88 : vector<8x64xf32>
    %cst_48 = arith.constant 5.000000e-01 : f32
    %90 = vector.broadcast %cst_48 : f32 to vector<8x64xf32>
    %91 = arith.mulf %90, %89 : vector<8x64xf32>
    %cst_49 = arith.constant 0.707106769 : f32
    %92 = vector.broadcast %cst_49 : f32 to vector<8x64xf32>
    %93 = arith.mulf %89, %92 : vector<8x64xf32>
    %cst_50 = arith.constant 0.000000e+00 : f32
    %94 = vector.broadcast %cst_50 : f32 to vector<8x64xf32>
    %95 = arith.cmpf oge, %93, %94 : vector<8x64xf32>
    %cst_51 = arith.constant 1.000000e+00 : f32
    %cst_52 = arith.constant -1.000000e+00 : f32
    %96 = vector.broadcast %cst_51 : f32 to vector<8x64xf32>
    %97 = vector.broadcast %cst_52 : f32 to vector<8x64xf32>
    %98 = arith.select %95, %96, %97 : vector<8x64xi1>, vector<8x64xf32>
    %99 = math.absf %93 : vector<8x64xf32>
    %cst_53 = arith.constant 0.327591091 : f32
    %100 = vector.broadcast %cst_53 : f32 to vector<8x64xf32>
    %101 = arith.mulf %100, %99 : vector<8x64xf32>
    %cst_54 = arith.constant 1.000000e+00 : f32
    %102 = vector.broadcast %cst_54 : f32 to vector<8x64xf32>
    %103 = arith.addf %102, %101 : vector<8x64xf32>
    %cst_55 = arith.constant 1.000000e+00 : f32
    %104 = vector.broadcast %cst_55 : f32 to vector<8x64xf32>
    %105 = arith.divf %104, %103 : vector<8x64xf32>
    %cst_56 = arith.constant 1.06140542 : f32
    %106 = vector.broadcast %cst_56 : f32 to vector<8x64xf32>
    %107 = arith.mulf %106, %105 : vector<8x64xf32>
    %cst_57 = arith.constant -1.45315206 : f32
    %108 = vector.broadcast %cst_57 : f32 to vector<8x64xf32>
    %109 = arith.addf %107, %108 : vector<8x64xf32>
    %110 = arith.mulf %109, %105 : vector<8x64xf32>
    %cst_58 = arith.constant 1.42141378 : f32
    %111 = vector.broadcast %cst_58 : f32 to vector<8x64xf32>
    %112 = arith.addf %110, %111 : vector<8x64xf32>
    %113 = arith.mulf %112, %105 : vector<8x64xf32>
    %cst_59 = arith.constant -0.284496725 : f32
    %114 = vector.broadcast %cst_59 : f32 to vector<8x64xf32>
    %115 = arith.addf %113, %114 : vector<8x64xf32>
    %116 = arith.mulf %115, %105 : vector<8x64xf32>
    %cst_60 = arith.constant 0.254829586 : f32
    %117 = vector.broadcast %cst_60 : f32 to vector<8x64xf32>
    %118 = arith.addf %116, %117 : vector<8x64xf32>
    %119 = arith.mulf %118, %105 : vector<8x64xf32>
    %cst_61 = arith.constant 0.000000e+00 : f32
    %120 = vector.broadcast %cst_61 : f32 to vector<8x64xf32>
    %121 = arith.subf %120, %99 : vector<8x64xf32>
    %122 = arith.mulf %121, %99 : vector<8x64xf32>
    %123 = math.exp %122 : vector<8x64xf32>
    %124 = arith.mulf %119, %123 : vector<8x64xf32>
    %cst_62 = arith.constant 1.000000e+00 : f32
    %125 = vector.broadcast %cst_62 : f32 to vector<8x64xf32>
    %126 = arith.subf %125, %124 : vector<8x64xf32>
    %127 = arith.mulf %98, %126 : vector<8x64xf32>
    %cst_63 = arith.constant 1.000000e+00 : f32
    %128 = vector.broadcast %cst_63 : f32 to vector<8x64xf32>
    %129 = arith.addf %128, %127 : vector<8x64xf32>
    %130 = arith.mulf %91, %129 : vector<8x64xf32>
    %131 = arith.truncf %130 : vector<8x64xf32> to vector<8x64xbf16>
    %c0_64 = arith.constant 0 : index
    %c0_65 = arith.constant 0 : index
    %132 = vector.load %arg13[%c0_64, %c0_65] : memref<64x32xbf16, #tpu.memory_space<vmem>>, vector<64x32xbf16>
    %cst_66 = arith.constant dense<0.000000e+00> : vector<8x32xf32>
    %133 = tpu.matmul %131, %132, %cst_66 {dimension_numbers = #tpu.dot_dimension_numbers<[1], [0], [0], [1], [0, 0, 1, 1], [], []>} : vector<8x64xbf16>, vector<64x32xbf16>, vector<8x32xf32> -> vector<8x32xf32>
    %c0_67 = arith.constant 0 : index
    %c0_68 = arith.constant 0 : index
    %134 = vector.load %arg14[%c0_67, %c0_68] : memref<1x32xf32, #tpu.memory_space<vmem>>, vector<1x32xf32>
    %135 = vector.broadcast %134 : vector<1x32xf32> to vector<8x32xf32>
    %136 = arith.addf %133, %135 : vector<8x32xf32>
    %137 = arith.addf %59, %136 : vector<8x32xf32>
    %c0_69 = arith.constant 0 : index
    %c0_70 = arith.constant 0 : index
    %c0_71 = arith.constant 0 : index
    %138 = vector.load %arg15[%c0_69, %c0_70, %c0_71] : memref<1x8x32xf32, #tpu.memory_space<vmem>>, vector<1x8x32xf32>
    %139 = vector.shape_cast %138 : vector<1x8x32xf32> to vector<8x32xf32>
    %140 = vector.shape_cast %137 : vector<8x32xf32> to vector<1x8x32xf32>
    tpu.vector_store %arg15[%c0_69, %c0_70, %c0_71], %140 {strides = array<i32>} : memref<1x8x32xf32, #tpu.memory_space<vmem>>, vector<1x8x32xf32>,
    return
  }
  func.func @transform_0(%arg0: i32) -> (i32, i32, i32) {
    %c0_i32 = arith.constant 0 : i32
    %c0_i32_0 = arith.constant 0 : i32
    %c0_i32_1 = arith.constant 0 : i32
    return %arg0, %c0_i32, %c0_i32_0 : i32, i32, i32
  }
  func.func @transform_1(%arg0: i32) -> (i32, i32) {
    %c0_i32 = arith.constant 0 : i32
    %c0_i32_0 = arith.constant 0 : i32
    %c0_i32_1 = arith.constant 0 : i32
    return %c0_i32, %c0_i32_0 : i32, i32
  }
  func.func @transform_2(%arg0: i32) -> (i32, i32) {
    %c0_i32 = arith.constant 0 : i32
    %c0_i32_0 = arith.constant 0 : i32
    %c0_i32_1 = arith.constant 0 : i32
    return %c0_i32, %c0_i32_0 : i32, i32
  }
  func.func @transform_3(%arg0: i32) -> (i32, i32, i32) {
    %c0_i32 = arith.constant 0 : i32
    %c0_i32_0 = arith.constant 0 : i32
    %c0_i32_1 = arith.constant 0 : i32
    %c0_i32_2 = arith.constant 0 : i32
    return %c0_i32, %c0_i32_0, %c0_i32_1 : i32, i32, i32
  }
  func.func @transform_4(%arg0: i32) -> (i32, i32, i32) {
    %c0_i32 = arith.constant 0 : i32
    %c0_i32_0 = arith.constant 0 : i32
    %c0_i32_1 = arith.constant 0 : i32
    %c0_i32_2 = arith.constant 0 : i32
    return %c0_i32, %c0_i32_0, %c0_i32_1 : i32, i32, i32
  }
  func.func @transform_5(%arg0: i32) -> (i32, i32, i32) {
    %c0_i32 = arith.constant 0 : i32
    %c0_i32_0 = arith.constant 0 : i32
    %c0_i32_1 = arith.constant 0 : i32
    %c0_i32_2 = arith.constant 0 : i32
    return %c0_i32, %c0_i32_0, %c0_i32_1 : i32, i32, i32
  }
  func.func @transform_6(%arg0: i32) -> (i32, i32, i32) {
    %c0_i32 = arith.constant 0 : i32
    %c0_i32_0 = arith.constant 0 : i32
    %c0_i32_1 = arith.constant 0 : i32
    %c0_i32_2 = arith.constant 0 : i32
    return %c0_i32, %c0_i32_0, %c0_i32_1 : i32, i32, i32
  }
  func.func @transform_7(%arg0: i32) -> (i32, i32) {
    %c0_i32 = arith.constant 0 : i32
    %c0_i32_0 = arith.constant 0 : i32
    %c0_i32_1 = arith.constant 0 : i32
    return %c0_i32, %c0_i32_0 : i32, i32
  }
  func.func @transform_8(%arg0: i32) -> (i32, i32) {
    %c0_i32 = arith.constant 0 : i32
    %c0_i32_0 = arith.constant 0 : i32
    %c0_i32_1 = arith.constant 0 : i32
    return %c0_i32, %c0_i32_0 : i32, i32
  }
  func.func @transform_9(%arg0: i32) -> (i32, i32) {
    %c0_i32 = arith.constant 0 : i32
    %c0_i32_0 = arith.constant 0 : i32
    %c0_i32_1 = arith.constant 0 : i32
    return %c0_i32, %c0_i32_0 : i32, i32
  }
  func.func @transform_10(%arg0: i32) -> (i32, i32) {
    %c0_i32 = arith.constant 0 : i32
    %c0_i32_0 = arith.constant 0 : i32
    %c0_i32_1 = arith.constant 0 : i32
    return %c0_i32, %c0_i32_0 : i32, i32
  }
  func.func @transform_11(%arg0: i32) -> (i32, i32) {
    %c0_i32 = arith.constant 0 : i32
    %c0_i32_0 = arith.constant 0 : i32
    %c0_i32_1 = arith.constant 0 : i32
    return %c0_i32, %c0_i32_0 : i32, i32
  }
  func.func @transform_12(%arg0: i32) -> (i32, i32) {
    %c0_i32 = arith.constant 0 : i32
    %c0_i32_0 = arith.constant 0 : i32
    %c0_i32_1 = arith.constant 0 : i32
    return %c0_i32, %c0_i32_0 : i32, i32
  }
  func.func @transform_13(%arg0: i32) -> (i32, i32) {
    %c0_i32 = arith.constant 0 : i32
    %c0_i32_0 = arith.constant 0 : i32
    %c0_i32_1 = arith.constant 0 : i32
    return %c0_i32, %c0_i32_0 : i32, i32
  }
  func.func @transform_14(%arg0: i32) -> (i32, i32, i32) {
    %c0_i32 = arith.constant 0 : i32
    %c0_i32_0 = arith.constant 0 : i32
    %c0_i32_1 = arith.constant 0 : i32
    return %arg0, %c0_i32, %c0_i32_0 : i32, i32, i32
  }
}

module attributes {stable_mosaic.version = 11 : i64} {
  func.func @layer_kernel(%arg0: i32, %arg1: memref<1x8x32xf32, #tpu.memory_space<vmem>>, %arg2: memref<1x32xf32, #tpu.memory_space<vmem>>, %arg3: memref<1x32xf32, #tpu.memory_space<vmem>>, %arg4: memref<4x32x8xbf16, #tpu.memory_space<vmem>>, %arg5: memref<4x32x8xbf16, #tpu.memory_space<vmem>>, %arg6: memref<4x32x8xbf16, #tpu.memory_space<vmem>>, %arg7: memref<4x8x32xbf16, #tpu.memory_space<vmem>>, %arg8: memref<1x32xf32, #tpu.memory_space<vmem>>, %arg9: memref<1x32xf32, #tpu.memory_space<vmem>>, %arg10: memref<1x32xf32, #tpu.memory_space<vmem>>, %arg11: memref<32x64xbf16, #tpu.memory_space<vmem>>, %arg12: memref<1x64xf32, #tpu.memory_space<vmem>>, %arg13: memref<64x32xbf16, #tpu.memory_space<vmem>>, %arg14: memref<1x32xf32, #tpu.memory_space<vmem>>, %arg15: memref<1x8x32xf32, #tpu.memory_space<vmem>>) attributes {dimension_semantics = [#tpu.dimension_semantics<parallel>], iteration_bounds = array<i64: 2>, scalar_prefetch = 0 : i64, scratch_operands = 0 : i64, tpu.core_type = #tpu.core_type<tc>, window_params = [{transform_indices = @transform_0, window_bounds = array<i64: 1, 8, 32>}, {pipeline_mode = #tpu.pipeline_mode<synchronous>, transform_indices = @transform_1, window_bounds = array<i64: 1, 32>}, {pipeline_mode = #tpu.pipeline_mode<synchronous>, transform_indices = @transform_2, window_bounds = array<i64: 1, 32>}, {pipeline_mode = #tpu.pipeline_mode<synchronous>, transform_indices = @transform_3, window_bounds = array<i64: 4, 32, 8>}, {pipeline_mode = #tpu.pipeline_mode<synchronous>, transform_indices = @transform_4, window_bounds = array<i64: 4, 32, 8>}, {pipeline_mode = #tpu.pipeline_mode<synchronous>, transform_indices = @transform_5, window_bounds = array<i64: 4, 32, 8>}, {pipeline_mode = #tpu.pipeline_mode<synchronous>, transform_indices = @transform_6, window_bounds = array<i64: 4, 8, 32>}, {pipeline_mode = #tpu.pipeline_mode<synchronous>, transform_indices = @transform_7, window_bounds = array<i64: 1, 32>}, {pipeline_mode = #tpu.pipeline_mode<synchronous>, transform_indices = @transform_8, window_bounds = array<i64: 1, 32>}, {pipeline_mode = #tpu.pipeline_mode<synchronous>, transform_indices = @transform_9, window_bounds = array<i64: 1, 32>}, {pipeline_mode = #tpu.pipeline_mode<synchronous>, transform_indices = @transform_10, window_bounds = array<i64: 32, 64>}, {pipeline_mode = #tpu.pipeline_mode<synchronous>, transform_indices = @transform_11, window_bounds = array<i64: 1, 64>}, {pipeline_mode = #tpu.pipeline_mode<synchronous>, transform_indices = @transform_12, window_bounds = array<i64: 64, 32>}, {pipeline_mode = #tpu.pipeline_mode<synchronous>, transform_indices = @transform_13, window_bounds = array<i64: 1, 32>}, {transform_indices = @transform_14, window_bounds = array<i64: 1, 8, 32>}]} {
    %c0 = arith.constant 0 : index
    %c0_0 = arith.constant 0 : index
    %c0_1 = arith.constant 0 : index
    %0 = vector.load %arg1[%c0, %c0_0, %c0_1] : memref<1x8x32xf32, #tpu.memory_space<vmem>>, vector<1x8x32xf32>
    %1 = vector.shape_cast %0 : vector<1x8x32xf32> to vector<8x32xf32>
    %c0_2 = arith.constant 0 : index
    %c0_3 = arith.constant 0 : index
    %2 = vector.load %arg2[%c0_2, %c0_3] : memref<1x32xf32, #tpu.memory_space<vmem>>, vector<1x32xf32>
    %c0_4 = arith.constant 0 : index
    %c0_5 = arith.constant 0 : index
    %3 = vector.load %arg3[%c0_4, %c0_5] : memref<1x32xf32, #tpu.memory_space<vmem>>, vector<1x32xf32>
    %cst = arith.constant dense<0.000000e+00> : vector<8xf32>
    %4 = vector.multi_reduction <add>, %1, %cst [1] : vector<8x32xf32> to vector<8xf32>
    %5 = vector.shape_cast %4 : vector<8xf32> to vector<8x1xf32>
    %cst_6 = arith.constant 3.200000e+01 : f32
    %6 = vector.broadcast %cst_6 : f32 to vector<8x1xf32>
    %7 = arith.divf %5, %6 : vector<8x1xf32>
    %8 = vector.broadcast %7 : vector<8x1xf32> to vector<8x32xf32>
    %9 = arith.subf %1, %8 : vector<8x32xf32>
    %10 = arith.mulf %9, %9 : vector<8x32xf32>
    %cst_7 = arith.constant dense<0.000000e+00> : vector<8xf32>
    %11 = vector.multi_reduction <add>, %10, %cst_7 [1] : vector<8x32xf32> to vector<8xf32>
    %12 = vector.shape_cast %11 : vector<8xf32> to vector<8x1xf32>
    %cst_8 = arith.constant 3.200000e+01 : f32
    %13 = vector.broadcast %cst_8 : f32 to vector<8x1xf32>
    %14 = arith.divf %12, %13 : vector<8x1xf32>
    %15 = vector.broadcast %7 : vector<8x1xf32> to vector<8x32xf32>
    %16 = arith.subf %1, %15 : vector<8x32xf32>
    %cst_9 = arith.constant 9.99999974E-6 : f32
    %17 = vector.broadcast %cst_9 : f32 to vector<8x1xf32>
    %18 = arith.addf %14, %17 : vector<8x1xf32>
    %19 = math.rsqrt %18 : vector<8x1xf32>
    %20 = vector.broadcast %19 : vector<8x1xf32> to vector<8x32xf32>
    %21 = arith.mulf %16, %20 : vector<8x32xf32>
    %22 = vector.broadcast %2 : vector<1x32xf32> to vector<8x32xf32>
    %23 = arith.mulf %21, %22 : vector<8x32xf32>
    %24 = vector.broadcast %3 : vector<1x32xf32> to vector<8x32xf32>
    %25 = arith.addf %23, %24 : vector<8x32xf32>
    %26 = arith.truncf %25 : vector<8x32xf32> to vector<8x32xbf16>
    %27 = vector.shape_cast %26 : vector<8x32xbf16> to vector<1x8x32xbf16>
    %28 = vector.broadcast %27 : vector<1x8x32xbf16> to vector<4x8x32xbf16>
    %c0_10 = arith.constant 0 : index
    %c0_11 = arith.constant 0 : index
    %c0_12 = arith.constant 0 : index
    %29 = vector.load %arg4[%c0_10, %c0_11, %c0_12] : memref<4x32x8xbf16, #tpu.memory_space<vmem>>, vector<4x32x8xbf16>
    "tpu.trace_start"() <{level = 10 : i32, message = "hnd,hde->hne"}> : () -> ()
    %cst_13 = arith.constant dense<0.000000e+00> : vector<4x8x8xf32>
    %30 = tpu.matmul %28, %29, %cst_13 {dimension_numbers = #tpu.dot_dimension_numbers<[2], [1], [1], [2], [0, 0, 0, 1, 1, 2], [0], [0]>} : vector<4x8x32xbf16>, vector<4x32x8xbf16>, vector<4x8x8xf32> -> vector<4x8x8xf32>
    "tpu.trace_stop"() : () -> ()
    %c0_14 = arith.constant 0 : index
    %c0_15 = arith.constant 0 : index
    %c0_16 = arith.constant 0 : index
    %31 = vector.load %arg5[%c0_14, %c0_15, %c0_16] : memref<4x32x8xbf16, #tpu.memory_space<vmem>>, vector<4x32x8xbf16>
    "tpu.trace_start"() <{level = 10 : i32, message = "hnd,hde->hne"}> : () -> ()
    %cst_17 = arith.constant dense<0.000000e+00> : vector<4x8x8xf32>
    %32 = tpu.matmul %28, %31, %cst_17 {dimension_numbers = #tpu.dot_dimension_numbers<[2], [1], [1], [2], [0, 0, 0, 1, 1, 2], [0], [0]>} : vector<4x8x32xbf16>, vector<4x32x8xbf16>, vector<4x8x8xf32> -> vector<4x8x8xf32>
    "tpu.trace_stop"() : () -> ()
    %c0_18 = arith.constant 0 : index
    %c0_19 = arith.constant 0 : index
    %c0_20 = arith.constant 0 : index
    %33 = vector.load %arg6[%c0_18, %c0_19, %c0_20] : memref<4x32x8xbf16, #tpu.memory_space<vmem>>, vector<4x32x8xbf16>
    "tpu.trace_start"() <{level = 10 : i32, message = "hnd,hde->hne"}> : () -> ()
    %cst_21 = arith.constant dense<0.000000e+00> : vector<4x8x8xf32>
    %34 = tpu.matmul %28, %33, %cst_21 {dimension_numbers = #tpu.dot_dimension_numbers<[2], [1], [1], [2], [0, 0, 0, 1, 1, 2], [0], [0]>} : vector<4x8x32xbf16>, vector<4x32x8xbf16>, vector<4x8x8xf32> -> vector<4x8x8xf32>
    "tpu.trace_stop"() : () -> ()
    %35 = arith.truncf %30 : vector<4x8x8xf32> to vector<4x8x8xbf16>
    %36 = arith.truncf %32 : vector<4x8x8xf32> to vector<4x8x8xbf16>
    "tpu.trace_start"() <{level = 10 : i32, message = "hne,hme->hnm"}> : () -> ()
    %cst_22 = arith.constant dense<0.000000e+00> : vector<4x8x8xf32>
    %37 = tpu.matmul %35, %36, %cst_22 {dimension_numbers = #tpu.dot_dimension_numbers<[2], [2], [1], [1], [0, 0, 0, 1, 1, 1], [0], [0]>} : vector<4x8x8xbf16>, vector<4x8x8xbf16>, vector<4x8x8xf32> -> vector<4x8x8xf32>
    "tpu.trace_stop"() : () -> ()
    %cst_23 = arith.constant dense<0xFF800000> : vector<4x8xf32>
    %38 = vector.multi_reduction <maximumf>, %37, %cst_23 [2] : vector<4x8x8xf32> to vector<4x8xf32>
    %cst_24 = arith.constant 0xFF800000 : f32
    %39 = vector.broadcast %cst_24 : f32 to vector<4x8xf32>
    %40 = arith.maximumf %39, %38 : vector<4x8xf32>
    %41 = vector.shape_cast %40 : vector<4x8xf32> to vector<4x8x1xf32>
    %42 = vector.broadcast %41 : vector<4x8x1xf32> to vector<4x8x8xf32>
    %43 = arith.subf %37, %42 : vector<4x8x8xf32>
    %44 = math.exp %43 : vector<4x8x8xf32>
    %cst_25 = arith.constant dense<0.000000e+00> : vector<4x8xf32>
    %45 = vector.multi_reduction <add>, %44, %cst_25 [2] : vector<4x8x8xf32> to vector<4x8xf32>
    %46 = vector.shape_cast %45 : vector<4x8xf32> to vector<4x8x1xf32>
    %47 = vector.broadcast %46 : vector<4x8x1xf32> to vector<4x8x8xf32>
    %48 = arith.divf %44, %47 : vector<4x8x8xf32>
    %49 = arith.truncf %48 : vector<4x8x8xf32> to vector<4x8x8xbf16>
    %50 = arith.truncf %34 : vector<4x8x8xf32> to vector<4x8x8xbf16>
    "tpu.trace_start"() <{level = 10 : i32, message = "hnm,hme->hne"}> : () -> ()
    %cst_26 = arith.constant dense<0.000000e+00> : vector<4x8x8xf32>
    %51 = tpu.matmul %49, %50, %cst_26 {dimension_numbers = #tpu.dot_dimension_numbers<[2], [1], [1], [2], [0, 0, 0, 1, 1, 2], [0], [0]>} : vector<4x8x8xbf16>, vector<4x8x8xbf16>, vector<4x8x8xf32> -> vector<4x8x8xf32>
    "tpu.trace_stop"() : () -> ()
    %52 = arith.truncf %51 : vector<4x8x8xf32> to vector<4x8x8xbf16>
    %c0_27 = arith.constant 0 : index
    %c0_28 = arith.constant 0 : index
    %c0_29 = arith.constant 0 : index
    %53 = vector.load %arg7[%c0_27, %c0_28, %c0_29] : memref<4x8x32xbf16, #tpu.memory_space<vmem>>, vector<4x8x32xbf16>
    "tpu.trace_start"() <{level = 10 : i32, message = "hne,hed->hnd"}> : () -> ()
    %cst_30 = arith.constant dense<0.000000e+00> : vector<4x8x32xf32>
    %54 = tpu.matmul %52, %53, %cst_30 {dimension_numbers = #tpu.dot_dimension_numbers<[2], [1], [1], [2], [0, 0, 0, 1, 1, 2], [0], [0]>} : vector<4x8x8xbf16>, vector<4x8x32xbf16>, vector<4x8x32xf32> -> vector<4x8x32xf32>
    "tpu.trace_stop"() : () -> ()
    %cst_31 = arith.constant dense<0.000000e+00> : vector<8x32xf32>
    %55 = vector.multi_reduction <add>, %54, %cst_31 [0] : vector<4x8x32xf32> to vector<8x32xf32>
    %56 = arith.addf %1, %55 : vector<8x32xf32>
    %c0_32 = arith.constant 0 : index
    %c0_33 = arith.constant 0 : index
    %57 = vector.load %arg8[%c0_32, %c0_33] : memref<1x32xf32, #tpu.memory_space<vmem>>, vector<1x32xf32>
    %58 = vector.broadcast %57 : vector<1x32xf32> to vector<8x32xf32>
    %59 = arith.addf %56, %58 : vector<8x32xf32>
    %c0_34 = arith.constant 0 : index
    %c0_35 = arith.constant 0 : index
    %60 = vector.load %arg9[%c0_34, %c0_35] : memref<1x32xf32, #tpu.memory_space<vmem>>, vector<1x32xf32>
    %c0_36 = arith.constant 0 : index
    %c0_37 = arith.constant 0 : index
    %61 = vector.load %arg10[%c0_36, %c0_37] : memref<1x32xf32, #tpu.memory_space<vmem>>, vector<1x32xf32>
    %cst_38 = arith.constant dense<0.000000e+00> : vector<8xf32>
    %62 = vector.multi_reduction <add>, %59, %cst_38 [1] : vector<8x32xf32> to vector<8xf32>
    %63 = vector.shape_cast %62 : vector<8xf32> to vector<8x1xf32>
    %cst_39 = arith.constant 3.200000e+01 : f32
    %64 = vector.broadcast %cst_39 : f32 to vector<8x1xf32>
    %65 = arith.divf %63, %64 : vector<8x1xf32>
    %66 = vector.broadcast %65 : vector<8x1xf32> to vector<8x32xf32>
    %67 = arith.subf %59, %66 : vector<8x32xf32>
    %68 = arith.mulf %67, %67 : vector<8x32xf32>
    %cst_40 = arith.constant dense<0.000000e+00> : vector<8xf32>
    %69 = vector.multi_reduction <add>, %68, %cst_40 [1] : vector<8x32xf32> to vector<8xf32>
    %70 = vector.shape_cast %69 : vector<8xf32> to vector<8x1xf32>
    %cst_41 = arith.constant 3.200000e+01 : f32
    %71 = vector.broadcast %cst_41 : f32 to vector<8x1xf32>
    %72 = arith.divf %70, %71 : vector<8x1xf32>
    %73 = vector.broadcast %65 : vector<8x1xf32> to vector<8x32xf32>
    %74 = arith.subf %59, %73 : vector<8x32xf32>
    %cst_42 = arith.constant 9.99999974E-6 : f32
    %75 = vector.broadcast %cst_42 : f32 to vector<8x1xf32>
    %76 = arith.addf %72, %75 : vector<8x1xf32>
    %77 = math.rsqrt %76 : vector<8x1xf32>
    %78 = vector.broadcast %77 : vector<8x1xf32> to vector<8x32xf32>
    %79 = arith.mulf %74, %78 : vector<8x32xf32>
    %80 = vector.broadcast %60 : vector<1x32xf32> to vector<8x32xf32>
    %81 = arith.mulf %79, %80 : vector<8x32xf32>
    %82 = vector.broadcast %61 : vector<1x32xf32> to vector<8x32xf32>
    %83 = arith.addf %81, %82 : vector<8x32xf32>
    %84 = arith.truncf %83 : vector<8x32xf32> to vector<8x32xbf16>
    %c0_43 = arith.constant 0 : index
    %c0_44 = arith.constant 0 : index
    %85 = vector.load %arg11[%c0_43, %c0_44] : memref<32x64xbf16, #tpu.memory_space<vmem>>, vector<32x64xbf16>
    %cst_45 = arith.constant dense<0.000000e+00> : vector<8x64xf32>
    %86 = tpu.matmul %84, %85, %cst_45 {dimension_numbers = #tpu.dot_dimension_numbers<[1], [0], [0], [1], [0, 0, 1, 1], [], []>} : vector<8x32xbf16>, vector<32x64xbf16>, vector<8x64xf32> -> vector<8x64xf32>
    %c0_46 = arith.constant 0 : index
    %c0_47 = arith.constant 0 : index
    %87 = vector.load %arg12[%c0_46, %c0_47] : memref<1x64xf32, #tpu.memory_space<vmem>>, vector<1x64xf32>
    %88 = vector.broadcast %87 : vector<1x64xf32> to vector<8x64xf32>
    %89 = arith.addf %86, %88 : vector<8x64xf32>
    %cst_48 = arith.constant 5.000000e-01 : f32
    %90 = vector.broadcast %cst_48 : f32 to vector<8x64xf32>
    %91 = arith.mulf %90, %89 : vector<8x64xf32>
    %cst_49 = arith.constant 0.707106769 : f32
    %92 = vector.broadcast %cst_49 : f32 to vector<8x64xf32>
    %93 = arith.mulf %89, %92 : vector<8x64xf32>
    %cst_50 = arith.constant 0.000000e+00 : f32
    %94 = vector.broadcast %cst_50 : f32 to vector<8x64xf32>
    %95 = arith.cmpf oge, %93, %94 : vector<8x64xf32>
    %cst_51 = arith.constant 1.000000e+00 : f32
    %cst_52 = arith.constant -1.000000e+00 : f32
    %96 = vector.broadcast %cst_51 : f32 to vector<8x64xf32>
    %97 = vector.broadcast %cst_52 : f32 to vector<8x64xf32>
    %98 = arith.select %95, %96, %97 : vector<8x64xi1>, vector<8x64xf32>
    %99 = math.absf %93 : vector<8x64xf32>
    %cst_53 = arith.constant 0.327591091 : f32
    %100 = vector.broadcast %cst_53 : f32 to vector<8x64xf32>
    %101 = arith.mulf %100, %99 : vector<8x64xf32>
    %cst_54 = arith.constant 1.000000e+00 : f32
    %102 = vector.broadcast %cst_54 : f32 to vector<8x64xf32>
    %103 = arith.addf %102, %101 : vector<8x64xf32>
    %cst_55 = arith.constant 1.000000e+00 : f32
    %104 = vector.broadcast %cst_55 : f32 to vector<8x64xf32>
    %105 = arith.divf %104, %103 : vector<8x64xf32>
    %cst_56 = arith.constant 1.06140542 : f32
    %106 = vector.broadcast %cst_56 : f32 to vector<8x64xf32>
    %107 = arith.mulf %106, %105 : vector<8x64xf32>
    %cst_57 = arith.constant -1.45315206 : f32
    %108 = vector.broadcast %cst_57 : f32 to vector<8x64xf32>
    %109 = arith.addf %107, %108 : vector<8x64xf32>
    %110 = arith.mulf %109, %105 : vector<8x64xf32>
    %cst_58 = arith.constant 1.42141378 : f32
    %111 = vector.broadcast %cst_58 : f32 to vector<8x64xf32>
    %112 = arith.addf %110, %111 : vector<8x64xf32>
    %113 = arith.mulf %112, %105 : vector<8x64xf32>
    %cst_59 = arith.constant -0.284496725 : f32
    %114 = vector.broadcast %cst_59 : f32 to vector<8x64xf32>
    %115 = arith.addf %113, %114 : vector<8x64xf32>
    %116 = arith.mulf %115, %105 : vector<8x64xf32>
    %cst_60 = arith.constant 0.254829586 : f32
    %117 = vector.broadcast %cst_60 : f32 to vector<8x64xf32>
    %118 = arith.addf %116, %117 : vector<8x64xf32>
    %119 = arith.mulf %118, %105 : vector<8x64xf32>
    %cst_61 = arith.constant 0.000000e+00 : f32
    %120 = vector.broadcast %cst_61 : f32 to vector<8x64xf32>
    %121 = arith.subf %120, %99 : vector<8x64xf32>
    %122 = arith.mulf %121, %99 : vector<8x64xf32>
    %123 = math.exp %122 : vector<8x64xf32>
    %124 = arith.mulf %119, %123 : vector<8x64xf32>
    %cst_62 = arith.constant 1.000000e+00 : f32
    %125 = vector.broadcast %cst_62 : f32 to vector<8x64xf32>
    %126 = arith.subf %125, %124 : vector<8x64xf32>
    %127 = arith.mulf %98, %126 : vector<8x64xf32>
    %cst_63 = arith.constant 1.000000e+00 : f32
    %128 = vector.broadcast %cst_63 : f32 to vector<8x64xf32>
    %129 = arith.addf %128, %127 : vector<8x64xf32>
    %130 = arith.mulf %91, %129 : vector<8x64xf32>
    %131 = arith.truncf %130 : vector<8x64xf32> to vector<8x64xbf16>
    %c0_64 = arith.constant 0 : index
    %c0_65 = arith.constant 0 : index
    %132 = vector.load %arg13[%c0_64, %c0_65] : memref<64x32xbf16, #tpu.memory_space<vmem>>, vector<64x32xbf16>
    %cst_66 = arith.constant dense<0.000000e+00> : vector<8x32xf32>
    %133 = tpu.matmul %131, %132, %cst_66 {dimension_numbers = #tpu.dot_dimension_numbers<[1], [0], [0], [1], [0, 0, 1, 1], [], []>} : vector<8x64xbf16>, vector<64x32xbf16>, vector<8x32xf32> -> vector<8x32xf32>
    %c0_67 = arith.constant 0 : index
    %c0_68 = arith.constant 0 : index
    %134 = vector.load %arg14[%c0_67, %c0_68] : memref<1x32xf32, #tpu.memory_space<vmem>>, vector<1x32xf32>
    %135 = vector.broadcast %134 : vector<1x32xf32> to vector<8x32xf32>
    %136 = arith.addf %133, %135 : vector<8x32xf32>
    %137 = arith.addf %59, %136 : vector<8x32xf32>
    %c0_69 = arith.constant 0 : index
    %c0_70 = arith.constant 0 : index
    %c0_71 = arith.constant 0 : index
    %138 = vector.load %arg15[%c0_69, %c0_70, %c0_71] : memref<1x8x32xf32, #tpu.memory_space<vmem>>, vector<1x8x32xf32>
    %139 = vector.shape_cast %138 : vector<1x8x32xf32> to vector<8x32xf32>
    %140 = vector.shape_cast %137 : vector<8x32xf32> to vector<1x8x32xf32>
    tpu.vector_store %arg15[%c0_69, %c0_70, %c0_71], %140 {strides = array<i32>} : memref<1x8x32xf32, #tpu.memory_space<vmem>>, vector<1x8x32xf32>,
    return
  }
  func.func @transform_0(%arg0: i32) -> (i32, i32, i32) {
    %c0_i32 = arith.constant 0 : i32
    %c0_i32_0 = arith.constant 0 : i32
    %c0_i32_1 = arith.constant 0 : i32
    return %arg0, %c0_i32, %c0_i32_0 : i32, i32, i32
  }
  func.func @transform_1(%arg0: i32) -> (i32, i32) {
    %c0_i32 = arith.constant 0 : i32
    %c0_i32_0 = arith.constant 0 : i32
    %c0_i32_1 = arith.constant 0 : i32
    return %c0_i32, %c0_i32_0 : i32, i32
  }
  func.func @transform_2(%arg0: i32) -> (i32, i32) {
    %c0_i32 = arith.constant 0 : i32
    %c0_i32_0 = arith.constant 0 : i32
    %c0_i32_1 = arith.constant 0 : i32
    return %c0_i32, %c0_i32_0 : i32, i32
  }
  func.func @transform_3(%arg0: i32) -> (i32, i32, i32) {
    %c0_i32 = arith.constant 0 : i32
    %c0_i32_0 = arith.constant 0 : i32
    %c0_i32_1 = arith.constant 0 : i32
    %c0_i32_2 = arith.constant 0 : i32
    return %c0_i32, %c0_i32_0, %c0_i32_1 : i32, i32, i32
  }
  func.func @transform_4(%arg0: i32) -> (i32, i32, i32) {
    %c0_i32 = arith.constant 0 : i32
    %c0_i32_0 = arith.constant 0 : i32
    %c0_i32_1 = arith.constant 0 : i32
    %c0_i32_2 = arith.constant 0 : i32
    return %c0_i32, %c0_i32_0, %c0_i32_1 : i32, i32, i32
  }
  func.func @transform_5(%arg0: i32) -> (i32, i32, i32) {
    %c0_i32 = arith.constant 0 : i32
    %c0_i32_0 = arith.constant 0 : i32
    %c0_i32_1 = arith.constant 0 : i32
    %c0_i32_2 = arith.constant 0 : i32
    return %c0_i32, %c0_i32_0, %c0_i32_1 : i32, i32, i32
  }
  func.func @transform_6(%arg0: i32) -> (i32, i32, i32) {
    %c0_i32 = arith.constant 0 : i32
    %c0_i32_0 = arith.constant 0 : i32
    %c0_i32_1 = arith.constant 0 : i32
    %c0_i32_2 = arith.constant 0 : i32
    return %c0_i32, %c0_i32_0, %c0_i32_1 : i32, i32, i32
  }
  func.func @transform_7(%arg0: i32) -> (i32, i32) {
    %c0_i32 = arith.constant 0 : i32
    %c0_i32_0 = arith.constant 0 : i32
    %c0_i32_1 = arith.constant 0 : i32
    return %c0_i32, %c0_i32_0 : i32, i32
  }
  func.func @transform_8(%arg0: i32) -> (i32, i32) {
    %c0_i32 = arith.constant 0 : i32
    %c0_i32_0 = arith.constant 0 : i32
    %c0_i32_1 = arith.constant 0 : i32
    return %c0_i32, %c0_i32_0 : i32, i32
  }
  func.func @transform_9(%arg0: i32) -> (i32, i32) {
    %c0_i32 = arith.constant 0 : i32
    %c0_i32_0 = arith.constant 0 : i32
    %c0_i32_1 = arith.constant 0 : i32
    return %c0_i32, %c0_i32_0 : i32, i32
  }
  func.func @transform_10(%arg0: i32) -> (i32, i32) {
    %c0_i32 = arith.constant 0 : i32
    %c0_i32_0 = arith.constant 0 : i32
    %c0_i32_1 = arith.constant 0 : i32
    return %c0_i32, %c0_i32_0 : i32, i32
  }
  func.func @transform_11(%arg0: i32) -> (i32, i32) {
    %c0_i32 = arith.constant 0 : i32
    %c0_i32_0 = arith.constant 0 : i32
    %c0_i32_1 = arith.constant 0 : i32
    return %c0_i32, %c0_i32_0 : i32, i32
  }
  func.func @transform_12(%arg0: i32) -> (i32, i32) {
    %c0_i32 = arith.constant 0 : i32
    %c0_i32_0 = arith.constant 0 : i32
    %c0_i32_1 = arith.constant 0 : i32
    return %c0_i32, %c0_i32_0 : i32, i32
  }
  func.func @transform_13(%arg0: i32) -> (i32, i32) {
    %c0_i32 = arith.constant 0 : i32
    %c0_i32_0 = arith.constant 0 : i32
    %c0_i32_1 = arith.constant 0 : i32
    return %c0_i32, %c0_i32_0 : i32, i32
  }
  func.func @transform_14(%arg0: i32) -> (i32, i32, i32) {
    %c0_i32 = arith.constant 0 : i32
    %c0_i32_0 = arith.constant 0 : i32
    %c0_i32_1 = arith.constant 0 : i32
    return %arg0, %c0_i32, %c0_i32_0 : i32, i32, i32
  }
}

</mosaic_0001>

<llo_original>
// kernel: transformer_forward.3
$region0: #{transformer_forward.3}
  #allocation0 [shape = 'u32[]', space=smem, size = 0x4, offset = 0x4, fixed_abs, tag = 'smem constant byte address 0x4 - core index']
  #allocation1 [shape = 'u32[144,128]{1,0:T(1,128)}', space=vmem, size = 0x12000, scoped, tag = 'internal scratch']
  %s0 = inlined_call_operand.hbm [shape: f32[2,8,32], index: 0, kind: input, shape index: {}, may-alias: {0,14}]
  %s1 = inlined_call_operand.vmem [shape: f32[1,32], index: 1, kind: input, shape index: {}]
  %s2 = inlined_call_operand.vmem [shape: f32[1,32], index: 2, kind: input, shape index: {}]
  %s3 = inlined_call_operand.vmem [shape: bf16[4,32,8], index: 3, kind: input, shape index: {}]
  %s4 = inlined_call_operand.vmem [shape: bf16[4,32,8], index: 4, kind: input, shape index: {}]
  %s5 = inlined_call_operand.vmem [shape: bf16[4,32,8], index: 5, kind: input, shape index: {}]
  %s6 = inlined_call_operand.vmem [shape: bf16[4,8,32], index: 6, kind: input, shape index: {}]
  %s7 = inlined_call_operand.vmem [shape: f32[1,32], index: 7, kind: input, shape index: {}]
  %s8 = inlined_call_operand.vmem [shape: f32[1,32], index: 8, kind: input, shape index: {}]
  %s9 = inlined_call_operand.vmem [shape: f32[1,32], index: 9, kind: input, shape index: {}]
  %s10 = inlined_call_operand.vmem [shape: bf16[32,64], index: 10, kind: input, shape index: {}]
  %s11 = inlined_call_operand.vmem [shape: f32[1,64], index: 11, kind: input, shape index: {}]
  %s12 = inlined_call_operand.vmem [shape: bf16[64,32], index: 12, kind: input, shape index: {}]
  %s13 = inlined_call_operand.vmem [shape: f32[1,32], index: 13, kind: input, shape index: {}]
  %s14 = inlined_call_operand.hbm [shape: f32[2,8,32], index: 14, kind: output, shape index: {}, may-alias: {0,14}]
  %s15 = sld [smem:[#allocation0]]
  $region93: #{transformer_forward.3} parent=0
    _
  %s17 = ssub.s32 1, %s15
  %s18 = scalar_select 0, %s17, %s15
  $region1: #{transformer_forward.3} parent=0
    #allocation2 [shape = 'u8[8192]{0}', space=vmem, size = 0x2000, scoped, tag = 'input window, operand 0']
    #allocation3 [shape = 's32[2]{0}', space=sflag, size = 0x8, scoped, tag = 'scoped memory for transformer_forward.3']
    #allocation4 [shape = 's32[2]{0}', space=sflag, size = 0x8, scoped, tag = 'scoped memory for transformer_forward.3']
    #allocation5 [shape = 'u8[8192]{0}', space=vmem, size = 0x2000, scoped, tag = 'output window, operand 0']
    %19 = vsyncpa [#allocation3], 0
    %s20 = scalar_lea.sflag [#allocation3], 1
    %21 = vsyncpa %s20, 0
    %22 = vsyncpa [#allocation4], 0
    %s23 = scalar_lea.sflag [#allocation4], 1
    %24 = vsyncpa %s23, 0
    loop: start=0, step=1, limit=4
    $region2: #{transformer_forward.3} parent=1 // loop_pre_header
      _
    $region3: #{transformer_forward.3} parent=1 // loop_header
      %s26 = sphi 0, %s30
      %p27 = scmp.ge.s32.totalorder %s26, 4
      %s36 = sphi 0, %s38
      %s39 = sphi 0, %s36
      %s40 = sphi 0, %s39
      %s56 = sphi 0, %s40
      %s60 = sphi 0, %s60
      %s62 = sphi 0, %s60
      %s63 = sphi 0, %s62
      %s77 = sphi 0, %s63
      %s81 = sphi 0, %s81
      %s83 = sphi 0, %s81
      %s84 = sphi 0, %s83
      %s98 = sphi 0, %s84
      %s102 = sphi 0, %s102
      %s104 = sphi 0, %s102
      %s105 = sphi 0, %s104
      %s119 = sphi 0, %s105
      %s123 = sphi 0, %s123
      %s125 = sphi 0, %s123
      %s126 = sphi 0, %s125
      %s140 = sphi 0, %s126
      %s144 = sphi 0, %s144
      %s146 = sphi 0, %s144
      %s147 = sphi 0, %s146
      %s161 = sphi 0, %s147
      %s165 = sphi 0, %s165
      %s167 = sphi 0, %s165
      %s168 = sphi 0, %s167
      %s182 = sphi 0, %s168
      %s186 = sphi 0, %s186
      %s188 = sphi 0, %s186
      %s189 = sphi 0, %s188
      %s203 = sphi 0, %s189
      %s207 = sphi 0, %s207
      %s209 = sphi 0, %s207
      %s210 = sphi 0, %s209
      %s224 = sphi 0, %s210
      %s228 = sphi 0, %s228
      %s230 = sphi 0, %s228
      %s231 = sphi 0, %s230
      %s245 = sphi 0, %s231
      %s249 = sphi 0, %s249
      %s251 = sphi 0, %s249
      %s252 = sphi 0, %s251
      %s266 = sphi 0, %s252
      %s270 = sphi 0, %s270
      %s272 = sphi 0, %s270
      %s273 = sphi 0, %s272
      %s287 = sphi 0, %s273
      %s291 = sphi 0, %s291
      %s293 = sphi 0, %s291
      %s294 = sphi 0, %s293
      %s308 = sphi 0, %s294
      %s312 = sphi 0, %s312
      %s314 = sphi 0, %s312
      %s315 = sphi 0, %s314
      %s329 = sphi 0, %s315
      %s335 = sphi 0, %s337
      %s338 = sphi 0, %s335
      %s339 = sphi 0, %s338
      %s355 = sphi 0, %s339
    $region4: #{transformer_forward.3} parent=1 // loop_header_branch
      %29 = sbr.rel (%p27) target = $region8
    $region5: #{transformer_forward.3} parent=1 // loop_body
      %s31 = ssub.s32 %s26, 1
      %s32 = ssub.s32 %s26, 2
      %s33 = sadd.s32 %s26, 1
      %s34 = ssub.s32 %s26, %s33
      %p35 = scmp.eq.s32.totalorder %s34, 0
      %s37 = sadd.s32 %s36, 1
      %s38 = scalar_select %p35, %s36, %s37
      %p41 = pneg %p35
      %p42 = scmp.eq.s32.totalorder %s26, 1
      %p43 = por %p41, %p42
      %p44 = scmp.ne.s32.totalorder %s36, %s39
      %p45 = scmp.eq.s32.totalorder %s26, 0
      %p46 = por %p44, %p45
      %p47 = scmp.ne.s32.totalorder %s36, %s39
      %p48 = scmp.eq.s32.totalorder %s31, 1
      %p49 = por %p47, %p48
      %p50 = scmp.ne.s32.totalorder %s39, %s40
      %p51 = scmp.eq.s32.totalorder %s31, 0
      %p52 = por %p50, %p51
      %p53 = scmp.ne.s32.totalorder %s39, %s40
      %p54 = scmp.eq.s32.totalorder %s32, 1
      %p55 = por %p53, %p54
      %p57 = scmp.ne.s32.totalorder %s40, %s56
      %p58 = scmp.eq.s32.totalorder %s32, 0
      %p59 = por %p57, %p58
      %s61 = sadd.s32 %s60, 1
      %p64 = scmp.eq.s32.totalorder %s26, 1
      %p65 = scmp.ne.s32.totalorder %s60, %s62
      %p66 = scmp.eq.s32.totalorder %s26, 0
      %p67 = por %p65, %p66
      %p68 = scmp.ne.s32.totalorder %s60, %s62
      %p69 = scmp.eq.s32.totalorder %s31, 1
      %p70 = por %p68, %p69
      %p71 = scmp.ne.s32.totalorder %s62, %s63
      %p72 = scmp.eq.s32.totalorder %s31, 0
      %p73 = por %p71, %p72
      %p74 = scmp.ne.s32.totalorder %s62, %s63
      %p75 = scmp.eq.s32.totalorder %s32, 1
      %p76 = por %p74, %p75
      %p78 = scmp.ne.s32.totalorder %s63, %s77
      %p79 = scmp.eq.s32.totalorder %s32, 0
      %p80 = por %p78, %p79
      %s82 = sadd.s32 %s81, 1
      %p85 = scmp.eq.s32.totalorder %s26, 1
      %p86 = scmp.ne.s32.totalorder %s81, %s83
      %p87 = scmp.eq.s32.totalorder %s26, 0
      %p88 = por %p86, %p87
      %p89 = scmp.ne.s32.totalorder %s81, %s83
      %p90 = scmp.eq.s32.totalorder %s31, 1
      %p91 = por %p89, %p90
      %p92 = scmp.ne.s32.totalorder %s83, %s84
      %p93 = scmp.eq.s32.totalorder %s31, 0
      %p94 = por %p92, %p93
      %p95 = scmp.ne.s32.totalorder %s83, %s84
      %p96 = scmp.eq.s32.totalorder %s32, 1
      %p97 = por %p95, %p96
      %p99 = scmp.ne.s32.totalorder %s84, %s98
      %p100 = scmp.eq.s32.totalorder %s32, 0
      %p101 = por %p99, %p100
      %s103 = sadd.s32 %s102, 1
      %p106 = scmp.eq.s32.totalorder %s26, 1
      %p107 = scmp.ne.s32.totalorder %s102, %s104
      %p108 = scmp.eq.s32.totalorder %s26, 0
      %p109 = por %p107, %p108
      %p110 = scmp.ne.s32.totalorder %s102, %s104
      %p111 = scmp.eq.s32.totalorder %s31, 1
      %p112 = por %p110, %p111
      %p113 = scmp.ne.s32.totalorder %s104, %s105
      %p114 = scmp.eq.s32.totalorder %s31, 0
      %p115 = por %p113, %p114
      %p116 = scmp.ne.s32.totalorder %s104, %s105
      %p117 = scmp.eq.s32.totalorder %s32, 1
      %p118 = por %p116, %p117
      %p120 = scmp.ne.s32.totalorder %s105, %s119
      %p121 = scmp.eq.s32.totalorder %s32, 0
      %p122 = por %p120, %p121
      %s124 = sadd.s32 %s123, 1
      %p127 = scmp.eq.s32.totalorder %s26, 1
      %p128 = scmp.ne.s32.totalorder %s123, %s125
      %p129 = scmp.eq.s32.totalorder %s26, 0
      %p130 = por %p128, %p129
      %p131 = scmp.ne.s32.totalorder %s123, %s125
      %p132 = scmp.eq.s32.totalorder %s31, 1
      %p133 = por %p131, %p132
      %p134 = scmp.ne.s32.totalorder %s125, %s126
      %p135 = scmp.eq.s32.totalorder %s31, 0
      %p136 = por %p134, %p135
      %p137 = scmp.ne.s32.totalorder %s125, %s126
      %p138 = scmp.eq.s32.totalorder %s32, 1
      %p139 = por %p137, %p138
      %p141 = scmp.ne.s32.totalorder %s126, %s140
      %p142 = scmp.eq.s32.totalorder %s32, 0
      %p143 = por %p141, %p142
      %s145 = sadd.s32 %s144, 1
      %p148 = scmp.eq.s32.totalorder %s26, 1
      %p149 = scmp.ne.s32.totalorder %s144, %s146
      %p150 = scmp.eq.s32.totalorder %s26, 0
      %p151 = por %p149, %p150
      %p152 = scmp.ne.s32.totalorder %s144, %s146
      %p153 = scmp.eq.s32.totalorder %s31, 1
      %p154 = por %p152, %p153
      %p155 = scmp.ne.s32.totalorder %s146, %s147
      %p156 = scmp.eq.s32.totalorder %s31, 0
      %p157 = por %p155, %p156
      %p158 = scmp.ne.s32.totalorder %s146, %s147
      %p159 = scmp.eq.s32.totalorder %s32, 1
      %p160 = por %p158, %p159
      %p162 = scmp.ne.s32.totalorder %s147, %s161
      %p163 = scmp.eq.s32.totalorder %s32, 0
      %p164 = por %p162, %p163
      %s166 = sadd.s32 %s165, 1
      %p169 = scmp.eq.s32.totalorder %s26, 1
      %p170 = scmp.ne.s32.totalorder %s165, %s167
      %p171 = scmp.eq.s32.totalorder %s26, 0
      %p172 = por %p170, %p171
      %p173 = scmp.ne.s32.totalorder %s165, %s167
      %p174 = scmp.eq.s32.totalorder %s31, 1
      %p175 = por %p173, %p174
      %p176 = scmp.ne.s32.totalorder %s167, %s168
      %p177 = scmp.eq.s32.totalorder %s31, 0
      %p178 = por %p176, %p177
      %p179 = scmp.ne.s32.totalorder %s167, %s168
      %p180 = scmp.eq.s32.totalorder %s32, 1
      %p181 = por %p179, %p180
      %p183 = scmp.ne.s32.totalorder %s168, %s182
      %p184 = scmp.eq.s32.totalorder %s32, 0
      %p185 = por %p183, %p184
      %s187 = sadd.s32 %s186, 1
      %p190 = scmp.eq.s32.totalorder %s26, 1
      %p191 = scmp.ne.s32.totalorder %s186, %s188
      %p192 = scmp.eq.s32.totalorder %s26, 0
      %p193 = por %p191, %p192
      %p194 = scmp.ne.s32.totalorder %s186, %s188
      %p195 = scmp.eq.s32.totalorder %s31, 1
      %p196 = por %p194, %p195
      %p197 = scmp.ne.s32.totalorder %s188, %s189
      %p198 = scmp.eq.s32.totalorder %s31, 0
      %p199 = por %p197, %p198
      %p200 = scmp.ne.s32.totalorder %s188, %s189
      %p201 = scmp.eq.s32.totalorder %s32, 1
      %p202 = por %p200, %p201
      %p204 = scmp.ne.s32.totalorder %s189, %s203
      %p205 = scmp.eq.s32.totalorder %s32, 0
      %p206 = por %p204, %p205
      %s208 = sadd.s32 %s207, 1
      %p211 = scmp.eq.s32.totalorder %s26, 1
      %p212 = scmp.ne.s32.totalorder %s207, %s209
      %p213 = scmp.eq.s32.totalorder %s26, 0
      %p214 = por %p212, %p213
      %p215 = scmp.ne.s32.totalorder %s207, %s209
      %p216 = scmp.eq.s32.totalorder %s31, 1
      %p217 = por %p215, %p216
      %p218 = scmp.ne.s32.totalorder %s209, %s210
      %p219 = scmp.eq.s32.totalorder %s31, 0
      %p220 = por %p218, %p219
      %p221 = scmp.ne.s32.totalorder %s209, %s210
      %p222 = scmp.eq.s32.totalorder %s32, 1
      %p223 = por %p221, %p222
      %p225 = scmp.ne.s32.totalorder %s210, %s224
      %p226 = scmp.eq.s32.totalorder %s32, 0
      %p227 = por %p225, %p226
      %s229 = sadd.s32 %s228, 1
      %p232 = scmp.eq.s32.totalorder %s26, 1
      %p233 = scmp.ne.s32.totalorder %s228, %s230
      %p234 = scmp.eq.s32.totalorder %s26, 0
      %p235 = por %p233, %p234
      %p236 = scmp.ne.s32.totalorder %s228, %s230
      %p237 = scmp.eq.s32.totalorder %s31, 1
      %p238 = por %p236, %p237
      %p239 = scmp.ne.s32.totalorder %s230, %s231
      %p240 = scmp.eq.s32.totalorder %s31, 0
      %p241 = por %p239, %p240
      %p242 = scmp.ne.s32.totalorder %s230, %s231
      %p243 = scmp.eq.s32.totalorder %s32, 1
      %p244 = por %p242, %p243
      %p246 = scmp.ne.s32.totalorder %s231, %s245
      %p247 = scmp.eq.s32.totalorder %s32, 0
      %p248 = por %p246, %p247
      %s250 = sadd.s32 %s249, 1
      %p253 = scmp.eq.s32.totalorder %s26, 1
      %p254 = scmp.ne.s32.totalorder %s249, %s251
      %p255 = scmp.eq.s32.totalorder %s26, 0
      %p256 = por %p254, %p255
      %p257 = scmp.ne.s32.totalorder %s249, %s251
      %p258 = scmp.eq.s32.totalorder %s31, 1
      %p259 = por %p257, %p258
      %p260 = scmp.ne.s32.totalorder %s251, %s252
      %p261 = scmp.eq.s32.totalorder %s31, 0
      %p262 = por %p260, %p261
      %p263 = scmp.ne.s32.totalorder %s251, %s252
      %p264 = scmp.eq.s32.totalorder %s32, 1
      %p265 = por %p263, %p264
      %p267 = scmp.ne.s32.totalorder %s252, %s266
      %p268 = scmp.eq.s32.totalorder %s32, 0
      %p269 = por %p267, %p268
      %s271 = sadd.s32 %s270, 1
      %p274 = scmp.eq.s32.totalorder %s26, 1
      %p275 = scmp.ne.s32.totalorder %s270, %s272
      %p276 = scmp.eq.s32.totalorder %s26, 0
      %p277 = por %p275, %p276
      %p278 = scmp.ne.s32.totalorder %s270, %s272
      %p279 = scmp.eq.s32.totalorder %s31, 1
      %p280 = por %p278, %p279
      %p281 = scmp.ne.s32.totalorder %s272, %s273
      %p282 = scmp.eq.s32.totalorder %s31, 0
      %p283 = por %p281, %p282
      %p284 = scmp.ne.s32.totalorder %s272, %s273
      %p285 = scmp.eq.s32.totalorder %s32, 1
      %p286 = por %p284, %p285
      %p288 = scmp.ne.s32.totalorder %s273, %s287
      %p289 = scmp.eq.s32.totalorder %s32, 0
      %p290 = por %p288, %p289
      %s292 = sadd.s32 %s291, 1
      %p295 = scmp.eq.s32.totalorder %s26, 1
      %p296 = scmp.ne.s32.totalorder %s291, %s293
      %p297 = scmp.eq.s32.totalorder %s26, 0
      %p298 = por %p296, %p297
      %p299 = scmp.ne.s32.totalorder %s291, %s293
      %p300 = scmp.eq.s32.totalorder %s31, 1
      %p301 = por %p299, %p300
      %p302 = scmp.ne.s32.totalorder %s293, %s294
      %p303 = scmp.eq.s32.totalorder %s31, 0
      %p304 = por %p302, %p303
      %p305 = scmp.ne.s32.totalorder %s293, %s294
      %p306 = scmp.eq.s32.totalorder %s32, 1
      %p307 = por %p305, %p306
      %p309 = scmp.ne.s32.totalorder %s294, %s308
      %p310 = scmp.eq.s32.totalorder %s32, 0
      %p311 = por %p309, %p310
      %s313 = sadd.s32 %s312, 1
      %p316 = scmp.eq.s32.totalorder %s26, 1
      %p317 = scmp.ne.s32.totalorder %s312, %s314
      %p318 = scmp.eq.s32.totalorder %s26, 0
      %p319 = por %p317, %p318
      %p320 = scmp.ne.s32.totalorder %s312, %s314
      %p321 = scmp.eq.s32.totalorder %s31, 1
      %p322 = por %p320, %p321
      %p323 = scmp.ne.s32.totalorder %s314, %s315
      %p324 = scmp.eq.s32.totalorder %s31, 0
      %p325 = por %p323, %p324
      %p326 = scmp.ne.s32.totalorder %s314, %s315
      %p327 = scmp.eq.s32.totalorder %s32, 1
      %p328 = por %p326, %p327
      %p330 = scmp.ne.s32.totalorder %s315, %s329
      %p331 = scmp.eq.s32.totalorder %s32, 0
      %p332 = por %p330, %p331
      %s333 = ssub.s32 %s26, %s33
      %p334 = scmp.eq.s32.totalorder %s333, 0
      %s336 = sadd.s32 %s335, 1
      %s337 = scalar_select %p334, %s335, %s336
      %p340 = pneg %p334
      %p341 = scmp.eq.s32.totalorder %s26, 1
      %p342 = por %p340, %p341
      %p343 = scmp.ne.s32.totalorder %s335, %s338
      %p344 = scmp.eq.s32.totalorder %s26, 0
      %p345 = por %p343, %p344
      %p346 = scmp.ne.s32.totalorder %s335, %s338
      %p347 = scmp.eq.s32.totalorder %s31, 1
      %p348 = por %p346, %p347
      %p349 = scmp.ne.s32.totalorder %s338, %s339
      %p350 = scmp.eq.s32.totalorder %s31, 0
      %p351 = por %p349, %p350
      %p352 = scmp.ne.s32.totalorder %s338, %s339
      %p353 = scmp.eq.s32.totalorder %s32, 1
      %p354 = por %p352, %p353
      %p356 = scmp.ne.s32.totalorder %s339, %s355
      %p357 = scmp.eq.s32.totalorder %s32, 0
      %p358 = por %p356, %p357
      %p359 = scmp.le.s32.totalorder 1, %s26
      %p360 = scmp.lt.s32.totalorder %s26, 3
      %p361 = pnand %p359, %p360
      %p362 = pneg %p361
      // Predicated region
      $region9: #{transformer_forward.3} parent=5 // pred_check
        _
      $region10: #{transformer_forward.3} parent=5 // pred_check_branch
        %364 = sbr.rel (%p361) target = $region12
      $region11: #{transformer_forward.3} parent=5 // pred_region
        %s365 = ssub.s32 %s26, 1
        // Predicated region
        $region13: #{transformer_forward.3} parent=11 // pred_check
          %p366 = pneg %p73
        $region14: #{transformer_forward.3} parent=11 // pred_check_branch
          %368 = sbr.rel (%p366) target = $region16
        $region15: #{transformer_forward.3} parent=11 // pred_region
          _
        $region16: #{transformer_forward.3} parent=11 // pred_fallthru
          _
        // Predicated region
        $region17: #{transformer_forward.3} parent=11 // pred_check
          %p369 = pneg %p94
        $region18: #{transformer_forward.3} parent=11 // pred_check_branch
          %371 = sbr.rel (%p369) target = $region20
        $region19: #{transformer_forward.3} parent=11 // pred_region
          _
        $region20: #{transformer_forward.3} parent=11 // pred_fallthru
          _
        // Predicated region
        $region21: #{transformer_forward.3} parent=11 // pred_check
          %p372 = pneg %p115
        $region22: #{transformer_forward.3} parent=11 // pred_check_branch
          %374 = sbr.rel (%p372) target = $region24
        $region23: #{transformer_forward.3} parent=11 // pred_region
          _
        $region24: #{transformer_forward.3} parent=11 // pred_fallthru
          _
        // Predicated region
        $region25: #{transformer_forward.3} parent=11 // pred_check
          %p375 = pneg %p136
        $region26: #{transformer_forward.3} parent=11 // pred_check_branch
          %377 = sbr.rel (%p375) target = $region28
        $region27: #{transformer_forward.3} parent=11 // pred_region
          _
        $region28: #{transformer_forward.3} parent=11 // pred_fallthru
          _
        // Predicated region
        $region29: #{transformer_forward.3} parent=11 // pred_check
          %p378 = pneg %p157
        $region30: #{transformer_forward.3} parent=11 // pred_check_branch
          %380 = sbr.rel (%p378) target = $region32
        $region31: #{transformer_forward.3} parent=11 // pred_region
          _
        $region32: #{transformer_forward.3} parent=11 // pred_fallthru
          _
        // Predicated region
        $region33: #{transformer_forward.3} parent=11 // pred_check
          %p381 = pneg %p178
        $region34: #{transformer_forward.3} parent=11 // pred_check_branch
          %383 = sbr.rel (%p381) target = $region36
        $region35: #{transformer_forward.3} parent=11 // pred_region
          _
        $region36: #{transformer_forward.3} parent=11 // pred_fallthru
          _
        // Predicated region
        $region37: #{transformer_forward.3} parent=11 // pred_check
          %p384 = pneg %p199
        $region38: #{transformer_forward.3} parent=11 // pred_check_branch
          %386 = sbr.rel (%p384) target = $region40
        $region39: #{transformer_forward.3} parent=11 // pred_region
          _
        $region40: #{transformer_forward.3} parent=11 // pred_fallthru
          _
        // Predicated region
        $region41: #{transformer_forward.3} parent=11 // pred_check
          %p387 = pneg %p220
        $region42: #{transformer_forward.3} parent=11 // pred_check_branch
          %389 = sbr.rel (%p387) target = $region44
        $region43: #{transformer_forward.3} parent=11 // pred_region
          _
        $region44: #{transformer_forward.3} parent=11 // pred_fallthru
          _
        // Predicated region
        $region45: #{transformer_forward.3} parent=11 // pred_check
          %p390 = pneg %p241
        $region46: #{transformer_forward.3} parent=11 // pred_check_branch
          %392 = sbr.rel (%p390) target = $region48
        $region47: #{transformer_forward.3} parent=11 // pred_region
          _
        $region48: #{transformer_forward.3} parent=11 // pred_fallthru
          _
        // Predicated region
        $region49: #{transformer_forward.3} parent=11 // pred_check
          %p393 = pneg %p262
        $region50: #{transformer_forward.3} parent=11 // pred_check_branch
          %395 = sbr.rel (%p393) target = $region52
        $region51: #{transformer_forward.3} parent=11 // pred_region
          _
        $region52: #{transformer_forward.3} parent=11 // pred_fallthru
          _
        // Predicated region
        $region53: #{transformer_forward.3} parent=11 // pred_check
          %p396 = pneg %p283
        $region54: #{transformer_forward.3} parent=11 // pred_check_branch
          %398 = sbr.rel (%p396) target = $region56
        $region55: #{transformer_forward.3} parent=11 // pred_region
          _
        $region56: #{transformer_forward.3} parent=11 // pred_fallthru
          _
        // Predicated region
        $region57: #{transformer_forward.3} parent=11 // pred_check
          %p399 = pneg %p304
        $region58: #{transformer_forward.3} parent=11 // pred_check_branch
          %401 = sbr.rel (%p399) target = $region60
        $region59: #{transformer_forward.3} parent=11 // pred_region
          _
        $region60: #{transformer_forward.3} parent=11 // pred_fallthru
          _
        // Predicated region
        $region61: #{transformer_forward.3} parent=11 // pred_check
          %p402 = pneg %p325
        $region62: #{transformer_forward.3} parent=11 // pred_check_branch
          %404 = sbr.rel (%p402) target = $region64
        $region63: #{transformer_forward.3} parent=11 // pred_region
          _
        $region64: #{transformer_forward.3} parent=11 // pred_fallthru
          _
      $region12: #{transformer_forward.3} parent=5 // pred_fallthru
        _
      %p405 = scmp.lt.s32.totalorder %s26, 2
      // Predicated region
      $region65: #{transformer_forward.3} parent=5 // pred_check
        %p406 = pneg %p405
      $region66: #{transformer_forward.3} parent=5 // pred_check_branch
        %408 = sbr.rel (%p406) target = $region68
      $region67: #{transformer_forward.3} parent=5 // pred_region
        // Predicated region
        $region69: #{transformer_forward.3} parent=67 // pred_check
          %p409 = pneg %p46
        $region70: #{transformer_forward.3} parent=67 // pred_check_branch
          %411 = sbr.rel (%p409) target = $region72
        $region71: #{transformer_forward.3} parent=67 // pred_region
          %s412 = sand.u32 %s36, 1
          %s413 = scalar_lea.sflag [#allocation3], %s412
          %s414 = sand.u32 %s36, 1
          %s415 = smul.addr %s414, 8
          %s416 = scalar_lea.vmem [#allocation2], %s415
          %s418 = ssub.s32 128, 128
          %419 = vsyncadd %s413, %s418
          %s420 = smul.addr %s26, 128
          %s421 = scalar_lea.hbm %s0, %s420
          %s423 = sshll.u32 %s416, 4
          %s424 = int_to_ptr.vmem [resolvable:$true] %s423
          %426 = dma.hbm_to_vmem [thread:$0]  %s421, 128, %s424, %s413
        $region72: #{transformer_forward.3} parent=67 // pred_fallthru
          _
      $region68: #{transformer_forward.3} parent=5 // pred_fallthru
        _
      %p427 = scmp.le.s32.totalorder 1, %s26
      %p428 = scmp.lt.s32.totalorder %s26, 3
      %p429 = pnand %p427, %p428
      %p430 = pneg %p429
      // Predicated region
      $region73: #{transformer_forward.3} parent=5 // pred_check
        _
      $region74: #{transformer_forward.3} parent=5 // pred_check_branch
        %432 = sbr.rel (%p429) target = $region76
      $region75: #{transformer_forward.3} parent=5 // pred_region
        %s433 = ssub.s32 %s26, 1
        %s434 = sand.u32 %s39, 1
        %s435 = scalar_lea.sflag [#allocation3], %s434
        %s436 = sand.u32 %s39, 1
        %s437 = smul.addr %s436, 8
        %s438 = scalar_lea.vmem [#allocation2], %s437
        // Predicated region
        $region77: #{transformer_forward.3} parent=75 // pred_check
          %p439 = pneg %p52
        $region78: #{transformer_forward.3} parent=75 // pred_check_branch
          %441 = sbr.rel (%p439) target = $region80
        $region79: #{transformer_forward.3} parent=75 // pred_region
          %442 = dma.done %s435, 128
        $region80: #{transformer_forward.3} parent=75 // pred_fallthru
          _
        %s443 = sand.u32 %s39, 1
        %s444 = scalar_lea.sflag [#allocation3], %s443
        %s445 = sand.u32 %s39, 1
        %s446 = smul.addr %s445, 8
        %s447 = scalar_lea.vmem [#allocation2], %s446
        %p448 = pneg %p52
        %p449 = pneg %p49
        %p450 = pneg %p73
        %p451 = pneg %p70
        %p452 = pneg %p94
        %p453 = pneg %p91
        %p454 = pneg %p115
        %p455 = pneg %p112
        %p456 = pneg %p136
        %p457 = pneg %p133
        %p458 = pneg %p157
        %p459 = pneg %p154
        %p460 = pneg %p178
        %p461 = pneg %p175
        %p462 = pneg %p199
        %p463 = pneg %p196
        %p464 = pneg %p220
        %p465 = pneg %p217
        %p466 = pneg %p241
        %p467 = pneg %p238
        %p468 = pneg %p262
        %p469 = pneg %p259
        %p470 = pneg %p283
        %p471 = pneg %p280
        %p472 = pneg %p304
        %p473 = pneg %p301
        %p474 = pneg %p325
        %p475 = pneg %p322
        %p476 = pneg %p351
        %p477 = pneg %p348
        %s478 = sand.u32 %s338, 1
        %s479 = scalar_lea.sflag [#allocation4], %s478
        %s480 = sand.u32 %s338, 1
        %s481 = smul.addr %s480, 8
        %s482 = scalar_lea.vmem [#allocation5], %s481
        %v484 = vld [vmem:[%s438] sm:$0xff]
        %v485 = vld [vmem:[%s1] sm:$0x1]
        %v486 = vld [vmem:[%s2] sm:$0x1]
        %vm487 = vcmask 261120
        %v488 = vsel %vm487, %v484, 0.0
        %489 = vadd.xlane.f32.xlu0 %v488
        %v490 = vpop.xlane.xlu0 %489
        %v491 = vrcp.pop 32.0
        %v492 = vmul.f32 %v490, %v491
        %v493 = vsub.f32 %v484, %v492
        %v494 = vmul.f32 %v493, %v493
        %v495 = vsel %vm487, %v494, 0.0
        %496 = vadd.xlane.f32.xlu0 %v495
        %v497 = vpop.xlane.xlu0 %496
        %v498 = vmul.f32 %v497, %v491
        %v499 = vadd.f32 %v498, 1e-05
        %v500 = vrsqrt.pop %v499
        %v501 = vmul.f32 %v493, %v500
        %v503 = vlaneseq
        %v504 = vshrl.u32 %v503, 7
        %v505 = vsub.s32 0, %v504
        %v506 = vrot.slane %v485, %v505
        %v508 = vmul.f32 %v501, %v506
        %v510 = vlaneseq
        %v511 = vshrl.u32 %v510, 7
        %v512 = vsub.s32 0, %v511
        %v513 = vrot.slane %v486, %v512
        %v515 = vadd.f32 %v508, %v513
        %v516 = vpack.c.bf16 %v515, %v515
        %v517 = vld [vmem:[%s3] sm:$0xf]
        %v518 = vld [vmem:[%s3 + $0x4] sm:$0xf]
        %v519 = vld [vmem:[%s3 + $0x8] sm:$0xf]
        %v520 = vld [vmem:[%s3 + $0xc] sm:$0xf]
        %v521 = vld [vmem:[%s3 + $0x10] sm:$0xf]
        %v522 = vld [vmem:[%s3 + $0x14] sm:$0xf]
        %v523 = vld [vmem:[%s3 + $0x18] sm:$0xf]
        %v524 = vld [vmem:[%s3 + $0x1c] sm:$0xf]
        %v525 = vld [vmem:[%s3 + $0x20] sm:$0xf]
        %v526 = vld [vmem:[%s3 + $0x24] sm:$0xf]
        %v527 = vld [vmem:[%s3 + $0x28] sm:$0xf]
        %v528 = vld [vmem:[%s3 + $0x2c] sm:$0xf]
        %v529 = vld [vmem:[%s3 + $0x30] sm:$0xf]
        %v530 = vld [vmem:[%s3 + $0x34] sm:$0xf]
        %v531 = vld [vmem:[%s3 + $0x38] sm:$0xf]
        %v532 = vld [vmem:[%s3 + $0x3c] sm:$0xf]
        %v537 = vunpack.c.l.b16 %v517
        %v538 = vunpack.c.l.b16 %v518
        %v539 = vunpack.c.l.b16 %v519
        %v540 = vunpack.c.l.b16 %v520
        %v541 = vpack.c.b16 %v538, %v537
        %v542 = vpack.c.b16 %v540, %v539
        %v546 = vsel %vm487, %v516, 0
        %548 = vmatprep.subr.bf16.mxu0 0
        %549 = vmatpush1.bf16.msra.mxu0 %v541
        %550 = vmatprep.subr.bf16.mxu0 0
        %551 = vmatpush1.bf16.msra.mxu0 %v542
        %552 = vmatprep.subr.bf16.mxu0 0
        %553 = vmatpush1.bf16.msra.mxu0 0
        %554 = vmatprep.subr.bf16.mxu0 0
        %555 = vmatpush1.bf16.msra.mxu0 0
        %556 = vmatprep.subr.bf16.mxu0 0
        %557 = vmatpush1.bf16.msra.mxu0 0
        %558 = vmatprep.subr.bf16.mxu0 0
        %559 = vmatpush1.bf16.msra.mxu0 0
        %560 = vmatprep.subr.bf16.mxu0 0
        %561 = vmatpush1.bf16.msra.mxu0 0
        %562 = vmatprep.subr.bf16.mxu0 0
        %563 = vmatpush1.bf16.msra.mxu0 0
        %564 = vmatprep.subr.bf16.mxu0 0
        %565 = vmatpush1.bf16.msra.mxu0 0
        %566 = vmatprep.subr.bf16.mxu0 0
        %567 = vmatpush1.bf16.msra.mxu0 0
        %568 = vmatprep.subr.bf16.mxu0 0
        %569 = vmatpush1.bf16.msra.mxu0 0
        %570 = vmatprep.subr.bf16.mxu0 0
        %571 = vmatpush1.bf16.msra.mxu0 0
        %572 = vmatprep.subr.bf16.mxu0 0
        %573 = vmatpush1.bf16.msra.mxu0 0
        %574 = vmatprep.subr.bf16.mxu0 0
        %575 = vmatpush1.bf16.msra.mxu0 0
        %576 = vmatprep.subr.bf16.mxu0 0
        %577 = vmatpush1.bf16.msra.mxu0 0
        %578 = vmatprep.subr.bf16.mxu0 0
        %579 = vmatpush1.bf16.msra.mxu0 0
        %580 = vmatprep.mubr.bf16.mxu0 0
        %581 = vmatmul.mubr.bf16.gmra.mrb[0].mxu0 %v546
        %v582 = vpop.f32.mrb[0].mxu0
        %v583 = vadd.f32 0.0, %v582
        %v584 = vpop.f32.mrb[0].mxu0
        %v585 = vpop.f32.mrb[0].mxu0
        %v586 = vpop.f32.mrb[0].mxu0
        %587 = vdwg.mxu0
        %v592 = vunpack.c.l.b16 %v521
        %v593 = vunpack.c.l.b16 %v522
        %v594 = vunpack.c.l.b16 %v523
        %v595 = vunpack.c.l.b16 %v524
        %v596 = vpack.c.b16 %v593, %v592
        %v597 = vpack.c.b16 %v595, %v594
        %600 = vmatprep.subr.bf16.mxu0 0
        %601 = vmatpush1.bf16.msra.mxu0 %v596
        %602 = vmatprep.subr.bf16.mxu0 0
        %603 = vmatpush1.bf16.msra.mxu0 %v597
        %604 = vmatprep.subr.bf16.mxu0 0
        %605 = vmatpush1.bf16.msra.mxu0 0
        %606 = vmatprep.subr.bf16.mxu0 0
        %607 = vmatpush1.bf16.msra.mxu0 0
        %608 = vmatprep.subr.bf16.mxu0 0
        %609 = vmatpush1.bf16.msra.mxu0 0
        %610 = vmatprep.subr.bf16.mxu0 0
        %611 = vmatpush1.bf16.msra.mxu0 0
        %612 = vmatprep.subr.bf16.mxu0 0
        %613 = vmatpush1.bf16.msra.mxu0 0
        %614 = vmatprep.subr.bf16.mxu0 0
        %615 = vmatpush1.bf16.msra.mxu0 0
        %616 = vmatprep.subr.bf16.mxu0 0
        %617 = vmatpush1.bf16.msra.mxu0 0
        %618 = vmatprep.subr.bf16.mxu0 0
        %619 = vmatpush1.bf16.msra.mxu0 0
        %620 = vmatprep.subr.bf16.mxu0 0
        %621 = vmatpush1.bf16.msra.mxu0 0
        %622 = vmatprep.subr.bf16.mxu0 0
        %623 = vmatpush1.bf16.msra.mxu0 0
        %624 = vmatprep.subr.bf16.mxu0 0
        %625 = vmatpush1.bf16.msra.mxu0 0
        %626 = vmatprep.subr.bf16.mxu0 0
        %627 = vmatpush1.bf16.msra.mxu0 0
        %628 = vmatprep.subr.bf16.mxu0 0
        %629 = vmatpush1.bf16.msra.mxu0 0
        %630 = vmatprep.subr.bf16.mxu0 0
        %631 = vmatpush1.bf16.msra.mxu0 0
        %632 = vmatprep.mubr.bf16.mxu0 0
        %633 = vmatmul.mubr.bf16.gmra.mrb[0].mxu0 %v546
        %v634 = vpop.f32.mrb[0].mxu0
        %v635 = vadd.f32 0.0, %v634
        %v636 = vpop.f32.mrb[0].mxu0
        %v637 = vpop.f32.mrb[0].mxu0
        %v638 = vpop.f32.mrb[0].mxu0
        %639 = vdwg.mxu0
        %v644 = vunpack.c.l.b16 %v525
        %v645 = vunpack.c.l.b16 %v526
        %v646 = vunpack.c.l.b16 %v527
        %v647 = vunpack.c.l.b16 %v528
        %v648 = vpack.c.b16 %v645, %v644
        %v649 = vpack.c.b16 %v647, %v646
        %652 = vmatprep.subr.bf16.mxu0 0
        %653 = vmatpush1.bf16.msra.mxu0 %v648
        %654 = vmatprep.subr.bf16.mxu0 0
        %655 = vmatpush1.bf16.msra.mxu0 %v649
        %656 = vmatprep.subr.bf16.mxu0 0
        %657 = vmatpush1.bf16.msra.mxu0 0
        %658 = vmatprep.subr.bf16.mxu0 0
        %659 = vmatpush1.bf16.msra.mxu0 0
        %660 = vmatprep.subr.bf16.mxu0 0
        %661 = vmatpush1.bf16.msra.mxu0 0
        %662 = vmatprep.subr.bf16.mxu0 0
        %663 = vmatpush1.bf16.msra.mxu0 0
        %664 = vmatprep.subr.bf16.mxu0 0
        %665 = vmatpush1.bf16.msra.mxu0 0
        %666 = vmatprep.subr.bf16.mxu0 0
        %667 = vmatpush1.bf16.msra.mxu0 0
        %668 = vmatprep.subr.bf16.mxu0 0
        %669 = vmatpush1.bf16.msra.mxu0 0
        %670 = vmatprep.subr.bf16.mxu0 0
        %671 = vmatpush1.bf16.msra.mxu0 0
        %672 = vmatprep.subr.bf16.mxu0 0
        %673 = vmatpush1.bf16.msra.mxu0 0
        %674 = vmatprep.subr.bf16.mxu0 0
        %675 = vmatpush1.bf16.msra.mxu0 0
        %676 = vmatprep.subr.bf16.mxu0 0
        %677 = vmatpush1.bf16.msra.mxu0 0
        %678 = vmatprep.subr.bf16.mxu0 0
        %679 = vmatpush1.bf16.msra.mxu0 0
        %680 = vmatprep.subr.bf16.mxu0 0
        %681 = vmatpush1.bf16.msra.mxu0 0
        %682 = vmatprep.subr.bf16.mxu0 0
        %683 = vmatpush1.bf16.msra.mxu0 0
        %684 = vmatprep.mubr.bf16.mxu0 0
        %685 = vmatmul.mubr.bf16.gmra.mrb[0].mxu0 %v546
        %v686 = vpop.f32.mrb[0].mxu0
        %v687 = vadd.f32 0.0, %v686
        %v688 = vpop.f32.mrb[0].mxu0
        %v689 = vpop.f32.mrb[0].mxu0
        %v690 = vpop.f32.mrb[0].mxu0
        %691 = vdwg.mxu0
        %v696 = vunpack.c.l.b16 %v529
        %v697 = vunpack.c.l.b16 %v530
        %v698 = vunpack.c.l.b16 %v531
        %v699 = vunpack.c.l.b16 %v532
        %v700 = vpack.c.b16 %v697, %v696
        %v701 = vpack.c.b16 %v699, %v698
        %704 = vmatprep.subr.bf16.mxu0 0
        %705 = vmatpush1.bf16.msra.mxu0 %v700
        %706 = vmatprep.subr.bf16.mxu0 0
        %707 = vmatpush1.bf16.msra.mxu0 %v701
        %708 = vmatprep.subr.bf16.mxu0 0
        %709 = vmatpush1.bf16.msra.mxu0 0
        %710 = vmatprep.subr.bf16.mxu0 0
        %711 = vmatpush1.bf16.msra.mxu0 0
        %712 = vmatprep.subr.bf16.mxu0 0
        %713 = vmatpush1.bf16.msra.mxu0 0
        %714 = vmatprep.subr.bf16.mxu0 0
        %715 = vmatpush1.bf16.msra.mxu0 0
        %716 = vmatprep.subr.bf16.mxu0 0
        %717 = vmatpush1.bf16.msra.mxu0 0
        %718 = vmatprep.subr.bf16.mxu0 0
        %719 = vmatpush1.bf16.msra.mxu0 0
        %720 = vmatprep.subr.bf16.mxu0 0
        %721 = vmatpush1.bf16.msra.mxu0 0
        %722 = vmatprep.subr.bf16.mxu0 0
        %723 = vmatpush1.bf16.msra.mxu0 0
        %724 = vmatprep.subr.bf16.mxu0 0
        %725 = vmatpush1.bf16.msra.mxu0 0
        %726 = vmatprep.subr.bf16.mxu0 0
        %727 = vmatpush1.bf16.msra.mxu0 0
        %728 = vmatprep.subr.bf16.mxu0 0
        %729 = vmatpush1.bf16.msra.mxu0 0
        %730 = vmatprep.subr.bf16.mxu0 0
        %731 = vmatpush1.bf16.msra.mxu0 0
        %732 = vmatprep.subr.bf16.mxu0 0
        %733 = vmatpush1.bf16.msra.mxu0 0
        %734 = vmatprep.subr.bf16.mxu0 0
        %735 = vmatpush1.bf16.msra.mxu0 0
        %736 = vmatprep.mubr.bf16.mxu0 0
        %737 = vmatmul.mubr.bf16.gmra.mrb[0].mxu0 %v546
        %v738 = vpop.f32.mrb[0].mxu0
        %v739 = vadd.f32 0.0, %v738
        %v740 = vpop.f32.mrb[0].mxu0
        %v741 = vpop.f32.mrb[0].mxu0
        %v742 = vpop.f32.mrb[0].mxu0
        %743 = vdwg.mxu0
        %v744 = vld [vmem:[%s4] sm:$0xf]
        %v745 = vld [vmem:[%s4 + $0x4] sm:$0xf]
        %v746 = vld [vmem:[%s4 + $0x8] sm:$0xf]
        %v747 = vld [vmem:[%s4 + $0xc] sm:$0xf]
        %v748 = vld [vmem:[%s4 + $0x10] sm:$0xf]
        %v749 = vld [vmem:[%s4 + $0x14] sm:$0xf]
        %v750 = vld [vmem:[%s4 + $0x18] sm:$0xf]
        %v751 = vld [vmem:[%s4 + $0x1c] sm:$0xf]
        %v752 = vld [vmem:[%s4 + $0x20] sm:$0xf]
        %v753 = vld [vmem:[%s4 + $0x24] sm:$0xf]
        %v754 = vld [vmem:[%s4 + $0x28] sm:$0xf]
        %v755 = vld [vmem:[%s4 + $0x2c] sm:$0xf]
        %v756 = vld [vmem:[%s4 + $0x30] sm:$0xf]
        %v757 = vld [vmem:[%s4 + $0x34] sm:$0xf]
        %v758 = vld [vmem:[%s4 + $0x38] sm:$0xf]
        %v759 = vld [vmem:[%s4 + $0x3c] sm:$0xf]
        %v764 = vunpack.c.l.b16 %v744
        %v765 = vunpack.c.l.b16 %v745
        %v766 = vunpack.c.l.b16 %v746
        %v767 = vunpack.c.l.b16 %v747
        %v768 = vpack.c.b16 %v765, %v764
        %v769 = vpack.c.b16 %v767, %v766
        %772 = vmatprep.subr.bf16.mxu0 0
        %773 = vmatpush1.bf16.msra.mxu0 %v768
        %774 = vmatprep.subr.bf16.mxu0 0
        %775 = vmatpush1.bf16.msra.mxu0 %v769
        %776 = vmatprep.subr.bf16.mxu0 0
        %777 = vmatpush1.bf16.msra.mxu0 0
        %778 = vmatprep.subr.bf16.mxu0 0
        %779 = vmatpush1.bf16.msra.mxu0 0
        %780 = vmatprep.subr.bf16.mxu0 0
        %781 = vmatpush1.bf16.msra.mxu0 0
        %782 = vmatprep.subr.bf16.mxu0 0
        %783 = vmatpush1.bf16.msra.mxu0 0
        %784 = vmatprep.subr.bf16.mxu0 0
        %785 = vmatpush1.bf16.msra.mxu0 0
        %786 = vmatprep.subr.bf16.mxu0 0
        %787 = vmatpush1.bf16.msra.mxu0 0
        %788 = vmatprep.subr.bf16.mxu0 0
        %789 = vmatpush1.bf16.msra.mxu0 0
        %790 = vmatprep.subr.bf16.mxu0 0
        %791 = vmatpush1.bf16.msra.mxu0 0
        %792 = vmatprep.subr.bf16.mxu0 0
        %793 = vmatpush1.bf16.msra.mxu0 0
        %794 = vmatprep.subr.bf16.mxu0 0
        %795 = vmatpush1.bf16.msra.mxu0 0
        %796 = vmatprep.subr.bf16.mxu0 0
        %797 = vmatpush1.bf16.msra.mxu0 0
        %798 = vmatprep.subr.bf16.mxu0 0
        %799 = vmatpush1.bf16.msra.mxu0 0
        %800 = vmatprep.subr.bf16.mxu0 0
        %801 = vmatpush1.bf16.msra.mxu0 0
        %802 = vmatprep.subr.bf16.mxu0 0
        %803 = vmatpush1.bf16.msra.mxu0 0
        %804 = vmatprep.mubr.bf16.mxu0 0
        %805 = vmatmul.mubr.bf16.gmra.mrb[0].mxu0 %v546
        %v806 = vpop.f32.mrb[0].mxu0
        %v807 = vadd.f32 0.0, %v806
        %v808 = vpop.f32.mrb[0].mxu0
        %v809 = vpop.f32.mrb[0].mxu0
        %v810 = vpop.f32.mrb[0].mxu0
        %811 = vdwg.mxu0
        %v816 = vunpack.c.l.b16 %v748
        %v817 = vunpack.c.l.b16 %v749
        %v818 = vunpack.c.l.b16 %v750
        %v819 = vunpack.c.l.b16 %v751
        %v820 = vpack.c.b16 %v817, %v816
        %v821 = vpack.c.b16 %v819, %v818
        %824 = vmatprep.subr.bf16.mxu0 0
        %825 = vmatpush1.bf16.msra.mxu0 %v820
        %826 = vmatprep.subr.bf16.mxu0 0
        %827 = vmatpush1.bf16.msra.mxu0 %v821
        %828 = vmatprep.subr.bf16.mxu0 0
        %829 = vmatpush1.bf16.msra.mxu0 0
        %830 = vmatprep.subr.bf16.mxu0 0
        %831 = vmatpush1.bf16.msra.mxu0 0
        %832 = vmatprep.subr.bf16.mxu0 0
        %833 = vmatpush1.bf16.msra.mxu0 0
        %834 = vmatprep.subr.bf16.mxu0 0
        %835 = vmatpush1.bf16.msra.mxu0 0
        %836 = vmatprep.subr.bf16.mxu0 0
        %837 = vmatpush1.bf16.msra.mxu0 0
        %838 = vmatprep.subr.bf16.mxu0 0
        %839 = vmatpush1.bf16.msra.mxu0 0
        %840 = vmatprep.subr.bf16.mxu0 0
        %841 = vmatpush1.bf16.msra.mxu0 0
        %842 = vmatprep.subr.bf16.mxu0 0
        %843 = vmatpush1.bf16.msra.mxu0 0
        %844 = vmatprep.subr.bf16.mxu0 0
        %845 = vmatpush1.bf16.msra.mxu0 0
        %846 = vmatprep.subr.bf16.mxu0 0
        %847 = vmatpush1.bf16.msra.mxu0 0
        %848 = vmatprep.subr.bf16.mxu0 0
        %849 = vmatpush1.bf16.msra.mxu0 0
        %850 = vmatprep.subr.bf16.mxu0 0
        %851 = vmatpush1.bf16.msra.mxu0 0
        %852 = vmatprep.subr.bf16.mxu0 0
        %853 = vmatpush1.bf16.msra.mxu0 0
        %854 = vmatprep.subr.bf16.mxu0 0
        %855 = vmatpush1.bf16.msra.mxu0 0
        %856 = vmatprep.mubr.bf16.mxu0 0
        %857 = vmatmul.mubr.bf16.gmra.mrb[0].mxu0 %v546
        %v858 = vpop.f32.mrb[0].mxu0
        %v859 = vadd.f32 0.0, %v858
        %v860 = vpop.f32.mrb[0].mxu0
        %v861 = vpop.f32.mrb[0].mxu0
        %v862 = vpop.f32.mrb[0].mxu0
        %863 = vdwg.mxu0
        %v868 = vunpack.c.l.b16 %v752
        %v869 = vunpack.c.l.b16 %v753
        %v870 = vunpack.c.l.b16 %v754
        %v871 = vunpack.c.l.b16 %v755
        %v872 = vpack.c.b16 %v869, %v868
        %v873 = vpack.c.b16 %v871, %v870
        %876 = vmatprep.subr.bf16.mxu0 0
        %877 = vmatpush1.bf16.msra.mxu0 %v872
        %878 = vmatprep.subr.bf16.mxu0 0
        %879 = vmatpush1.bf16.msra.mxu0 %v873
        %880 = vmatprep.subr.bf16.mxu0 0
        %881 = vmatpush1.bf16.msra.mxu0 0
        %882 = vmatprep.subr.bf16.mxu0 0
        %883 = vmatpush1.bf16.msra.mxu0 0
        %884 = vmatprep.subr.bf16.mxu0 0
        %885 = vmatpush1.bf16.msra.mxu0 0
        %886 = vmatprep.subr.bf16.mxu0 0
        %887 = vmatpush1.bf16.msra.mxu0 0
        %888 = vmatprep.subr.bf16.mxu0 0
        %889 = vmatpush1.bf16.msra.mxu0 0
        %890 = vmatprep.subr.bf16.mxu0 0
        %891 = vmatpush1.bf16.msra.mxu0 0
        %892 = vmatprep.subr.bf16.mxu0 0
        %893 = vmatpush1.bf16.msra.mxu0 0
        %894 = vmatprep.subr.bf16.mxu0 0
        %895 = vmatpush1.bf16.msra.mxu0 0
        %896 = vmatprep.subr.bf16.mxu0 0
        %897 = vmatpush1.bf16.msra.mxu0 0
        %898 = vmatprep.subr.bf16.mxu0 0
        %899 = vmatpush1.bf16.msra.mxu0 0
        %900 = vmatprep.subr.bf16.mxu0 0
        %901 = vmatpush1.bf16.msra.mxu0 0
        %902 = vmatprep.subr.bf16.mxu0 0
        %903 = vmatpush1.bf16.msra.mxu0 0
        %904 = vmatprep.subr.bf16.mxu0 0
        %905 = vmatpush1.bf16.msra.mxu0 0
        %906 = vmatprep.subr.bf16.mxu0 0
        %907 = vmatpush1.bf16.msra.mxu0 0
        %908 = vmatprep.mubr.bf16.mxu0 0
        %909 = vmatmul.mubr.bf16.gmra.mrb[0].mxu0 %v546
        %v910 = vpop.f32.mrb[0].mxu0
        %v911 = vadd.f32 0.0, %v910
        %v912 = vpop.f32.mrb[0].mxu0
        %v913 = vpop.f32.mrb[0].mxu0
        %v914 = vpop.f32.mrb[0].mxu0
        %915 = vdwg.mxu0
        %v920 = vunpack.c.l.b16 %v756
        %v921 = vunpack.c.l.b16 %v757
        %v922 = vunpack.c.l.b16 %v758
        %v923 = vunpack.c.l.b16 %v759
        %v924 = vpack.c.b16 %v921, %v920
        %v925 = vpack.c.b16 %v923, %v922
        %928 = vmatprep.subr.bf16.mxu0 0
        %929 = vmatpush1.bf16.msra.mxu0 %v924
        %930 = vmatprep.subr.bf16.mxu0 0
        %931 = vmatpush1.bf16.msra.mxu0 %v925
        %932 = vmatprep.subr.bf16.mxu0 0
        %933 = vmatpush1.bf16.msra.mxu0 0
        %934 = vmatprep.subr.bf16.mxu0 0
        %935 = vmatpush1.bf16.msra.mxu0 0
        %936 = vmatprep.subr.bf16.mxu0 0
        %937 = vmatpush1.bf16.msra.mxu0 0
        %938 = vmatprep.subr.bf16.mxu0 0
        %939 = vmatpush1.bf16.msra.mxu0 0
        %940 = vmatprep.subr.bf16.mxu0 0
        %941 = vmatpush1.bf16.msra.mxu0 0
        %942 = vmatprep.subr.bf16.mxu0 0
        %943 = vmatpush1.bf16.msra.mxu0 0
        %944 = vmatprep.subr.bf16.mxu0 0
        %945 = vmatpush1.bf16.msra.mxu0 0
        %946 = vmatprep.subr.bf16.mxu0 0
        %947 = vmatpush1.bf16.msra.mxu0 0
        %948 = vmatprep.subr.bf16.mxu0 0
        %949 = vmatpush1.bf16.msra.mxu0 0
        %950 = vmatprep.subr.bf16.mxu0 0
        %951 = vmatpush1.bf16.msra.mxu0 0
        %952 = vmatprep.subr.bf16.mxu0 0
        %953 = vmatpush1.bf16.msra.mxu0 0
        %954 = vmatprep.subr.bf16.mxu0 0
        %955 = vmatpush1.bf16.msra.mxu0 0
        %956 = vmatprep.subr.bf16.mxu0 0
        %957 = vmatpush1.bf16.msra.mxu0 0
        %958 = vmatprep.subr.bf16.mxu0 0
        %959 = vmatpush1.bf16.msra.mxu0 0
        %960 = vmatprep.mubr.bf16.mxu0 0
        %961 = vmatmul.mubr.bf16.gmra.mrb[0].mxu0 %v546
        %v962 = vpop.f32.mrb[0].mxu0
        %v963 = vadd.f32 0.0, %v962
        %v964 = vpop.f32.mrb[0].mxu0
        %v965 = vpop.f32.mrb[0].mxu0
        %v966 = vpop.f32.mrb[0].mxu0
        %967 = vdwg.mxu0
        %v968 = vld [vmem:[%s5] sm:$0xf]
        %v969 = vld [vmem:[%s5 + $0x4] sm:$0xf]
        %v970 = vld [vmem:[%s5 + $0x8] sm:$0xf]
        %v971 = vld [vmem:[%s5 + $0xc] sm:$0xf]
        %v972 = vld [vmem:[%s5 + $0x10] sm:$0xf]
        %v973 = vld [vmem:[%s5 + $0x14] sm:$0xf]
        %v974 = vld [vmem:[%s5 + $0x18] sm:$0xf]
        %v975 = vld [vmem:[%s5 + $0x1c] sm:$0xf]
        %v976 = vld [vmem:[%s5 + $0x20] sm:$0xf]
        %v977 = vld [vmem:[%s5 + $0x24] sm:$0xf]
        %v978 = vld [vmem:[%s5 + $0x28] sm:$0xf]
        %v979 = vld [vmem:[%s5 + $0x2c] sm:$0xf]
        %v980 = vld [vmem:[%s5 + $0x30] sm:$0xf]
        %v981 = vld [vmem:[%s5 + $0x34] sm:$0xf]
        %v982 = vld [vmem:[%s5 + $0x38] sm:$0xf]
        %v983 = vld [vmem:[%s5 + $0x3c] sm:$0xf]
        %v988 = vunpack.c.l.b16 %v968
        %v989 = vunpack.c.l.b16 %v969
        %v990 = vunpack.c.l.b16 %v970
        %v991 = vunpack.c.l.b16 %v971
        %v992 = vpack.c.b16 %v989, %v988
        %v993 = vpack.c.b16 %v991, %v990
        %996 = vmatprep.subr.bf16.mxu0 0
        %997 = vmatpush1.bf16.msra.mxu0 %v992
        %998 = vmatprep.subr.bf16.mxu0 0
        %999 = vmatpush1.bf16.msra.mxu0 %v993
        %1000 = vmatprep.subr.bf16.mxu0 0
        %1001 = vmatpush1.bf16.msra.mxu0 0
        %1002 = vmatprep.subr.bf16.mxu0 0
        %1003 = vmatpush1.bf16.msra.mxu0 0
        %1004 = vmatprep.subr.bf16.mxu0 0
        %1005 = vmatpush1.bf16.msra.mxu0 0
        %1006 = vmatprep.subr.bf16.mxu0 0
        %1007 = vmatpush1.bf16.msra.mxu0 0
        %1008 = vmatprep.subr.bf16.mxu0 0
        %1009 = vmatpush1.bf16.msra.mxu0 0
        %1010 = vmatprep.subr.bf16.mxu0 0
        %1011 = vmatpush1.bf16.msra.mxu0 0
        %1012 = vmatprep.subr.bf16.mxu0 0
        %1013 = vmatpush1.bf16.msra.mxu0 0
        %1014 = vmatprep.subr.bf16.mxu0 0
        %1015 = vmatpush1.bf16.msra.mxu0 0
        %1016 = vmatprep.subr.bf16.mxu0 0
        %1017 = vmatpush1.bf16.msra.mxu0 0
        %1018 = vmatprep.subr.bf16.mxu0 0
        %1019 = vmatpush1.bf16.msra.mxu0 0
        %1020 = vmatprep.subr.bf16.mxu0 0
        %1021 = vmatpush1.bf16.msra.mxu0 0
        %1022 = vmatprep.subr.bf16.mxu0 0
        %1023 = vmatpush1.bf16.msra.mxu0 0
        %1024 = vmatprep.subr.bf16.mxu0 0
        %1025 = vmatpush1.bf16.msra.mxu0 0
        %1026 = vmatprep.subr.bf16.mxu0 0
        %1027 = vmatpush1.bf16.msra.mxu0 0
        %1028 = vmatprep.mubr.bf16.mxu0 0
        %1029 = vmatmul.mubr.bf16.gmra.mrb[0].mxu0 %v546
        %v1030 = vpop.f32.mrb[0].mxu0
        %v1031 = vadd.f32 0.0, %v1030
        %v1032 = vpop.f32.mrb[0].mxu0
        %v1033 = vpop.f32.mrb[0].mxu0
        %v1034 = vpop.f32.mrb[0].mxu0
        %1035 = vdwg.mxu0
        %v1040 = vunpack.c.l.b16 %v972
        %v1041 = vunpack.c.l.b16 %v973
        %v1042 = vunpack.c.l.b16 %v974
        %v1043 = vunpack.c.l.b16 %v975
        %v1044 = vpack.c.b16 %v1041, %v1040
        %v1045 = vpack.c.b16 %v1043, %v1042
        %1048 = vmatprep.subr.bf16.mxu0 0
        %1049 = vmatpush1.bf16.msra.mxu0 %v1044
        %1050 = vmatprep.subr.bf16.mxu0 0
        %1051 = vmatpush1.bf16.msra.mxu0 %v1045
        %1052 = vmatprep.subr.bf16.mxu0 0
        %1053 = vmatpush1.bf16.msra.mxu0 0
        %1054 = vmatprep.subr.bf16.mxu0 0
        %1055 = vmatpush1.bf16.msra.mxu0 0
        %1056 = vmatprep.subr.bf16.mxu0 0
        %1057 = vmatpush1.bf16.msra.mxu0 0
        %1058 = vmatprep.subr.bf16.mxu0 0
        %1059 = vmatpush1.bf16.msra.mxu0 0
        %1060 = vmatprep.subr.bf16.mxu0 0
        %1061 = vmatpush1.bf16.msra.mxu0 0
        %1062 = vmatprep.subr.bf16.mxu0 0
        %1063 = vmatpush1.bf16.msra.mxu0 0
        %1064 = vmatprep.subr.bf16.mxu0 0
        %1065 = vmatpush1.bf16.msra.mxu0 0
        %1066 = vmatprep.subr.bf16.mxu0 0
        %1067 = vmatpush1.bf16.msra.mxu0 0
        %1068 = vmatprep.subr.bf16.mxu0 0
        %1069 = vmatpush1.bf16.msra.mxu0 0
        %1070 = vmatprep.subr.bf16.mxu0 0
        %1071 = vmatpush1.bf16.msra.mxu0 0
        %1072 = vmatprep.subr.bf16.mxu0 0
        %1073 = vmatpush1.bf16.msra.mxu0 0
        %1074 = vmatprep.subr.bf16.mxu0 0
        %1075 = vmatpush1.bf16.msra.mxu0 0
        %1076 = vmatprep.subr.bf16.mxu0 0
        %1077 = vmatpush1.bf16.msra.mxu0 0
        %1078 = vmatprep.subr.bf16.mxu0 0
        %1079 = vmatpush1.bf16.msra.mxu0 0
        %1080 = vmatprep.mubr.bf16.mxu0 0
        %1081 = vmatmul.mubr.bf16.gmra.mrb[0].mxu0 %v546
        %v1082 = vpop.f32.mrb[0].mxu0
        %v1083 = vadd.f32 0.0, %v1082
        %v1084 = vpop.f32.mrb[0].mxu0
        %v1085 = vpop.f32.mrb[0].mxu0
        %v1086 = vpop.f32.mrb[0].mxu0
        %1087 = vdwg.mxu0
        %v1092 = vunpack.c.l.b16 %v976
        %v1093 = vunpack.c.l.b16 %v977
        %v1094 = vunpack.c.l.b16 %v978
        %v1095 = vunpack.c.l.b16 %v979
        %v1096 = vpack.c.b16 %v1093, %v1092
        %v1097 = vpack.c.b16 %v1095, %v1094
        %1100 = vmatprep.subr.bf16.mxu0 0
        %1101 = vmatpush1.bf16.msra.mxu0 %v1096
        %1102 = vmatprep.subr.bf16.mxu0 0
        %1103 = vmatpush1.bf16.msra.mxu0 %v1097
        %1104 = vmatprep.subr.bf16.mxu0 0
        %1105 = vmatpush1.bf16.msra.mxu0 0
        %1106 = vmatprep.subr.bf16.mxu0 0
        %1107 = vmatpush1.bf16.msra.mxu0 0
        %1108 = vmatprep.subr.bf16.mxu0 0
        %1109 = vmatpush1.bf16.msra.mxu0 0
        %1110 = vmatprep.subr.bf16.mxu0 0
        %1111 = vmatpush1.bf16.msra.mxu0 0
        %1112 = vmatprep.subr.bf16.mxu0 0
        %1113 = vmatpush1.bf16.msra.mxu0 0
        %1114 = vmatprep.subr.bf16.mxu0 0
        %1115 = vmatpush1.bf16.msra.mxu0 0
        %1116 = vmatprep.subr.bf16.mxu0 0
        %1117 = vmatpush1.bf16.msra.mxu0 0
        %1118 = vmatprep.subr.bf16.mxu0 0
        %1119 = vmatpush1.bf16.msra.mxu0 0
        %1120 = vmatprep.subr.bf16.mxu0 0
        %1121 = vmatpush1.bf16.msra.mxu0 0
        %1122 = vmatprep.subr.bf16.mxu0 0
        %1123 = vmatpush1.bf16.msra.mxu0 0
        %1124 = vmatprep.subr.bf16.mxu0 0
        %1125 = vmatpush1.bf16.msra.mxu0 0
        %1126 = vmatprep.subr.bf16.mxu0 0
        %1127 = vmatpush1.bf16.msra.mxu0 0
        %1128 = vmatprep.subr.bf16.mxu0 0
        %1129 = vmatpush1.bf16.msra.mxu0 0
        %1130 = vmatprep.subr.bf16.mxu0 0
        %1131 = vmatpush1.bf16.msra.mxu0 0
        %1132 = vmatprep.mubr.bf16.mxu0 0
        %1133 = vmatmul.mubr.bf16.gmra.mrb[0].mxu0 %v546
        %v1134 = vpop.f32.mrb[0].mxu0
        %v1135 = vadd.f32 0.0, %v1134
        %v1136 = vpop.f32.mrb[0].mxu0
        %v1137 = vpop.f32.mrb[0].mxu0
        %v1138 = vpop.f32.mrb[0].mxu0
        %1139 = vdwg.mxu0
        %v1144 = vunpack.c.l.b16 %v980
        %v1145 = vunpack.c.l.b16 %v981
        %v1146 = vunpack.c.l.b16 %v982
        %v1147 = vunpack.c.l.b16 %v983
        %v1148 = vpack.c.b16 %v1145, %v1144
        %v1149 = vpack.c.b16 %v1147, %v1146
        %1152 = vmatprep.subr.bf16.mxu0 0
        %1153 = vmatpush1.bf16.msra.mxu0 %v1148
        %1154 = vmatprep.subr.bf16.mxu0 0
        %1155 = vmatpush1.bf16.msra.mxu0 %v1149
        %1156 = vmatprep.subr.bf16.mxu0 0
        %1157 = vmatpush1.bf16.msra.mxu0 0
        %1158 = vmatprep.subr.bf16.mxu0 0
        %1159 = vmatpush1.bf16.msra.mxu0 0
        %1160 = vmatprep.subr.bf16.mxu0 0
        %1161 = vmatpush1.bf16.msra.mxu0 0
        %1162 = vmatprep.subr.bf16.mxu0 0
        %1163 = vmatpush1.bf16.msra.mxu0 0
        %1164 = vmatprep.subr.bf16.mxu0 0
        %1165 = vmatpush1.bf16.msra.mxu0 0
        %1166 = vmatprep.subr.bf16.mxu0 0
        %1167 = vmatpush1.bf16.msra.mxu0 0
        %1168 = vmatprep.subr.bf16.mxu0 0
        %1169 = vmatpush1.bf16.msra.mxu0 0
        %1170 = vmatprep.subr.bf16.mxu0 0
        %1171 = vmatpush1.bf16.msra.mxu0 0
        %1172 = vmatprep.subr.bf16.mxu0 0
        %1173 = vmatpush1.bf16.msra.mxu0 0
        %1174 = vmatprep.subr.bf16.mxu0 0
        %1175 = vmatpush1.bf16.msra.mxu0 0
        %1176 = vmatprep.subr.bf16.mxu0 0
        %1177 = vmatpush1.bf16.msra.mxu0 0
        %1178 = vmatprep.subr.bf16.mxu0 0
        %1179 = vmatpush1.bf16.msra.mxu0 0
        %1180 = vmatprep.subr.bf16.mxu0 0
        %1181 = vmatpush1.bf16.msra.mxu0 0
        %1182 = vmatprep.subr.bf16.mxu0 0
        %1183 = vmatpush1.bf16.msra.mxu0 0
        %1184 = vmatprep.mubr.bf16.mxu0 0
        %1185 = vmatmul.mubr.bf16.gmra.mrb[0].mxu0 %v546
        %v1186 = vpop.f32.mrb[0].mxu0
        %v1187 = vadd.f32 0.0, %v1186
        %v1188 = vpop.f32.mrb[0].mxu0
        %v1189 = vpop.f32.mrb[0].mxu0
        %v1190 = vpop.f32.mrb[0].mxu0
        %1191 = vdwg.mxu0
        %v1192 = vpack.c.bf16 %v583, %v583
        %v1193 = vpack.c.bf16 %v635, %v635
        %v1194 = vpack.c.bf16 %v687, %v687
        %v1195 = vpack.c.bf16 %v739, %v739
        %v1196 = vpack.c.bf16 %v807, %v807
        %v1197 = vpack.c.bf16 %v859, %v859
        %v1198 = vpack.c.bf16 %v911, %v911
        %v1199 = vpack.c.bf16 %v963, %v963
        %vm1200 = vcmask 64512
        %v1202 = vsel %vm1200, %v1192, 0
        %v1205 = vsel %vm1200, %v1196, 0
        %1207 = vmatprep.subr.bf16.mxu0 0
        %1208 = vmatpush1.bf16.xpose.msra.mxu0 %v1205
        %1209 = vmatprep.subr.bf16.mxu0 0
        %1210 = vmatpush1.bf16.xpose.msra.mxu0 0
        %1211 = vmatprep.subr.bf16.mxu0 0
        %1212 = vmatpush1.bf16.xpose.msra.mxu0 0
        %1213 = vmatprep.subr.bf16.mxu0 0
        %1214 = vmatpush1.bf16.xpose.msra.mxu0 0
        %1215 = vmatprep.subr.bf16.mxu0 0
        %1216 = vmatpush1.bf16.xpose.msra.mxu0 0
        %1217 = vmatprep.subr.bf16.mxu0 0
        %1218 = vmatpush1.bf16.xpose.msra.mxu0 0
        %1219 = vmatprep.subr.bf16.mxu0 0
        %1220 = vmatpush1.bf16.xpose.msra.mxu0 0
        %1221 = vmatprep.subr.bf16.mxu0 0
        %1222 = vmatpush1.bf16.xpose.msra.mxu0 0
        %1223 = vmatprep.subr.bf16.mxu0 0
        %1224 = vmatpush1.bf16.xpose.msra.mxu0 0
        %1225 = vmatprep.subr.bf16.mxu0 0
        %1226 = vmatpush1.bf16.xpose.msra.mxu0 0
        %1227 = vmatprep.subr.bf16.mxu0 0
        %1228 = vmatpush1.bf16.xpose.msra.mxu0 0
        %1229 = vmatprep.subr.bf16.mxu0 0
        %1230 = vmatpush1.bf16.xpose.msra.mxu0 0
        %1231 = vmatprep.subr.bf16.mxu0 0
        %1232 = vmatpush1.bf16.xpose.msra.mxu0 0
        %1233 = vmatprep.subr.bf16.mxu0 0
        %1234 = vmatpush1.bf16.xpose.msra.mxu0 0
        %1235 = vmatprep.subr.bf16.mxu0 0
        %1236 = vmatpush1.bf16.xpose.msra.mxu0 0
        %1237 = vmatprep.subr.bf16.mxu0 0
        %1238 = vmatpush1.bf16.xpose.msra.mxu0 0
        %1239 = vmatprep.mubr.bf16.mxu0 0
        %1240 = vmatmul.mubr.bf16.gmra.mrb[0].mxu0 %v1202
        %v1241 = vpop.f32.mrb[0].mxu0
        %v1242 = vadd.f32 0.0, %v1241
        %v1243 = vpop.f32.mrb[0].mxu0
        %v1244 = vpop.f32.mrb[0].mxu0
        %v1245 = vpop.f32.mrb[0].mxu0
        %1246 = vdwg.mxu0
        %v1248 = vsel %vm1200, %v1193, 0
        %v1251 = vsel %vm1200, %v1197, 0
        %1253 = vmatprep.subr.bf16.mxu0 0
        %1254 = vmatpush1.bf16.xpose.msra.mxu0 %v1251
        %1255 = vmatprep.subr.bf16.mxu0 0
        %1256 = vmatpush1.bf16.xpose.msra.mxu0 0
        %1257 = vmatprep.subr.bf16.mxu0 0
        %1258 = vmatpush1.bf16.xpose.msra.mxu0 0
        %1259 = vmatprep.subr.bf16.mxu0 0
        %1260 = vmatpush1.bf16.xpose.msra.mxu0 0
        %1261 = vmatprep.subr.bf16.mxu0 0
        %1262 = vmatpush1.bf16.xpose.msra.mxu0 0
        %1263 = vmatprep.subr.bf16.mxu0 0
        %1264 = vmatpush1.bf16.xpose.msra.mxu0 0
        %1265 = vmatprep.subr.bf16.mxu0 0
        %1266 = vmatpush1.bf16.xpose.msra.mxu0 0
        %1267 = vmatprep.subr.bf16.mxu0 0
        %1268 = vmatpush1.bf16.xpose.msra.mxu0 0
        %1269 = vmatprep.subr.bf16.mxu0 0
        %1270 = vmatpush1.bf16.xpose.msra.mxu0 0
        %1271 = vmatprep.subr.bf16.mxu0 0
        %1272 = vmatpush1.bf16.xpose.msra.mxu0 0
        %1273 = vmatprep.subr.bf16.mxu0 0
        %1274 = vmatpush1.bf16.xpose.msra.mxu0 0
        %1275 = vmatprep.subr.bf16.mxu0 0
        %1276 = vmatpush1.bf16.xpose.msra.mxu0 0
        %1277 = vmatprep.subr.bf16.mxu0 0
        %1278 = vmatpush1.bf16.xpose.msra.mxu0 0
        %1279 = vmatprep.subr.bf16.mxu0 0
        %1280 = vmatpush1.bf16.xpose.msra.mxu0 0
        %1281 = vmatprep.subr.bf16.mxu0 0
        %1282 = vmatpush1.bf16.xpose.msra.mxu0 0
        %1283 = vmatprep.subr.bf16.mxu0 0
        %1284 = vmatpush1.bf16.xpose.msra.mxu0 0
        %1285 = vmatprep.mubr.bf16.mxu0 0
        %1286 = vmatmul.mubr.bf16.gmra.mrb[0].mxu0 %v1248
        %v1287 = vpop.f32.mrb[0].mxu0
        %v1288 = vadd.f32 0.0, %v1287
        %v1289 = vpop.f32.mrb[0].mxu0
        %v1290 = vpop.f32.mrb[0].mxu0
        %v1291 = vpop.f32.mrb[0].mxu0
        %1292 = vdwg.mxu0
        %v1294 = vsel %vm1200, %v1194, 0
        %v1297 = vsel %vm1200, %v1198, 0
        %1299 = vmatprep.subr.bf16.mxu0 0
        %1300 = vmatpush1.bf16.xpose.msra.mxu0 %v1297
        %1301 = vmatprep.subr.bf16.mxu0 0
        %1302 = vmatpush1.bf16.xpose.msra.mxu0 0
        %1303 = vmatprep.subr.bf16.mxu0 0
        %1304 = vmatpush1.bf16.xpose.msra.mxu0 0
        %1305 = vmatprep.subr.bf16.mxu0 0
        %1306 = vmatpush1.bf16.xpose.msra.mxu0 0
        %1307 = vmatprep.subr.bf16.mxu0 0
        %1308 = vmatpush1.bf16.xpose.msra.mxu0 0
        %1309 = vmatprep.subr.bf16.mxu0 0
        %1310 = vmatpush1.bf16.xpose.msra.mxu0 0
        %1311 = vmatprep.subr.bf16.mxu0 0
        %1312 = vmatpush1.bf16.xpose.msra.mxu0 0
        %1313 = vmatprep.subr.bf16.mxu0 0
        %1314 = vmatpush1.bf16.xpose.msra.mxu0 0
        %1315 = vmatprep.subr.bf16.mxu0 0
        %1316 = vmatpush1.bf16.xpose.msra.mxu0 0
        %1317 = vmatprep.subr.bf16.mxu0 0
        %1318 = vmatpush1.bf16.xpose.msra.mxu0 0
        %1319 = vmatprep.subr.bf16.mxu0 0
        %1320 = vmatpush1.bf16.xpose.msra.mxu0 0
        %1321 = vmatprep.subr.bf16.mxu0 0
        %1322 = vmatpush1.bf16.xpose.msra.mxu0 0
        %1323 = vmatprep.subr.bf16.mxu0 0
        %1324 = vmatpush1.bf16.xpose.msra.mxu0 0
        %1325 = vmatprep.subr.bf16.mxu0 0
        %1326 = vmatpush1.bf16.xpose.msra.mxu0 0
        %1327 = vmatprep.subr.bf16.mxu0 0
        %1328 = vmatpush1.bf16.xpose.msra.mxu0 0
        %1329 = vmatprep.subr.bf16.mxu0 0
        %1330 = vmatpush1.bf16.xpose.msra.mxu0 0
        %1331 = vmatprep.mubr.bf16.mxu0 0
        %1332 = vmatmul.mubr.bf16.gmra.mrb[0].mxu0 %v1294
        %v1333 = vpop.f32.mrb[0].mxu0
        %v1334 = vadd.f32 0.0, %v1333
        %v1335 = vpop.f32.mrb[0].mxu0
        %v1336 = vpop.f32.mrb[0].mxu0
        %v1337 = vpop.f32.mrb[0].mxu0
        %1338 = vdwg.mxu0
        %v1340 = vsel %vm1200, %v1195, 0
        %v1343 = vsel %vm1200, %v1199, 0
        %1345 = vmatprep.subr.bf16.mxu0 0
        %1346 = vmatpush1.bf16.xpose.msra.mxu0 %v1343
        %1347 = vmatprep.subr.bf16.mxu0 0
        %1348 = vmatpush1.bf16.xpose.msra.mxu0 0
        %1349 = vmatprep.subr.bf16.mxu0 0
        %1350 = vmatpush1.bf16.xpose.msra.mxu0 0
        %1351 = vmatprep.subr.bf16.mxu0 0
        %1352 = vmatpush1.bf16.xpose.msra.mxu0 0
        %1353 = vmatprep.subr.bf16.mxu0 0
        %1354 = vmatpush1.bf16.xpose.msra.mxu0 0
        %1355 = vmatprep.subr.bf16.mxu0 0
        %1356 = vmatpush1.bf16.xpose.msra.mxu0 0
        %1357 = vmatprep.subr.bf16.mxu0 0
        %1358 = vmatpush1.bf16.xpose.msra.mxu0 0
        %1359 = vmatprep.subr.bf16.mxu0 0
        %1360 = vmatpush1.bf16.xpose.msra.mxu0 0
        %1361 = vmatprep.subr.bf16.mxu0 0
        %1362 = vmatpush1.bf16.xpose.msra.mxu0 0
        %1363 = vmatprep.subr.bf16.mxu0 0
        %1364 = vmatpush1.bf16.xpose.msra.mxu0 0
        %1365 = vmatprep.subr.bf16.mxu0 0
        %1366 = vmatpush1.bf16.xpose.msra.mxu0 0
        %1367 = vmatprep.subr.bf16.mxu0 0
        %1368 = vmatpush1.bf16.xpose.msra.mxu0 0
        %1369 = vmatprep.subr.bf16.mxu0 0
        %1370 = vmatpush1.bf16.xpose.msra.mxu0 0
        %1371 = vmatprep.subr.bf16.mxu0 0
        %1372 = vmatpush1.bf16.xpose.msra.mxu0 0
        %1373 = vmatprep.subr.bf16.mxu0 0
        %1374 = vmatpush1.bf16.xpose.msra.mxu0 0
        %1375 = vmatprep.subr.bf16.mxu0 0
        %1376 = vmatpush1.bf16.xpose.msra.mxu0 0
        %1377 = vmatprep.mubr.bf16.mxu0 0
        %1378 = vmatmul.mubr.bf16.gmra.mrb[0].mxu0 %v1340
        %v1379 = vpop.f32.mrb[0].mxu0
        %v1380 = vadd.f32 0.0, %v1379
        %v1381 = vpop.f32.mrb[0].mxu0
        %v1382 = vpop.f32.mrb[0].mxu0
        %v1383 = vpop.f32.mrb[0].mxu0
        %1384 = vdwg.mxu0
        %v1385 = vsel %vm1200, %v1242, -inf
        %1386 = vmax.xlane.f32.xlu0 %v1385
        %v1387 = vpop.xlane.xlu0 %1386
        %v1388 = vsel %vm1200, %v1288, -inf
        %1389 = vmax.xlane.f32.xlu0 %v1388
        %v1390 = vpop.xlane.xlu0 %1389
        %v1391 = vsel %vm1200, %v1334, -inf
        %1392 = vmax.xlane.f32.xlu0 %v1391
        %v1393 = vpop.xlane.xlu0 %1392
        %v1394 = vsel %vm1200, %v1380, -inf
        %1395 = vmax.xlane.f32.xlu0 %v1394
        %v1396 = vpop.xlane.xlu0 %1395
        %v1397 = vsub.f32 %v1242, %v1387
        %v1398 = vsub.f32 %v1288, %v1390
        %v1399 = vsub.f32 %v1334, %v1393
        %v1400 = vsub.f32 %v1380, %v1396
        %v1401 = vmul.f32 %v1397, 1.442695
        %v1402 = vpow.pop %v1401
        %v1403 = vmul.f32 %v1398, 1.442695
        %v1404 = vpow.pop %v1403
        %v1405 = vmul.f32 %v1399, 1.442695
        %v1406 = vpow.pop %v1405
        %v1407 = vmul.f32 %v1400, 1.442695
        %v1408 = vpow.pop %v1407
        %v1409 = vsel %vm1200, %v1402, 0.0
        %1410 = vadd.xlane.f32.xlu0 %v1409
        %v1411 = vpop.xlane.xlu0 %1410
        %v1412 = vsel %vm1200, %v1404, 0.0
        %1413 = vadd.xlane.f32.xlu0 %v1412
        %v1414 = vpop.xlane.xlu0 %1413
        %v1415 = vsel %vm1200, %v1406, 0.0
        %1416 = vadd.xlane.f32.xlu0 %v1415
        %v1417 = vpop.xlane.xlu0 %1416
        %v1418 = vsel %vm1200, %v1408, 0.0
        %1419 = vadd.xlane.f32.xlu0 %v1418
        %v1420 = vpop.xlane.xlu0 %1419
        %v1421 = vrcp.pop %v1411
        %v1422 = vmul.f32 %v1402, %v1421
        %v1423 = vrcp.pop %v1414
        %v1424 = vmul.f32 %v1404, %v1423
        %v1425 = vrcp.pop %v1417
        %v1426 = vmul.f32 %v1406, %v1425
        %v1427 = vrcp.pop %v1420
        %v1428 = vmul.f32 %v1408, %v1427
        %v1429 = vpack.c.bf16 %v1422, %v1422
        %v1430 = vpack.c.bf16 %v1424, %v1424
        %v1431 = vpack.c.bf16 %v1426, %v1426
        %v1432 = vpack.c.bf16 %v1428, %v1428
        %v1433 = vpack.c.bf16 %v1031, %v1031
        %v1434 = vpack.c.bf16 %v1083, %v1083
        %v1435 = vpack.c.bf16 %v1135, %v1135
        %v1436 = vpack.c.bf16 %v1187, %v1187
        %v1438 = vsel %vm1200, %v1429, 0
        %vm1440 = vcmask 1043456
        %v1442 = vsel %vm1440, %v1433, 0
        %1444 = vmatprep.subr.bf16.mxu0 0
        %1445 = vmatpush1.bf16.msra.mxu0 %v1442
        %1446 = vmatprep.subr.bf16.mxu0 0
        %1447 = vmatpush1.bf16.msra.mxu0 0
        %1448 = vmatprep.subr.bf16.mxu0 0
        %1449 = vmatpush1.bf16.msra.mxu0 0
        %1450 = vmatprep.subr.bf16.mxu0 0
        %1451 = vmatpush1.bf16.msra.mxu0 0
        %1452 = vmatprep.subr.bf16.mxu0 0
        %1453 = vmatpush1.bf16.msra.mxu0 0
        %1454 = vmatprep.subr.bf16.mxu0 0
        %1455 = vmatpush1.bf16.msra.mxu0 0
        %1456 = vmatprep.subr.bf16.mxu0 0
        %1457 = vmatpush1.bf16.msra.mxu0 0
        %1458 = vmatprep.subr.bf16.mxu0 0
        %1459 = vmatpush1.bf16.msra.mxu0 0
        %1460 = vmatprep.subr.bf16.mxu0 0
        %1461 = vmatpush1.bf16.msra.mxu0 0
        %1462 = vmatprep.subr.bf16.mxu0 0
        %1463 = vmatpush1.bf16.msra.mxu0 0
        %1464 = vmatprep.subr.bf16.mxu0 0
        %1465 = vmatpush1.bf16.msra.mxu0 0
        %1466 = vmatprep.subr.bf16.mxu0 0
        %1467 = vmatpush1.bf16.msra.mxu0 0
        %1468 = vmatprep.subr.bf16.mxu0 0
        %1469 = vmatpush1.bf16.msra.mxu0 0
        %1470 = vmatprep.subr.bf16.mxu0 0
        %1471 = vmatpush1.bf16.msra.mxu0 0
        %1472 = vmatprep.subr.bf16.mxu0 0
        %1473 = vmatpush1.bf16.msra.mxu0 0
        %1474 = vmatprep.subr.bf16.mxu0 0
        %1475 = vmatpush1.bf16.msra.mxu0 0
        %1476 = vmatprep.mubr.bf16.mxu0 0
        %1477 = vmatmul.mubr.bf16.gmra.mrb[0].mxu0 %v1438
        %v1478 = vpop.f32.mrb[0].mxu0
        %v1479 = vadd.f32 0.0, %v1478
        %v1480 = vpop.f32.mrb[0].mxu0
        %v1481 = vpop.f32.mrb[0].mxu0
        %v1482 = vpop.f32.mrb[0].mxu0
        %1483 = vdwg.mxu0
        %v1485 = vsel %vm1200, %v1430, 0
        %v1488 = vsel %vm1440, %v1434, 0
        %1490 = vmatprep.subr.bf16.mxu0 0
        %1491 = vmatpush1.bf16.msra.mxu0 %v1488
        %1492 = vmatprep.subr.bf16.mxu0 0
        %1493 = vmatpush1.bf16.msra.mxu0 0
        %1494 = vmatprep.subr.bf16.mxu0 0
        %1495 = vmatpush1.bf16.msra.mxu0 0
        %1496 = vmatprep.subr.bf16.mxu0 0
        %1497 = vmatpush1.bf16.msra.mxu0 0
        %1498 = vmatprep.subr.bf16.mxu0 0
        %1499 = vmatpush1.bf16.msra.mxu0 0
        %1500 = vmatprep.subr.bf16.mxu0 0
        %1501 = vmatpush1.bf16.msra.mxu0 0
        %1502 = vmatprep.subr.bf16.mxu0 0
        %1503 = vmatpush1.bf16.msra.mxu0 0
        %1504 = vmatprep.subr.bf16.mxu0 0
        %1505 = vmatpush1.bf16.msra.mxu0 0
        %1506 = vmatprep.subr.bf16.mxu0 0
        %1507 = vmatpush1.bf16.msra.mxu0 0
        %1508 = vmatprep.subr.bf16.mxu0 0
        %1509 = vmatpush1.bf16.msra.mxu0 0
        %1510 = vmatprep.subr.bf16.mxu0 0
        %1511 = vmatpush1.bf16.msra.mxu0 0
        %1512 = vmatprep.subr.bf16.mxu0 0
        %1513 = vmatpush1.bf16.msra.mxu0 0
        %1514 = vmatprep.subr.bf16.mxu0 0
        %1515 = vmatpush1.bf16.msra.mxu0 0
        %1516 = vmatprep.subr.bf16.mxu0 0
        %1517 = vmatpush1.bf16.msra.mxu0 0
        %1518 = vmatprep.subr.bf16.mxu0 0
        %1519 = vmatpush1.bf16.msra.mxu0 0
        %1520 = vmatprep.subr.bf16.mxu0 0
        %1521 = vmatpush1.bf16.msra.mxu0 0
        %1522 = vmatprep.mubr.bf16.mxu0 0
        %1523 = vmatmul.mubr.bf16.gmra.mrb[0].mxu0 %v1485
        %v1524 = vpop.f32.mrb[0].mxu0
        %v1525 = vadd.f32 0.0, %v1524
        %v1526 = vpop.f32.mrb[0].mxu0
        %v1527 = vpop.f32.mrb[0].mxu0
        %v1528 = vpop.f32.mrb[0].mxu0
        %1529 = vdwg.mxu0
        %v1531 = vsel %vm1200, %v1431, 0
        %v1534 = vsel %vm1440, %v1435, 0
        %1536 = vmatprep.subr.bf16.mxu0 0
        %1537 = vmatpush1.bf16.msra.mxu0 %v1534
        %1538 = vmatprep.subr.bf16.mxu0 0
        %1539 = vmatpush1.bf16.msra.mxu0 0
        %1540 = vmatprep.subr.bf16.mxu0 0
        %1541 = vmatpush1.bf16.msra.mxu0 0
        %1542 = vmatprep.subr.bf16.mxu0 0
        %1543 = vmatpush1.bf16.msra.mxu0 0
        %1544 = vmatprep.subr.bf16.mxu0 0
        %1545 = vmatpush1.bf16.msra.mxu0 0
        %1546 = vmatprep.subr.bf16.mxu0 0
        %1547 = vmatpush1.bf16.msra.mxu0 0
        %1548 = vmatprep.subr.bf16.mxu0 0
        %1549 = vmatpush1.bf16.msra.mxu0 0
        %1550 = vmatprep.subr.bf16.mxu0 0
        %1551 = vmatpush1.bf16.msra.mxu0 0
        %1552 = vmatprep.subr.bf16.mxu0 0
        %1553 = vmatpush1.bf16.msra.mxu0 0
        %1554 = vmatprep.subr.bf16.mxu0 0
        %1555 = vmatpush1.bf16.msra.mxu0 0
        %1556 = vmatprep.subr.bf16.mxu0 0
        %1557 = vmatpush1.bf16.msra.mxu0 0
        %1558 = vmatprep.subr.bf16.mxu0 0
        %1559 = vmatpush1.bf16.msra.mxu0 0
        %1560 = vmatprep.subr.bf16.mxu0 0
        %1561 = vmatpush1.bf16.msra.mxu0 0
        %1562 = vmatprep.subr.bf16.mxu0 0
        %1563 = vmatpush1.bf16.msra.mxu0 0
        %1564 = vmatprep.subr.bf16.mxu0 0
        %1565 = vmatpush1.bf16.msra.mxu0 0
        %1566 = vmatprep.subr.bf16.mxu0 0
        %1567 = vmatpush1.bf16.msra.mxu0 0
        %1568 = vmatprep.mubr.bf16.mxu0 0
        %1569 = vmatmul.mubr.bf16.gmra.mrb[0].mxu0 %v1531
        %v1570 = vpop.f32.mrb[0].mxu0
        %v1571 = vadd.f32 0.0, %v1570
        %v1572 = vpop.f32.mrb[0].mxu0
        %v1573 = vpop.f32.mrb[0].mxu0
        %v1574 = vpop.f32.mrb[0].mxu0
        %1575 = vdwg.mxu0
        %v1577 = vsel %vm1200, %v1432, 0
        %v1580 = vsel %vm1440, %v1436, 0
        %1582 = vmatprep.subr.bf16.mxu0 0
        %1583 = vmatpush1.bf16.msra.mxu0 %v1580
        %1584 = vmatprep.subr.bf16.mxu0 0
        %1585 = vmatpush1.bf16.msra.mxu0 0
        %1586 = vmatprep.subr.bf16.mxu0 0
        %1587 = vmatpush1.bf16.msra.mxu0 0
        %1588 = vmatprep.subr.bf16.mxu0 0
        %1589 = vmatpush1.bf16.msra.mxu0 0
        %1590 = vmatprep.subr.bf16.mxu0 0
        %1591 = vmatpush1.bf16.msra.mxu0 0
        %1592 = vmatprep.subr.bf16.mxu0 0
        %1593 = vmatpush1.bf16.msra.mxu0 0
        %1594 = vmatprep.subr.bf16.mxu0 0
        %1595 = vmatpush1.bf16.msra.mxu0 0
        %1596 = vmatprep.subr.bf16.mxu0 0
        %1597 = vmatpush1.bf16.msra.mxu0 0
        %1598 = vmatprep.subr.bf16.mxu0 0
        %1599 = vmatpush1.bf16.msra.mxu0 0
        %1600 = vmatprep.subr.bf16.mxu0 0
        %1601 = vmatpush1.bf16.msra.mxu0 0
        %1602 = vmatprep.subr.bf16.mxu0 0
        %1603 = vmatpush1.bf16.msra.mxu0 0
        %1604 = vmatprep.subr.bf16.mxu0 0
        %1605 = vmatpush1.bf16.msra.mxu0 0
        %1606 = vmatprep.subr.bf16.mxu0 0
        %1607 = vmatpush1.bf16.msra.mxu0 0
        %1608 = vmatprep.subr.bf16.mxu0 0
        %1609 = vmatpush1.bf16.msra.mxu0 0
        %1610 = vmatprep.subr.bf16.mxu0 0
        %1611 = vmatpush1.bf16.msra.mxu0 0
        %1612 = vmatprep.subr.bf16.mxu0 0
        %1613 = vmatpush1.bf16.msra.mxu0 0
        %1614 = vmatprep.mubr.bf16.mxu0 0
        %1615 = vmatmul.mubr.bf16.gmra.mrb[0].mxu0 %v1577
        %v1616 = vpop.f32.mrb[0].mxu0
        %v1617 = vadd.f32 0.0, %v1616
        %v1618 = vpop.f32.mrb[0].mxu0
        %v1619 = vpop.f32.mrb[0].mxu0
        %v1620 = vpop.f32.mrb[0].mxu0
        %1621 = vdwg.mxu0
        %v1622 = vpack.c.bf16 %v1479, %v1479
        %v1623 = vpack.c.bf16 %v1525, %v1525
        %v1624 = vpack.c.bf16 %v1571, %v1571
        %v1625 = vpack.c.bf16 %v1617, %v1617
        %v1626 = vld [vmem:[%s6] sm:$0xf]
        %v1627 = vld [vmem:[%s6 + $0x4] sm:$0xf]
        %v1628 = vld [vmem:[%s6 + $0x8] sm:$0xf]
        %v1629 = vld [vmem:[%s6 + $0xc] sm:$0xf]
        %v1631 = vsel %vm1200, %v1622, 0
        %v1634 = vsel %vm1440, %v1626, 0
        %1636 = vmatprep.subr.bf16.mxu0 0
        %1637 = vmatpush1.bf16.msra.mxu0 %v1634
        %1638 = vmatprep.subr.bf16.mxu0 0
        %1639 = vmatpush1.bf16.msra.mxu0 0
        %1640 = vmatprep.subr.bf16.mxu0 0
        %1641 = vmatpush1.bf16.msra.mxu0 0
        %1642 = vmatprep.subr.bf16.mxu0 0
        %1643 = vmatpush1.bf16.msra.mxu0 0
        %1644 = vmatprep.subr.bf16.mxu0 0
        %1645 = vmatpush1.bf16.msra.mxu0 0
        %1646 = vmatprep.subr.bf16.mxu0 0
        %1647 = vmatpush1.bf16.msra.mxu0 0
        %1648 = vmatprep.subr.bf16.mxu0 0
        %1649 = vmatpush1.bf16.msra.mxu0 0
        %1650 = vmatprep.subr.bf16.mxu0 0
        %1651 = vmatpush1.bf16.msra.mxu0 0
        %1652 = vmatprep.subr.bf16.mxu0 0
        %1653 = vmatpush1.bf16.msra.mxu0 0
        %1654 = vmatprep.subr.bf16.mxu0 0
        %1655 = vmatpush1.bf16.msra.mxu0 0
        %1656 = vmatprep.subr.bf16.mxu0 0
        %1657 = vmatpush1.bf16.msra.mxu0 0
        %1658 = vmatprep.subr.bf16.mxu0 0
        %1659 = vmatpush1.bf16.msra.mxu0 0
        %1660 = vmatprep.subr.bf16.mxu0 0
        %1661 = vmatpush1.bf16.msra.mxu0 0
        %1662 = vmatprep.subr.bf16.mxu0 0
        %1663 = vmatpush1.bf16.msra.mxu0 0
        %1664 = vmatprep.subr.bf16.mxu0 0
        %1665 = vmatpush1.bf16.msra.mxu0 0
        %1666 = vmatprep.subr.bf16.mxu0 0
        %1667 = vmatpush1.bf16.msra.mxu0 0
        %1668 = vmatprep.mubr.bf16.mxu0 0
        %1669 = vmatmul.mubr.bf16.gmra.mrb[0].mxu0 %v1631
        %v1670 = vpop.f32.mrb[0].mxu0
        %v1671 = vadd.f32 0.0, %v1670
        %v1672 = vpop.f32.mrb[0].mxu0
        %v1673 = vpop.f32.mrb[0].mxu0
        %v1674 = vpop.f32.mrb[0].mxu0
        %1675 = vdwg.mxu0
        %v1677 = vsel %vm1200, %v1623, 0
        %v1680 = vsel %vm1440, %v1627, 0
        %1682 = vmatprep.subr.bf16.mxu0 0
        %1683 = vmatpush1.bf16.msra.mxu0 %v1680
        %1684 = vmatprep.subr.bf16.mxu0 0
        %1685 = vmatpush1.bf16.msra.mxu0 0
        %1686 = vmatprep.subr.bf16.mxu0 0
        %1687 = vmatpush1.bf16.msra.mxu0 0
        %1688 = vmatprep.subr.bf16.mxu0 0
        %1689 = vmatpush1.bf16.msra.mxu0 0
        %1690 = vmatprep.subr.bf16.mxu0 0
        %1691 = vmatpush1.bf16.msra.mxu0 0
        %1692 = vmatprep.subr.bf16.mxu0 0
        %1693 = vmatpush1.bf16.msra.mxu0 0
        %1694 = vmatprep.subr.bf16.mxu0 0
        %1695 = vmatpush1.bf16.msra.mxu0 0
        %1696 = vmatprep.subr.bf16.mxu0 0
        %1697 = vmatpush1.bf16.msra.mxu0 0
        %1698 = vmatprep.subr.bf16.mxu0 0
        %1699 = vmatpush1.bf16.msra.mxu0 0
        %1700 = vmatprep.subr.bf16.mxu0 0
        %1701 = vmatpush1.bf16.msra.mxu0 0
        %1702 = vmatprep.subr.bf16.mxu0 0
        %1703 = vmatpush1.bf16.msra.mxu0 0
        %1704 = vmatprep.subr.bf16.mxu0 0
        %1705 = vmatpush1.bf16.msra.mxu0 0
        %1706 = vmatprep.subr.bf16.mxu0 0
        %1707 = vmatpush1.bf16.msra.mxu0 0
        %1708 = vmatprep.subr.bf16.mxu0 0
        %1709 = vmatpush1.bf16.msra.mxu0 0
        %1710 = vmatprep.subr.bf16.mxu0 0
        %1711 = vmatpush1.bf16.msra.mxu0 0
        %1712 = vmatprep.subr.bf16.mxu0 0
        %1713 = vmatpush1.bf16.msra.mxu0 0
        %1714 = vmatprep.mubr.bf16.mxu0 0
        %1715 = vmatmul.mubr.bf16.gmra.mrb[0].mxu0 %v1677
        %v1716 = vpop.f32.mrb[0].mxu0
        %v1717 = vadd.f32 0.0, %v1716
        %v1718 = vpop.f32.mrb[0].mxu0
        %v1719 = vpop.f32.mrb[0].mxu0
        %v1720 = vpop.f32.mrb[0].mxu0
        %1721 = vdwg.mxu0
        %v1723 = vsel %vm1200, %v1624, 0
        %v1726 = vsel %vm1440, %v1628, 0
        %1728 = vmatprep.subr.bf16.mxu0 0
        %1729 = vmatpush1.bf16.msra.mxu0 %v1726
        %1730 = vmatprep.subr.bf16.mxu0 0
        %1731 = vmatpush1.bf16.msra.mxu0 0
        %1732 = vmatprep.subr.bf16.mxu0 0
        %1733 = vmatpush1.bf16.msra.mxu0 0
        %1734 = vmatprep.subr.bf16.mxu0 0
        %1735 = vmatpush1.bf16.msra.mxu0 0
        %1736 = vmatprep.subr.bf16.mxu0 0
        %1737 = vmatpush1.bf16.msra.mxu0 0
        %1738 = vmatprep.subr.bf16.mxu0 0
        %1739 = vmatpush1.bf16.msra.mxu0 0
        %1740 = vmatprep.subr.bf16.mxu0 0
        %1741 = vmatpush1.bf16.msra.mxu0 0
        %1742 = vmatprep.subr.bf16.mxu0 0
        %1743 = vmatpush1.bf16.msra.mxu0 0
        %1744 = vmatprep.subr.bf16.mxu0 0
        %1745 = vmatpush1.bf16.msra.mxu0 0
        %1746 = vmatprep.subr.bf16.mxu0 0
        %1747 = vmatpush1.bf16.msra.mxu0 0
        %1748 = vmatprep.subr.bf16.mxu0 0
        %1749 = vmatpush1.bf16.msra.mxu0 0
        %1750 = vmatprep.subr.bf16.mxu0 0
        %1751 = vmatpush1.bf16.msra.mxu0 0
        %1752 = vmatprep.subr.bf16.mxu0 0
        %1753 = vmatpush1.bf16.msra.mxu0 0
        %1754 = vmatprep.subr.bf16.mxu0 0
        %1755 = vmatpush1.bf16.msra.mxu0 0
        %1756 = vmatprep.subr.bf16.mxu0 0
        %1757 = vmatpush1.bf16.msra.mxu0 0
        %1758 = vmatprep.subr.bf16.mxu0 0
        %1759 = vmatpush1.bf16.msra.mxu0 0
        %1760 = vmatprep.mubr.bf16.mxu0 0
        %1761 = vmatmul.mubr.bf16.gmra.mrb[0].mxu0 %v1723
        %v1762 = vpop.f32.mrb[0].mxu0
        %v1763 = vadd.f32 0.0, %v1762
        %v1764 = vpop.f32.mrb[0].mxu0
        %v1765 = vpop.f32.mrb[0].mxu0
        %v1766 = vpop.f32.mrb[0].mxu0
        %1767 = vdwg.mxu0
        %v1769 = vsel %vm1200, %v1625, 0
        %v1772 = vsel %vm1440, %v1629, 0
        %1774 = vmatprep.subr.bf16.mxu0 0
        %1775 = vmatpush1.bf16.msra.mxu0 %v1772
        %1776 = vmatprep.subr.bf16.mxu0 0
        %1777 = vmatpush1.bf16.msra.mxu0 0
        %1778 = vmatprep.subr.bf16.mxu0 0
        %1779 = vmatpush1.bf16.msra.mxu0 0
        %1780 = vmatprep.subr.bf16.mxu0 0
        %1781 = vmatpush1.bf16.msra.mxu0 0
        %1782 = vmatprep.subr.bf16.mxu0 0
        %1783 = vmatpush1.bf16.msra.mxu0 0
        %1784 = vmatprep.subr.bf16.mxu0 0
        %1785 = vmatpush1.bf16.msra.mxu0 0
        %1786 = vmatprep.subr.bf16.mxu0 0
        %1787 = vmatpush1.bf16.msra.mxu0 0
        %1788 = vmatprep.subr.bf16.mxu0 0
        %1789 = vmatpush1.bf16.msra.mxu0 0
        %1790 = vmatprep.subr.bf16.mxu0 0
        %1791 = vmatpush1.bf16.msra.mxu0 0
        %1792 = vmatprep.subr.bf16.mxu0 0
        %1793 = vmatpush1.bf16.msra.mxu0 0
        %1794 = vmatprep.subr.bf16.mxu0 0
        %1795 = vmatpush1.bf16.msra.mxu0 0
        %1796 = vmatprep.subr.bf16.mxu0 0
        %1797 = vmatpush1.bf16.msra.mxu0 0
        %1798 = vmatprep.subr.bf16.mxu0 0
        %1799 = vmatpush1.bf16.msra.mxu0 0
        %1800 = vmatprep.subr.bf16.mxu0 0
        %1801 = vmatpush1.bf16.msra.mxu0 0
        %1802 = vmatprep.subr.bf16.mxu0 0
        %1803 = vmatpush1.bf16.msra.mxu0 0
        %1804 = vmatprep.subr.bf16.mxu0 0
        %1805 = vmatpush1.bf16.msra.mxu0 0
        %1806 = vmatprep.mubr.bf16.mxu0 0
        %1807 = vmatmul.mubr.bf16.gmra.mrb[0].mxu0 %v1769
        %v1808 = vpop.f32.mrb[0].mxu0
        %v1809 = vadd.f32 0.0, %v1808
        %v1810 = vpop.f32.mrb[0].mxu0
        %v1811 = vpop.f32.mrb[0].mxu0
        %v1812 = vpop.f32.mrb[0].mxu0
        %1813 = vdwg.mxu0
        %v1814 = vsel %vm487, %v1671, 0.0
        %v1815 = vsel %vm487, %v1717, 0.0
        %v1816 = vadd.f32 %v1814, %v1815
        %v1817 = vsel %vm487, %v1763, 0.0
        %v1818 = vadd.f32 %v1816, %v1817
        %v1819 = vsel %vm487, %v1809, 0.0
        %v1820 = vadd.f32 %v1818, %v1819
        %v1821 = vadd.f32 %v484, %v1820
        %v1822 = vld [vmem:[%s7] sm:$0x1]
        %v1824 = vlaneseq
        %v1825 = vshrl.u32 %v1824, 7
        %v1826 = vsub.s32 0, %v1825
        %v1827 = vrot.slane %v1822, %v1826
        %v1829 = vadd.f32 %v1821, %v1827
        %v1830 = vld [vmem:[%s8] sm:$0x1]
        %v1831 = vld [vmem:[%s9] sm:$0x1]
        %v1832 = vsel %vm487, %v1829, 0.0
        %1833 = vadd.xlane.f32.xlu0 %v1832
        %v1834 = vpop.xlane.xlu0 %1833
        %v1835 = vmul.f32 %v1834, %v491
        %v1836 = vsub.f32 %v1829, %v1835
        %v1837 = vmul.f32 %v1836, %v1836
        %v1838 = vsel %vm487, %v1837, 0.0
        %1839 = vadd.xlane.f32.xlu0 %v1838
        %v1840 = vpop.xlane.xlu0 %1839
        %v1841 = vmul.f32 %v1840, %v491
        %v1842 = vadd.f32 %v1841, 1e-05
        %v1843 = vrsqrt.pop %v1842
        %v1844 = vmul.f32 %v1836, %v1843
        %v1846 = vlaneseq
        %v1847 = vshrl.u32 %v1846, 7
        %v1848 = vsub.s32 0, %v1847
        %v1849 = vrot.slane %v1830, %v1848
        %v1851 = vmul.f32 %v1844, %v1849
        %v1853 = vlaneseq
        %v1854 = vshrl.u32 %v1853, 7
        %v1855 = vsub.s32 0, %v1854
        %v1856 = vrot.slane %v1831, %v1855
        %v1858 = vadd.f32 %v1851, %v1856
        %v1859 = vpack.c.bf16 %v1858, %v1858
        %v1860 = vld [vmem:[%s10] sm:$0xf]
        %v1861 = vld [vmem:[%s10 + $0x4] sm:$0xf]
        %v1862 = vld [vmem:[%s10 + $0x8] sm:$0xf]
        %v1863 = vld [vmem:[%s10 + $0xc] sm:$0xf]
        %v1864 = vld [vmem:[%s11] sm:$0x1]
        %v1866 = vlaneseq
        %v1867 = vshrl.u32 %v1866, 7
        %v1868 = vsub.s32 0, %v1867
        %v1869 = vrot.slane %v1864, %v1868
        %v1875 = vunpack.c.l.b16 %v1860
        %v1876 = vunpack.c.l.b16 %v1861
        %v1877 = vunpack.c.l.b16 %v1862
        %v1878 = vunpack.c.l.b16 %v1863
        %v1879 = vpack.c.b16 %v1876, %v1875
        %v1880 = vpack.c.b16 %v1878, %v1877
        %v1884 = vsel %vm487, %v1859, 0
        %1886 = vmatprep.subr.bf16.mxu0 0
        %1887 = vmatpush1.bf16.msra.mxu0 %v1879
        %1888 = vmatprep.subr.bf16.mxu0 0
        %1889 = vmatpush1.bf16.msra.mxu0 %v1880
        %1890 = vmatprep.subr.bf16.mxu0 0
        %1891 = vmatpush1.bf16.msra.mxu0 0
        %1892 = vmatprep.subr.bf16.mxu0 0
        %1893 = vmatpush1.bf16.msra.mxu0 0
        %1894 = vmatprep.subr.bf16.mxu0 0
        %1895 = vmatpush1.bf16.msra.mxu0 0
        %1896 = vmatprep.subr.bf16.mxu0 0
        %1897 = vmatpush1.bf16.msra.mxu0 0
        %1898 = vmatprep.subr.bf16.mxu0 0
        %1899 = vmatpush1.bf16.msra.mxu0 0
        %1900 = vmatprep.subr.bf16.mxu0 0
        %1901 = vmatpush1.bf16.msra.mxu0 0
        %1902 = vmatprep.subr.bf16.mxu0 0
        %1903 = vmatpush1.bf16.msra.mxu0 0
        %1904 = vmatprep.subr.bf16.mxu0 0
        %1905 = vmatpush1.bf16.msra.mxu0 0
        %1906 = vmatprep.subr.bf16.mxu0 0
        %1907 = vmatpush1.bf16.msra.mxu0 0
        %1908 = vmatprep.subr.bf16.mxu0 0
        %1909 = vmatpush1.bf16.msra.mxu0 0
        %1910 = vmatprep.subr.bf16.mxu0 0
        %1911 = vmatpush1.bf16.msra.mxu0 0
        %1912 = vmatprep.subr.bf16.mxu0 0
        %1913 = vmatpush1.bf16.msra.mxu0 0
        %1914 = vmatprep.subr.bf16.mxu0 0
        %1915 = vmatpush1.bf16.msra.mxu0 0
        %1916 = vmatprep.subr.bf16.mxu0 0
        %1917 = vmatpush1.bf16.msra.mxu0 0
        %1918 = vmatprep.mubr.bf16.mxu0 0
        %1919 = vmatmul.mubr.bf16.gmra.mrb[0].mxu0 %v1884
        %v1920 = vpop.f32.mrb[0].mxu0
        %v1921 = vadd.f32 %v1869, %v1920
        %v1922 = vpop.f32.mrb[0].mxu0
        %v1923 = vpop.f32.mrb[0].mxu0
        %v1924 = vpop.f32.mrb[0].mxu0
        %1925 = vdwg.mxu0
        %v1926 = vmul.f32 %v1921, 0.5
        %v1927 = vmul.f32 %v1921, 0.70710677
        %vm1928 = vcmp.ge.f32.partialorder %v1927, 0.0
        %v1929 = vsel %vm1928, 1.0, -1.0
        %v1930 = vand.u32 2147483647, %v1927
        %v1931 = vmul.f32 %v1930, 0.3275911
        %v1932 = vadd.f32 %v1931, 1.0
        %v1933 = vrcp.pop %v1932
        %v1934 = vmul.f32 1.0, %v1933
        %v1935 = vmul.f32 %v1934, 1.0614054
        %v1936 = vadd.f32 %v1935, -1.4531521
        %v1937 = vmul.f32 %v1936, %v1934
        %v1938 = vadd.f32 %v1937, 1.4214138
        %v1939 = vmul.f32 %v1938, %v1934
        %v1940 = vadd.f32 %v1939, -0.28449672
        %v1941 = vmul.f32 %v1940, %v1934
        %v1942 = vadd.f32 %v1941, 0.2548296
        %v1943 = vmul.f32 %v1942, %v1934
        %v1944 = vsub.f32 0.0, %v1930
        %v1945 = vmul.f32 %v1944, %v1930
        %v1946 = vmul.f32 %v1945, 1.442695
        %v1947 = vpow.pop %v1946
        %v1948 = vmul.f32 %v1943, %v1947
        %v1949 = vsub.f32 1.0, %v1948
        %v1950 = vmul.f32 %v1929, %v1949
        %v1951 = vadd.f32 %v1950, 1.0
        %v1952 = vmul.f32 %v1926, %v1951
        %v1953 = vpack.c.bf16 %v1952, %v1952
        %v1954 = vld [vmem:[%s12] sm:$0xf]
        %v1955 = vld [vmem:[%s12 + $0x4] sm:$0xf]
        %v1956 = vld [vmem:[%s12 + $0x8] sm:$0xf]
        %v1957 = vld [vmem:[%s12 + $0xc] sm:$0xf]
        %v1958 = vld [vmem:[%s12 + $0x10] sm:$0xf]
        %v1959 = vld [vmem:[%s12 + $0x14] sm:$0xf]
        %v1960 = vld [vmem:[%s12 + $0x18] sm:$0xf]
        %v1961 = vld [vmem:[%s12 + $0x1c] sm:$0xf]
        %v1962 = vld [vmem:[%s13] sm:$0x1]
        %v1964 = vlaneseq
        %v1965 = vshrl.u32 %v1964, 7
        %v1966 = vsub.s32 0, %v1965
        %v1967 = vrot.slane %v1962, %v1966
        %v1977 = vunpack.c.l.b16 %v1954
        %v1978 = vunpack.c.l.b16 %v1955
        %v1979 = vunpack.c.l.b16 %v1956
        %v1980 = vunpack.c.l.b16 %v1957
        %v1981 = vunpack.c.l.b16 %v1958
        %v1982 = vunpack.c.l.b16 %v1959
        %v1983 = vunpack.c.l.b16 %v1960
        %v1984 = vunpack.c.l.b16 %v1961
        %v1985 = vpack.c.b16 %v1978, %v1977
        %v1986 = vpack.c.b16 %v1980, %v1979
        %v1987 = vpack.c.b16 %v1982, %v1981
        %v1988 = vpack.c.b16 %v1984, %v1983
        %vm1993 = vcmask 523264
        %v1995 = vsel %vm1993, %v1953, 0
        %1997 = vmatprep.subr.bf16.mxu0 0
        %1998 = vmatpush1.bf16.msra.mxu0 %v1985
        %1999 = vmatprep.subr.bf16.mxu0 0
        %2000 = vmatpush1.bf16.msra.mxu0 %v1986
        %2001 = vmatprep.subr.bf16.mxu0 0
        %2002 = vmatpush1.bf16.msra.mxu0 %v1987
        %2003 = vmatprep.subr.bf16.mxu0 0
        %2004 = vmatpush1.bf16.msra.mxu0 %v1988
        %2005 = vmatprep.subr.bf16.mxu0 0
        %2006 = vmatpush1.bf16.msra.mxu0 0
        %2007 = vmatprep.subr.bf16.mxu0 0
        %2008 = vmatpush1.bf16.msra.mxu0 0
        %2009 = vmatprep.subr.bf16.mxu0 0
        %2010 = vmatpush1.bf16.msra.mxu0 0
        %2011 = vmatprep.subr.bf16.mxu0 0
        %2012 = vmatpush1.bf16.msra.mxu0 0
        %2013 = vmatprep.subr.bf16.mxu0 0
        %2014 = vmatpush1.bf16.msra.mxu0 0
        %2015 = vmatprep.subr.bf16.mxu0 0
        %2016 = vmatpush1.bf16.msra.mxu0 0
        %2017 = vmatprep.subr.bf16.mxu0 0
        %2018 = vmatpush1.bf16.msra.mxu0 0
        %2019 = vmatprep.subr.bf16.mxu0 0
        %2020 = vmatpush1.bf16.msra.mxu0 0
        %2021 = vmatprep.subr.bf16.mxu0 0
        %2022 = vmatpush1.bf16.msra.mxu0 0
        %2023 = vmatprep.subr.bf16.mxu0 0
        %2024 = vmatpush1.bf16.msra.mxu0 0
        %2025 = vmatprep.subr.bf16.mxu0 0
        %2026 = vmatpush1.bf16.msra.mxu0 0
        %2027 = vmatprep.subr.bf16.mxu0 0
        %2028 = vmatpush1.bf16.msra.mxu0 0
        %2029 = vmatprep.mubr.bf16.mxu0 0
        %2030 = vmatmul.mubr.bf16.gmra.mrb[0].mxu0 %v1995
        %v2031 = vpop.f32.mrb[0].mxu0
        %v2032 = vadd.f32 %v1967, %v2031
        %v2033 = vpop.f32.mrb[0].mxu0
        %v2034 = vpop.f32.mrb[0].mxu0
        %v2035 = vpop.f32.mrb[0].mxu0
        %2036 = vdwg.mxu0
        %v2037 = vadd.f32 %v1829, %v2032
        %2038 = vst.msk [vmem:[%s482] sm:$0xff] %vm487, %v2037
        %s2039 = sand.u32 %s338, 1
        %s2040 = scalar_lea.sflag [#allocation4], %s2039
        %s2041 = sand.u32 %s338, 1
        %s2042 = smul.addr %s2041, 8
        %s2043 = scalar_lea.vmem [#allocation5], %s2042
        // Predicated region
        $region81: #{transformer_forward.3} parent=75 // pred_check
          %p2044 = pneg %p348
        $region82: #{transformer_forward.3} parent=75 // pred_check_branch
          %2046 = sbr.rel (%p2044) target = $region84
        $region83: #{transformer_forward.3} parent=75 // pred_region
          %s2048 = ssub.s32 128, 128
          %2049 = vsyncadd %s2040, %s2048
          %s2050 = smul.addr %s31, 128
          %s2051 = scalar_lea.hbm %s14, %s2050
          %s2053 = sshll.u32 %s2043, 4
          %s2054 = int_to_ptr.vmem [resolvable:$true] %s2053
          %2056 = dma.vmem_to_hbm [thread:$0]  %s2054, 128, %s2051, %s2040
        $region84: #{transformer_forward.3} parent=75 // pred_fallthru
          _
      $region76: #{transformer_forward.3} parent=5 // pred_fallthru
        _
      %p2057 = scmp.le.s32.totalorder 2, %s26
      // Predicated region
      $region85: #{transformer_forward.3} parent=5 // pred_check
        %p2058 = pneg %p2057
      $region86: #{transformer_forward.3} parent=5 // pred_check_branch
        %2060 = sbr.rel (%p2058) target = $region88
      $region87: #{transformer_forward.3} parent=5 // pred_region
        %s2061 = ssub.s32 %s26, 2
        // Predicated region
        $region89: #{transformer_forward.3} parent=87 // pred_check
          %p2062 = pneg %p354
        $region90: #{transformer_forward.3} parent=87 // pred_check_branch
          %2064 = sbr.rel (%p2062) target = $region92
        $region91: #{transformer_forward.3} parent=87 // pred_region
          %s2065 = sand.u32 %s339, 1
          %s2066 = scalar_lea.sflag [#allocation4], %s2065
          %s2067 = sand.u32 %s339, 1
          %s2068 = smul.addr %s2067, 8
          %s2069 = scalar_lea.vmem [#allocation5], %s2068
          %2070 = dma.done %s2066, 128
        $region92: #{transformer_forward.3} parent=87 // pred_fallthru
          _
      $region88: #{transformer_forward.3} parent=5 // pred_fallthru
        _
    $region6: #{transformer_forward.3} parent=1 // loop_footer
      %s30 = sadd.s32 1, %s26
    $region7: #{transformer_forward.3} parent=1 // loop_footer_branch
      %25 = sbr.rel target = $region3
    $region8: #{transformer_forward.3} parent=1 // loop_exit
      _
    %2071 = vsyncpa [#allocation3], 1
    %s2072 = scalar_lea.sflag [#allocation3], 1
    %2073 = vsyncpa %s2072, 1
    %2074 = vsyncpa [#allocation4], 1
    %s2075 = scalar_lea.sflag [#allocation4], 1
    %2076 = vsyncpa %s2075, 1

// kernel: transformer_forward.2
$region0: #{transformer_forward.2}
  #allocation0 [shape = 'u32[]', space=smem, size = 0x4, offset = 0x4, fixed_abs, tag = 'smem constant byte address 0x4 - core index']
  #allocation1 [shape = 'u32[144,128]{1,0:T(1,128)}', space=vmem, size = 0x12000, scoped, tag = 'internal scratch']
  %s0 = inlined_call_operand.vmem [shape: f32[2,8,32], index: 0, kind: input, shape index: {}, may-alias: {0,14}]
  %s1 = inlined_call_operand.vmem [shape: f32[1,32], index: 1, kind: input, shape index: {}]
  %s2 = inlined_call_operand.vmem [shape: f32[1,32], index: 2, kind: input, shape index: {}]
  %s3 = inlined_call_operand.vmem [shape: bf16[4,32,8], index: 3, kind: input, shape index: {}]
  %s4 = inlined_call_operand.vmem [shape: bf16[4,32,8], index: 4, kind: input, shape index: {}]
  %s5 = inlined_call_operand.vmem [shape: bf16[4,32,8], index: 5, kind: input, shape index: {}]
  %s6 = inlined_call_operand.vmem [shape: bf16[4,8,32], index: 6, kind: input, shape index: {}]
  %s7 = inlined_call_operand.vmem [shape: f32[1,32], index: 7, kind: input, shape index: {}]
  %s8 = inlined_call_operand.vmem [shape: f32[1,32], index: 8, kind: input, shape index: {}]
  %s9 = inlined_call_operand.vmem [shape: f32[1,32], index: 9, kind: input, shape index: {}]
  %s10 = inlined_call_operand.vmem [shape: bf16[32,64], index: 10, kind: input, shape index: {}]
  %s11 = inlined_call_operand.vmem [shape: f32[1,64], index: 11, kind: input, shape index: {}]
  %s12 = inlined_call_operand.vmem [shape: bf16[64,32], index: 12, kind: input, shape index: {}]
  %s13 = inlined_call_operand.vmem [shape: f32[1,32], index: 13, kind: input, shape index: {}]
  %s14 = inlined_call_operand.vmem [shape: f32[2,8,32], index: 14, kind: output, shape index: {}, may-alias: {0,14}]
  %s15 = sld [smem:[#allocation0]]
  $region89: #{transformer_forward.2} parent=0
    _
  %s17 = ssub.s32 1, %s15
  %s18 = scalar_select 0, %s17, %s15
  loop: start=0, step=1, limit=4
  $region2: #{transformer_forward.2} parent=0 // loop_pre_header
    _
  $region3: #{transformer_forward.2} parent=0 // loop_header
    %s20 = sphi 0, %s24
    %p21 = scmp.ge.s32.totalorder %s20, 4
    %s30 = sphi 0, %s32
    %s33 = sphi 0, %s30
    %s34 = sphi 0, %s33
    %s50 = sphi 0, %s34
    %s54 = sphi 0, %s54
    %s56 = sphi 0, %s54
    %s57 = sphi 0, %s56
    %s71 = sphi 0, %s57
    %s75 = sphi 0, %s75
    %s77 = sphi 0, %s75
    %s78 = sphi 0, %s77
    %s92 = sphi 0, %s78
    %s96 = sphi 0, %s96
    %s98 = sphi 0, %s96
    %s99 = sphi 0, %s98
    %s113 = sphi 0, %s99
    %s117 = sphi 0, %s117
    %s119 = sphi 0, %s117
    %s120 = sphi 0, %s119
    %s134 = sphi 0, %s120
    %s138 = sphi 0, %s138
    %s140 = sphi 0, %s138
    %s141 = sphi 0, %s140
    %s155 = sphi 0, %s141
    %s159 = sphi 0, %s159
    %s161 = sphi 0, %s159
    %s162 = sphi 0, %s161
    %s176 = sphi 0, %s162
    %s180 = sphi 0, %s180
    %s182 = sphi 0, %s180
    %s183 = sphi 0, %s182
    %s197 = sphi 0, %s183
    %s201 = sphi 0, %s201
    %s203 = sphi 0, %s201
    %s204 = sphi 0, %s203
    %s218 = sphi 0, %s204
    %s222 = sphi 0, %s222
    %s224 = sphi 0, %s222
    %s225 = sphi 0, %s224
    %s239 = sphi 0, %s225
    %s243 = sphi 0, %s243
    %s245 = sphi 0, %s243
    %s246 = sphi 0, %s245
    %s260 = sphi 0, %s246
    %s264 = sphi 0, %s264
    %s266 = sphi 0, %s264
    %s267 = sphi 0, %s266
    %s281 = sphi 0, %s267
    %s285 = sphi 0, %s285
    %s287 = sphi 0, %s285
    %s288 = sphi 0, %s287
    %s302 = sphi 0, %s288
    %s306 = sphi 0, %s306
    %s308 = sphi 0, %s306
    %s309 = sphi 0, %s308
    %s323 = sphi 0, %s309
    %s329 = sphi 0, %s331
    %s332 = sphi 0, %s329
    %s333 = sphi 0, %s332
    %s349 = sphi 0, %s333
  $region4: #{transformer_forward.2} parent=0 // loop_header_branch
    %23 = sbr.rel (%p21) target = $region8
  $region5: #{transformer_forward.2} parent=0 // loop_body
    %s25 = ssub.s32 %s20, 1
    %s26 = ssub.s32 %s20, 2
    %s27 = sadd.s32 %s20, 1
    %s28 = ssub.s32 %s20, %s27
    %p29 = scmp.eq.s32.totalorder %s28, 0
    %s31 = sadd.s32 %s30, 1
    %s32 = scalar_select %p29, %s30, %s31
    %p35 = pneg %p29
    %p36 = scmp.eq.s32.totalorder %s20, 1
    %p37 = por %p35, %p36
    %p38 = scmp.ne.s32.totalorder %s30, %s33
    %p39 = scmp.eq.s32.totalorder %s20, 0
    %p40 = por %p38, %p39
    %p41 = scmp.ne.s32.totalorder %s30, %s33
    %p42 = scmp.eq.s32.totalorder %s25, 1
    %p43 = por %p41, %p42
    %p44 = scmp.ne.s32.totalorder %s33, %s34
    %p45 = scmp.eq.s32.totalorder %s25, 0
    %p46 = por %p44, %p45
    %p47 = scmp.ne.s32.totalorder %s33, %s34
    %p48 = scmp.eq.s32.totalorder %s26, 1
    %p49 = por %p47, %p48
    %p51 = scmp.ne.s32.totalorder %s34, %s50
    %p52 = scmp.eq.s32.totalorder %s26, 0
    %p53 = por %p51, %p52
    %s55 = sadd.s32 %s54, 1
    %p58 = scmp.eq.s32.totalorder %s20, 1
    %p59 = scmp.ne.s32.totalorder %s54, %s56
    %p60 = scmp.eq.s32.totalorder %s20, 0
    %p61 = por %p59, %p60
    %p62 = scmp.ne.s32.totalorder %s54, %s56
    %p63 = scmp.eq.s32.totalorder %s25, 1
    %p64 = por %p62, %p63
    %p65 = scmp.ne.s32.totalorder %s56, %s57
    %p66 = scmp.eq.s32.totalorder %s25, 0
    %p67 = por %p65, %p66
    %p68 = scmp.ne.s32.totalorder %s56, %s57
    %p69 = scmp.eq.s32.totalorder %s26, 1
    %p70 = por %p68, %p69
    %p72 = scmp.ne.s32.totalorder %s57, %s71
    %p73 = scmp.eq.s32.totalorder %s26, 0
    %p74 = por %p72, %p73
    %s76 = sadd.s32 %s75, 1
    %p79 = scmp.eq.s32.totalorder %s20, 1
    %p80 = scmp.ne.s32.totalorder %s75, %s77
    %p81 = scmp.eq.s32.totalorder %s20, 0
    %p82 = por %p80, %p81
    %p83 = scmp.ne.s32.totalorder %s75, %s77
    %p84 = scmp.eq.s32.totalorder %s25, 1
    %p85 = por %p83, %p84
    %p86 = scmp.ne.s32.totalorder %s77, %s78
    %p87 = scmp.eq.s32.totalorder %s25, 0
    %p88 = por %p86, %p87
    %p89 = scmp.ne.s32.totalorder %s77, %s78
    %p90 = scmp.eq.s32.totalorder %s26, 1
    %p91 = por %p89, %p90
    %p93 = scmp.ne.s32.totalorder %s78, %s92
    %p94 = scmp.eq.s32.totalorder %s26, 0
    %p95 = por %p93, %p94
    %s97 = sadd.s32 %s96, 1
    %p100 = scmp.eq.s32.totalorder %s20, 1
    %p101 = scmp.ne.s32.totalorder %s96, %s98
    %p102 = scmp.eq.s32.totalorder %s20, 0
    %p103 = por %p101, %p102
    %p104 = scmp.ne.s32.totalorder %s96, %s98
    %p105 = scmp.eq.s32.totalorder %s25, 1
    %p106 = por %p104, %p105
    %p107 = scmp.ne.s32.totalorder %s98, %s99
    %p108 = scmp.eq.s32.totalorder %s25, 0
    %p109 = por %p107, %p108
    %p110 = scmp.ne.s32.totalorder %s98, %s99
    %p111 = scmp.eq.s32.totalorder %s26, 1
    %p112 = por %p110, %p111
    %p114 = scmp.ne.s32.totalorder %s99, %s113
    %p115 = scmp.eq.s32.totalorder %s26, 0
    %p116 = por %p114, %p115
    %s118 = sadd.s32 %s117, 1
    %p121 = scmp.eq.s32.totalorder %s20, 1
    %p122 = scmp.ne.s32.totalorder %s117, %s119
    %p123 = scmp.eq.s32.totalorder %s20, 0
    %p124 = por %p122, %p123
    %p125 = scmp.ne.s32.totalorder %s117, %s119
    %p126 = scmp.eq.s32.totalorder %s25, 1
    %p127 = por %p125, %p126
    %p128 = scmp.ne.s32.totalorder %s119, %s120
    %p129 = scmp.eq.s32.totalorder %s25, 0
    %p130 = por %p128, %p129
    %p131 = scmp.ne.s32.totalorder %s119, %s120
    %p132 = scmp.eq.s32.totalorder %s26, 1
    %p133 = por %p131, %p132
    %p135 = scmp.ne.s32.totalorder %s120, %s134
    %p136 = scmp.eq.s32.totalorder %s26, 0
    %p137 = por %p135, %p136
    %s139 = sadd.s32 %s138, 1
    %p142 = scmp.eq.s32.totalorder %s20, 1
    %p143 = scmp.ne.s32.totalorder %s138, %s140
    %p144 = scmp.eq.s32.totalorder %s20, 0
    %p145 = por %p143, %p144
    %p146 = scmp.ne.s32.totalorder %s138, %s140
    %p147 = scmp.eq.s32.totalorder %s25, 1
    %p148 = por %p146, %p147
    %p149 = scmp.ne.s32.totalorder %s140, %s141
    %p150 = scmp.eq.s32.totalorder %s25, 0
    %p151 = por %p149, %p150
    %p152 = scmp.ne.s32.totalorder %s140, %s141
    %p153 = scmp.eq.s32.totalorder %s26, 1
    %p154 = por %p152, %p153
    %p156 = scmp.ne.s32.totalorder %s141, %s155
    %p157 = scmp.eq.s32.totalorder %s26, 0
    %p158 = por %p156, %p157
    %s160 = sadd.s32 %s159, 1
    %p163 = scmp.eq.s32.totalorder %s20, 1
    %p164 = scmp.ne.s32.totalorder %s159, %s161
    %p165 = scmp.eq.s32.totalorder %s20, 0
    %p166 = por %p164, %p165
    %p167 = scmp.ne.s32.totalorder %s159, %s161
    %p168 = scmp.eq.s32.totalorder %s25, 1
    %p169 = por %p167, %p168
    %p170 = scmp.ne.s32.totalorder %s161, %s162
    %p171 = scmp.eq.s32.totalorder %s25, 0
    %p172 = por %p170, %p171
    %p173 = scmp.ne.s32.totalorder %s161, %s162
    %p174 = scmp.eq.s32.totalorder %s26, 1
    %p175 = por %p173, %p174
    %p177 = scmp.ne.s32.totalorder %s162, %s176
    %p178 = scmp.eq.s32.totalorder %s26, 0
    %p179 = por %p177, %p178
    %s181 = sadd.s32 %s180, 1
    %p184 = scmp.eq.s32.totalorder %s20, 1
    %p185 = scmp.ne.s32.totalorder %s180, %s182
    %p186 = scmp.eq.s32.totalorder %s20, 0
    %p187 = por %p185, %p186
    %p188 = scmp.ne.s32.totalorder %s180, %s182
    %p189 = scmp.eq.s32.totalorder %s25, 1
    %p190 = por %p188, %p189
    %p191 = scmp.ne.s32.totalorder %s182, %s183
    %p192 = scmp.eq.s32.totalorder %s25, 0
    %p193 = por %p191, %p192
    %p194 = scmp.ne.s32.totalorder %s182, %s183
    %p195 = scmp.eq.s32.totalorder %s26, 1
    %p196 = por %p194, %p195
    %p198 = scmp.ne.s32.totalorder %s183, %s197
    %p199 = scmp.eq.s32.totalorder %s26, 0
    %p200 = por %p198, %p199
    %s202 = sadd.s32 %s201, 1
    %p205 = scmp.eq.s32.totalorder %s20, 1
    %p206 = scmp.ne.s32.totalorder %s201, %s203
    %p207 = scmp.eq.s32.totalorder %s20, 0
    %p208 = por %p206, %p207
    %p209 = scmp.ne.s32.totalorder %s201, %s203
    %p210 = scmp.eq.s32.totalorder %s25, 1
    %p211 = por %p209, %p210
    %p212 = scmp.ne.s32.totalorder %s203, %s204
    %p213 = scmp.eq.s32.totalorder %s25, 0
    %p214 = por %p212, %p213
    %p215 = scmp.ne.s32.totalorder %s203, %s204
    %p216 = scmp.eq.s32.totalorder %s26, 1
    %p217 = por %p215, %p216
    %p219 = scmp.ne.s32.totalorder %s204, %s218
    %p220 = scmp.eq.s32.totalorder %s26, 0
    %p221 = por %p219, %p220
    %s223 = sadd.s32 %s222, 1
    %p226 = scmp.eq.s32.totalorder %s20, 1
    %p227 = scmp.ne.s32.totalorder %s222, %s224
    %p228 = scmp.eq.s32.totalorder %s20, 0
    %p229 = por %p227, %p228
    %p230 = scmp.ne.s32.totalorder %s222, %s224
    %p231 = scmp.eq.s32.totalorder %s25, 1
    %p232 = por %p230, %p231
    %p233 = scmp.ne.s32.totalorder %s224, %s225
    %p234 = scmp.eq.s32.totalorder %s25, 0
    %p235 = por %p233, %p234
    %p236 = scmp.ne.s32.totalorder %s224, %s225
    %p237 = scmp.eq.s32.totalorder %s26, 1
    %p238 = por %p236, %p237
    %p240 = scmp.ne.s32.totalorder %s225, %s239
    %p241 = scmp.eq.s32.totalorder %s26, 0
    %p242 = por %p240, %p241
    %s244 = sadd.s32 %s243, 1
    %p247 = scmp.eq.s32.totalorder %s20, 1
    %p248 = scmp.ne.s32.totalorder %s243, %s245
    %p249 = scmp.eq.s32.totalorder %s20, 0
    %p250 = por %p248, %p249
    %p251 = scmp.ne.s32.totalorder %s243, %s245
    %p252 = scmp.eq.s32.totalorder %s25, 1
    %p253 = por %p251, %p252
    %p254 = scmp.ne.s32.totalorder %s245, %s246
    %p255 = scmp.eq.s32.totalorder %s25, 0
    %p256 = por %p254, %p255
    %p257 = scmp.ne.s32.totalorder %s245, %s246
    %p258 = scmp.eq.s32.totalorder %s26, 1
    %p259 = por %p257, %p258
    %p261 = scmp.ne.s32.totalorder %s246, %s260
    %p262 = scmp.eq.s32.totalorder %s26, 0
    %p263 = por %p261, %p262
    %s265 = sadd.s32 %s264, 1
    %p268 = scmp.eq.s32.totalorder %s20, 1
    %p269 = scmp.ne.s32.totalorder %s264, %s266
    %p270 = scmp.eq.s32.totalorder %s20, 0
    %p271 = por %p269, %p270
    %p272 = scmp.ne.s32.totalorder %s264, %s266
    %p273 = scmp.eq.s32.totalorder %s25, 1
    %p274 = por %p272, %p273
    %p275 = scmp.ne.s32.totalorder %s266, %s267
    %p276 = scmp.eq.s32.totalorder %s25, 0
    %p277 = por %p275, %p276
    %p278 = scmp.ne.s32.totalorder %s266, %s267
    %p279 = scmp.eq.s32.totalorder %s26, 1
    %p280 = por %p278, %p279
    %p282 = scmp.ne.s32.totalorder %s267, %s281
    %p283 = scmp.eq.s32.totalorder %s26, 0
    %p284 = por %p282, %p283
    %s286 = sadd.s32 %s285, 1
    %p289 = scmp.eq.s32.totalorder %s20, 1
    %p290 = scmp.ne.s32.totalorder %s285, %s287
    %p291 = scmp.eq.s32.totalorder %s20, 0
    %p292 = por %p290, %p291
    %p293 = scmp.ne.s32.totalorder %s285, %s287
    %p294 = scmp.eq.s32.totalorder %s25, 1
    %p295 = por %p293, %p294
    %p296 = scmp.ne.s32.totalorder %s287, %s288
    %p297 = scmp.eq.s32.totalorder %s25, 0
    %p298 = por %p296, %p297
    %p299 = scmp.ne.s32.totalorder %s287, %s288
    %p300 = scmp.eq.s32.totalorder %s26, 1
    %p301 = por %p299, %p300
    %p303 = scmp.ne.s32.totalorder %s288, %s302
    %p304 = scmp.eq.s32.totalorder %s26, 0
    %p305 = por %p303, %p304
    %s307 = sadd.s32 %s306, 1
    %p310 = scmp.eq.s32.totalorder %s20, 1
    %p311 = scmp.ne.s32.totalorder %s306, %s308
    %p312 = scmp.eq.s32.totalorder %s20, 0
    %p313 = por %p311, %p312
    %p314 = scmp.ne.s32.totalorder %s306, %s308
    %p315 = scmp.eq.s32.totalorder %s25, 1
    %p316 = por %p314, %p315
    %p317 = scmp.ne.s32.totalorder %s308, %s309
    %p318 = scmp.eq.s32.totalorder %s25, 0
    %p319 = por %p317, %p318
    %p320 = scmp.ne.s32.totalorder %s308, %s309
    %p321 = scmp.eq.s32.totalorder %s26, 1
    %p322 = por %p320, %p321
    %p324 = scmp.ne.s32.totalorder %s309, %s323
    %p325 = scmp.eq.s32.totalorder %s26, 0
    %p326 = por %p324, %p325
    %s327 = ssub.s32 %s20, %s27
    %p328 = scmp.eq.s32.totalorder %s327, 0
    %s330 = sadd.s32 %s329, 1
    %s331 = scalar_select %p328, %s329, %s330
    %p334 = pneg %p328
    %p335 = scmp.eq.s32.totalorder %s20, 1
    %p336 = por %p334, %p335
    %p337 = scmp.ne.s32.totalorder %s329, %s332
    %p338 = scmp.eq.s32.totalorder %s20, 0
    %p339 = por %p337, %p338
    %p340 = scmp.ne.s32.totalorder %s329, %s332
    %p341 = scmp.eq.s32.totalorder %s25, 1
    %p342 = por %p340, %p341
    %p343 = scmp.ne.s32.totalorder %s332, %s333
    %p344 = scmp.eq.s32.totalorder %s25, 0
    %p345 = por %p343, %p344
    %p346 = scmp.ne.s32.totalorder %s332, %s333
    %p347 = scmp.eq.s32.totalorder %s26, 1
    %p348 = por %p346, %p347
    %p350 = scmp.ne.s32.totalorder %s333, %s349
    %p351 = scmp.eq.s32.totalorder %s26, 0
    %p352 = por %p350, %p351
    %p353 = scmp.le.s32.totalorder 1, %s20
    %p354 = scmp.lt.s32.totalorder %s20, 3
    %p355 = pnand %p353, %p354
    %p356 = pneg %p355
    // Predicated region
    $region9: #{transformer_forward.2} parent=5 // pred_check
      _
    $region10: #{transformer_forward.2} parent=5 // pred_check_branch
      %358 = sbr.rel (%p355) target = $region12
    $region11: #{transformer_forward.2} parent=5 // pred_region
      %s359 = ssub.s32 %s20, 1
      // Predicated region
      $region13: #{transformer_forward.2} parent=11 // pred_check
        %p360 = pneg %p67
      $region14: #{transformer_forward.2} parent=11 // pred_check_branch
        %362 = sbr.rel (%p360) target = $region16
      $region15: #{transformer_forward.2} parent=11 // pred_region
        _
      $region16: #{transformer_forward.2} parent=11 // pred_fallthru
        _
      // Predicated region
      $region17: #{transformer_forward.2} parent=11 // pred_check
        %p363 = pneg %p88
      $region18: #{transformer_forward.2} parent=11 // pred_check_branch
        %365 = sbr.rel (%p363) target = $region20
      $region19: #{transformer_forward.2} parent=11 // pred_region
        _
      $region20: #{transformer_forward.2} parent=11 // pred_fallthru
        _
      // Predicated region
      $region21: #{transformer_forward.2} parent=11 // pred_check
        %p366 = pneg %p109
      $region22: #{transformer_forward.2} parent=11 // pred_check_branch
        %368 = sbr.rel (%p366) target = $region24
      $region23: #{transformer_forward.2} parent=11 // pred_region
        _
      $region24: #{transformer_forward.2} parent=11 // pred_fallthru
        _
      // Predicated region
      $region25: #{transformer_forward.2} parent=11 // pred_check
        %p369 = pneg %p130
      $region26: #{transformer_forward.2} parent=11 // pred_check_branch
        %371 = sbr.rel (%p369) target = $region28
      $region27: #{transformer_forward.2} parent=11 // pred_region
        _
      $region28: #{transformer_forward.2} parent=11 // pred_fallthru
        _
      // Predicated region
      $region29: #{transformer_forward.2} parent=11 // pred_check
        %p372 = pneg %p151
      $region30: #{transformer_forward.2} parent=11 // pred_check_branch
        %374 = sbr.rel (%p372) target = $region32
      $region31: #{transformer_forward.2} parent=11 // pred_region
        _
      $region32: #{transformer_forward.2} parent=11 // pred_fallthru
        _
      // Predicated region
      $region33: #{transformer_forward.2} parent=11 // pred_check
        %p375 = pneg %p172
      $region34: #{transformer_forward.2} parent=11 // pred_check_branch
        %377 = sbr.rel (%p375) target = $region36
      $region35: #{transformer_forward.2} parent=11 // pred_region
        _
      $region36: #{transformer_forward.2} parent=11 // pred_fallthru
        _
      // Predicated region
      $region37: #{transformer_forward.2} parent=11 // pred_check
        %p378 = pneg %p193
      $region38: #{transformer_forward.2} parent=11 // pred_check_branch
        %380 = sbr.rel (%p378) target = $region40
      $region39: #{transformer_forward.2} parent=11 // pred_region
        _
      $region40: #{transformer_forward.2} parent=11 // pred_fallthru
        _
      // Predicated region
      $region41: #{transformer_forward.2} parent=11 // pred_check
        %p381 = pneg %p214
      $region42: #{transformer_forward.2} parent=11 // pred_check_branch
        %383 = sbr.rel (%p381) target = $region44
      $region43: #{transformer_forward.2} parent=11 // pred_region
        _
      $region44: #{transformer_forward.2} parent=11 // pred_fallthru
        _
      // Predicated region
      $region45: #{transformer_forward.2} parent=11 // pred_check
        %p384 = pneg %p235
      $region46: #{transformer_forward.2} parent=11 // pred_check_branch
        %386 = sbr.rel (%p384) target = $region48
      $region47: #{transformer_forward.2} parent=11 // pred_region
        _
      $region48: #{transformer_forward.2} parent=11 // pred_fallthru
        _
      // Predicated region
      $region49: #{transformer_forward.2} parent=11 // pred_check
        %p387 = pneg %p256
      $region50: #{transformer_forward.2} parent=11 // pred_check_branch
        %389 = sbr.rel (%p387) target = $region52
      $region51: #{transformer_forward.2} parent=11 // pred_region
        _
      $region52: #{transformer_forward.2} parent=11 // pred_fallthru
        _
      // Predicated region
      $region53: #{transformer_forward.2} parent=11 // pred_check
        %p390 = pneg %p277
      $region54: #{transformer_forward.2} parent=11 // pred_check_branch
        %392 = sbr.rel (%p390) target = $region56
      $region55: #{transformer_forward.2} parent=11 // pred_region
        _
      $region56: #{transformer_forward.2} parent=11 // pred_fallthru
        _
      // Predicated region
      $region57: #{transformer_forward.2} parent=11 // pred_check
        %p393 = pneg %p298
      $region58: #{transformer_forward.2} parent=11 // pred_check_branch
        %395 = sbr.rel (%p393) target = $region60
      $region59: #{transformer_forward.2} parent=11 // pred_region
        _
      $region60: #{transformer_forward.2} parent=11 // pred_fallthru
        _
      // Predicated region
      $region61: #{transformer_forward.2} parent=11 // pred_check
        %p396 = pneg %p319
      $region62: #{transformer_forward.2} parent=11 // pred_check_branch
        %398 = sbr.rel (%p396) target = $region64
      $region63: #{transformer_forward.2} parent=11 // pred_region
        _
      $region64: #{transformer_forward.2} parent=11 // pred_fallthru
        _
    $region12: #{transformer_forward.2} parent=5 // pred_fallthru
      _
    %p399 = scmp.lt.s32.totalorder %s20, 2
    // Predicated region
    $region65: #{transformer_forward.2} parent=5 // pred_check
      %p400 = pneg %p399
    $region66: #{transformer_forward.2} parent=5 // pred_check_branch
      %402 = sbr.rel (%p400) target = $region68
    $region67: #{transformer_forward.2} parent=5 // pred_region
      // Predicated region
      $region69: #{transformer_forward.2} parent=67 // pred_check
        %p403 = pneg %p40
      $region70: #{transformer_forward.2} parent=67 // pred_check_branch
        %405 = sbr.rel (%p403) target = $region72
      $region71: #{transformer_forward.2} parent=67 // pred_region
        %p406 = scmp.lt.s32.totalorder %s20, 1
        %s407 = scalar_select %p406, %s20, 1
        %s408 = smul.addr %s407, 8
        %s409 = scalar_lea.vmem %s0, %s408
      $region72: #{transformer_forward.2} parent=67 // pred_fallthru
        _
    $region68: #{transformer_forward.2} parent=5 // pred_fallthru
      _
    %p410 = scmp.le.s32.totalorder 1, %s20
    %p411 = scmp.lt.s32.totalorder %s20, 3
    %p412 = pnand %p410, %p411
    %p413 = pneg %p412
    // Predicated region
    $region73: #{transformer_forward.2} parent=5 // pred_check
      _
    $region74: #{transformer_forward.2} parent=5 // pred_check_branch
      %415 = sbr.rel (%p412) target = $region76
    $region75: #{transformer_forward.2} parent=5 // pred_region
      %s416 = ssub.s32 %s20, 1
      %p417 = scmp.lt.s32.totalorder %s25, 1
      %s418 = scalar_select %p417, %s25, 1
      %s419 = smul.addr %s418, 8
      %s420 = scalar_lea.vmem %s0, %s419
      %p421 = pneg %p46
      %p422 = pneg %p43
      %p423 = pneg %p67
      %p424 = pneg %p64
      %p425 = pneg %p88
      %p426 = pneg %p85
      %p427 = pneg %p109
      %p428 = pneg %p106
      %p429 = pneg %p130
      %p430 = pneg %p127
      %p431 = pneg %p151
      %p432 = pneg %p148
      %p433 = pneg %p172
      %p434 = pneg %p169
      %p435 = pneg %p193
      %p436 = pneg %p190
      %p437 = pneg %p214
      %p438 = pneg %p211
      %p439 = pneg %p235
      %p440 = pneg %p232
      %p441 = pneg %p256
      %p442 = pneg %p253
      %p443 = pneg %p277
      %p444 = pneg %p274
      %p445 = pneg %p298
      %p446 = pneg %p295
      %p447 = pneg %p319
      %p448 = pneg %p316
      %p449 = pneg %p345
      %p450 = pneg %p342
      %p451 = scmp.lt.s32.totalorder %s25, 1
      %s452 = scalar_select %p451, %s25, 1
      %s453 = smul.addr %s452, 8
      %s454 = scalar_lea.vmem %s14, %s453
      %p455 = scmp.lt.s32.totalorder %s25, 1
      %s456 = scalar_select %p455, %s25, 1
      %s457 = smul.addr %s456, 8
      %s458 = scalar_lea.vmem %s0, %s457
      %p459 = scmp.lt.s32.totalorder %s25, 1
      %s460 = scalar_select %p459, %s25, 1
      %s461 = smul.addr %s460, 8
      %s462 = scalar_lea.vmem %s14, %s461
      %v464 = vld [vmem:[%s458] sm:$0xff]
      %v465 = vld [vmem:[%s1] sm:$0x1]
      %v466 = vld [vmem:[%s2] sm:$0x1]
      %vm467 = vcmask 261120
      %v468 = vsel %vm467, %v464, 0.0
      %469 = vadd.xlane.f32.xlu0 %v468
      %v470 = vpop.xlane.xlu0 %469
      %v471 = vrcp.pop 32.0
      %v472 = vmul.f32 %v470, %v471
      %v473 = vsub.f32 %v464, %v472
      %v474 = vmul.f32 %v473, %v473
      %v475 = vsel %vm467, %v474, 0.0
      %476 = vadd.xlane.f32.xlu0 %v475
      %v477 = vpop.xlane.xlu0 %476
      %v478 = vmul.f32 %v477, %v471
      %v479 = vadd.f32 %v478, 1e-05
      %v480 = vrsqrt.pop %v479
      %v481 = vmul.f32 %v473, %v480
      %v483 = vlaneseq
      %v484 = vshrl.u32 %v483, 7
      %v485 = vsub.s32 0, %v484
      %v486 = vrot.slane %v465, %v485
      %v488 = vmul.f32 %v481, %v486
      %v490 = vlaneseq
      %v491 = vshrl.u32 %v490, 7
      %v492 = vsub.s32 0, %v491
      %v493 = vrot.slane %v466, %v492
      %v495 = vadd.f32 %v488, %v493
      %v496 = vpack.c.bf16 %v495, %v495
      %v497 = vld [vmem:[%s3] sm:$0xf]
      %v498 = vld [vmem:[%s3 + $0x4] sm:$0xf]
      %v499 = vld [vmem:[%s3 + $0x8] sm:$0xf]
      %v500 = vld [vmem:[%s3 + $0xc] sm:$0xf]
      %v501 = vld [vmem:[%s3 + $0x10] sm:$0xf]
      %v502 = vld [vmem:[%s3 + $0x14] sm:$0xf]
      %v503 = vld [vmem:[%s3 + $0x18] sm:$0xf]
      %v504 = vld [vmem:[%s3 + $0x1c] sm:$0xf]
      %v505 = vld [vmem:[%s3 + $0x20] sm:$0xf]
      %v506 = vld [vmem:[%s3 + $0x24] sm:$0xf]
      %v507 = vld [vmem:[%s3 + $0x28] sm:$0xf]
      %v508 = vld [vmem:[%s3 + $0x2c] sm:$0xf]
      %v509 = vld [vmem:[%s3 + $0x30] sm:$0xf]
      %v510 = vld [vmem:[%s3 + $0x34] sm:$0xf]
      %v511 = vld [vmem:[%s3 + $0x38] sm:$0xf]
      %v512 = vld [vmem:[%s3 + $0x3c] sm:$0xf]
      %v517 = vunpack.c.l.b16 %v497
      %v518 = vunpack.c.l.b16 %v498
      %v519 = vunpack.c.l.b16 %v499
      %v520 = vunpack.c.l.b16 %v500
      %v521 = vpack.c.b16 %v518, %v517
      %v522 = vpack.c.b16 %v520, %v519
      %v526 = vsel %vm467, %v496, 0
      %528 = vmatprep.subr.bf16.mxu0 0
      %529 = vmatpush1.bf16.msra.mxu0 %v521
      %530 = vmatprep.subr.bf16.mxu0 0
      %531 = vmatpush1.bf16.msra.mxu0 %v522
      %532 = vmatprep.subr.bf16.mxu0 0
      %533 = vmatpush1.bf16.msra.mxu0 0
      %534 = vmatprep.subr.bf16.mxu0 0
      %535 = vmatpush1.bf16.msra.mxu0 0
      %536 = vmatprep.subr.bf16.mxu0 0
      %537 = vmatpush1.bf16.msra.mxu0 0
      %538 = vmatprep.subr.bf16.mxu0 0
      %539 = vmatpush1.bf16.msra.mxu0 0
      %540 = vmatprep.subr.bf16.mxu0 0
      %541 = vmatpush1.bf16.msra.mxu0 0
      %542 = vmatprep.subr.bf16.mxu0 0
      %543 = vmatpush1.bf16.msra.mxu0 0
      %544 = vmatprep.subr.bf16.mxu0 0
      %545 = vmatpush1.bf16.msra.mxu0 0
      %546 = vmatprep.subr.bf16.mxu0 0
      %547 = vmatpush1.bf16.msra.mxu0 0
      %548 = vmatprep.subr.bf16.mxu0 0
      %549 = vmatpush1.bf16.msra.mxu0 0
      %550 = vmatprep.subr.bf16.mxu0 0
      %551 = vmatpush1.bf16.msra.mxu0 0
      %552 = vmatprep.subr.bf16.mxu0 0
      %553 = vmatpush1.bf16.msra.mxu0 0
      %554 = vmatprep.subr.bf16.mxu0 0
      %555 = vmatpush1.bf16.msra.mxu0 0
      %556 = vmatprep.subr.bf16.mxu0 0
      %557 = vmatpush1.bf16.msra.mxu0 0
      %558 = vmatprep.subr.bf16.mxu0 0
      %559 = vmatpush1.bf16.msra.mxu0 0
      %560 = vmatprep.mubr.bf16.mxu0 0
      %561 = vmatmul.mubr.bf16.gmra.mrb[0].mxu0 %v526
      %v562 = vpop.f32.mrb[0].mxu0
      %v563 = vadd.f32 0.0, %v562
      %v564 = vpop.f32.mrb[0].mxu0
      %v565 = vpop.f32.mrb[0].mxu0
      %v566 = vpop.f32.mrb[0].mxu0
      %567 = vdwg.mxu0
      %v572 = vunpack.c.l.b16 %v501
      %v573 = vunpack.c.l.b16 %v502
      %v574 = vunpack.c.l.b16 %v503
      %v575 = vunpack.c.l.b16 %v504
      %v576 = vpack.c.b16 %v573, %v572
      %v577 = vpack.c.b16 %v575, %v574
      %580 = vmatprep.subr.bf16.mxu0 0
      %581 = vmatpush1.bf16.msra.mxu0 %v576
      %582 = vmatprep.subr.bf16.mxu0 0
      %583 = vmatpush1.bf16.msra.mxu0 %v577
      %584 = vmatprep.subr.bf16.mxu0 0
      %585 = vmatpush1.bf16.msra.mxu0 0
      %586 = vmatprep.subr.bf16.mxu0 0
      %587 = vmatpush1.bf16.msra.mxu0 0
      %588 = vmatprep.subr.bf16.mxu0 0
      %589 = vmatpush1.bf16.msra.mxu0 0
      %590 = vmatprep.subr.bf16.mxu0 0
      %591 = vmatpush1.bf16.msra.mxu0 0
      %592 = vmatprep.subr.bf16.mxu0 0
      %593 = vmatpush1.bf16.msra.mxu0 0
      %594 = vmatprep.subr.bf16.mxu0 0
      %595 = vmatpush1.bf16.msra.mxu0 0
      %596 = vmatprep.subr.bf16.mxu0 0
      %597 = vmatpush1.bf16.msra.mxu0 0
      %598 = vmatprep.subr.bf16.mxu0 0
      %599 = vmatpush1.bf16.msra.mxu0 0
      %600 = vmatprep.subr.bf16.mxu0 0
      %601 = vmatpush1.bf16.msra.mxu0 0
      %602 = vmatprep.subr.bf16.mxu0 0
      %603 = vmatpush1.bf16.msra.mxu0 0
      %604 = vmatprep.subr.bf16.mxu0 0
      %605 = vmatpush1.bf16.msra.mxu0 0
      %606 = vmatprep.subr.bf16.mxu0 0
      %607 = vmatpush1.bf16.msra.mxu0 0
      %608 = vmatprep.subr.bf16.mxu0 0
      %609 = vmatpush1.bf16.msra.mxu0 0
      %610 = vmatprep.subr.bf16.mxu0 0
      %611 = vmatpush1.bf16.msra.mxu0 0
      %612 = vmatprep.mubr.bf16.mxu0 0
      %613 = vmatmul.mubr.bf16.gmra.mrb[0].mxu0 %v526
      %v614 = vpop.f32.mrb[0].mxu0
      %v615 = vadd.f32 0.0, %v614
      %v616 = vpop.f32.mrb[0].mxu0
      %v617 = vpop.f32.mrb[0].mxu0
      %v618 = vpop.f32.mrb[0].mxu0
      %619 = vdwg.mxu0
      %v624 = vunpack.c.l.b16 %v505
      %v625 = vunpack.c.l.b16 %v506
      %v626 = vunpack.c.l.b16 %v507
      %v627 = vunpack.c.l.b16 %v508
      %v628 = vpack.c.b16 %v625, %v624
      %v629 = vpack.c.b16 %v627, %v626
      %632 = vmatprep.subr.bf16.mxu0 0
      %633 = vmatpush1.bf16.msra.mxu0 %v628
      %634 = vmatprep.subr.bf16.mxu0 0
      %635 = vmatpush1.bf16.msra.mxu0 %v629
      %636 = vmatprep.subr.bf16.mxu0 0
      %637 = vmatpush1.bf16.msra.mxu0 0
      %638 = vmatprep.subr.bf16.mxu0 0
      %639 = vmatpush1.bf16.msra.mxu0 0
      %640 = vmatprep.subr.bf16.mxu0 0
      %641 = vmatpush1.bf16.msra.mxu0 0
      %642 = vmatprep.subr.bf16.mxu0 0
      %643 = vmatpush1.bf16.msra.mxu0 0
      %644 = vmatprep.subr.bf16.mxu0 0
      %645 = vmatpush1.bf16.msra.mxu0 0
      %646 = vmatprep.subr.bf16.mxu0 0
      %647 = vmatpush1.bf16.msra.mxu0 0
      %648 = vmatprep.subr.bf16.mxu0 0
      %649 = vmatpush1.bf16.msra.mxu0 0
      %650 = vmatprep.subr.bf16.mxu0 0
      %651 = vmatpush1.bf16.msra.mxu0 0
      %652 = vmatprep.subr.bf16.mxu0 0
      %653 = vmatpush1.bf16.msra.mxu0 0
      %654 = vmatprep.subr.bf16.mxu0 0
      %655 = vmatpush1.bf16.msra.mxu0 0
      %656 = vmatprep.subr.bf16.mxu0 0
      %657 = vmatpush1.bf16.msra.mxu0 0
      %658 = vmatprep.subr.bf16.mxu0 0
      %659 = vmatpush1.bf16.msra.mxu0 0
      %660 = vmatprep.subr.bf16.mxu0 0
      %661 = vmatpush1.bf16.msra.mxu0 0
      %662 = vmatprep.subr.bf16.mxu0 0
      %663 = vmatpush1.bf16.msra.mxu0 0
      %664 = vmatprep.mubr.bf16.mxu0 0
      %665 = vmatmul.mubr.bf16.gmra.mrb[0].mxu0 %v526
      %v666 = vpop.f32.mrb[0].mxu0
      %v667 = vadd.f32 0.0, %v666
      %v668 = vpop.f32.mrb[0].mxu0
      %v669 = vpop.f32.mrb[0].mxu0
      %v670 = vpop.f32.mrb[0].mxu0
      %671 = vdwg.mxu0
      %v676 = vunpack.c.l.b16 %v509
      %v677 = vunpack.c.l.b16 %v510
      %v678 = vunpack.c.l.b16 %v511
      %v679 = vunpack.c.l.b16 %v512
      %v680 = vpack.c.b16 %v677, %v676
      %v681 = vpack.c.b16 %v679, %v678
      %684 = vmatprep.subr.bf16.mxu0 0
      %685 = vmatpush1.bf16.msra.mxu0 %v680
      %686 = vmatprep.subr.bf16.mxu0 0
      %687 = vmatpush1.bf16.msra.mxu0 %v681
      %688 = vmatprep.subr.bf16.mxu0 0
      %689 = vmatpush1.bf16.msra.mxu0 0
      %690 = vmatprep.subr.bf16.mxu0 0
      %691 = vmatpush1.bf16.msra.mxu0 0
      %692 = vmatprep.subr.bf16.mxu0 0
      %693 = vmatpush1.bf16.msra.mxu0 0
      %694 = vmatprep.subr.bf16.mxu0 0
      %695 = vmatpush1.bf16.msra.mxu0 0
      %696 = vmatprep.subr.bf16.mxu0 0
      %697 = vmatpush1.bf16.msra.mxu0 0
      %698 = vmatprep.subr.bf16.mxu0 0
      %699 = vmatpush1.bf16.msra.mxu0 0
      %700 = vmatprep.subr.bf16.mxu0 0
      %701 = vmatpush1.bf16.msra.mxu0 0
      %702 = vmatprep.subr.bf16.mxu0 0
      %703 = vmatpush1.bf16.msra.mxu0 0
      %704 = vmatprep.subr.bf16.mxu0 0
      %705 = vmatpush1.bf16.msra.mxu0 0
      %706 = vmatprep.subr.bf16.mxu0 0
      %707 = vmatpush1.bf16.msra.mxu0 0
      %708 = vmatprep.subr.bf16.mxu0 0
      %709 = vmatpush1.bf16.msra.mxu0 0
      %710 = vmatprep.subr.bf16.mxu0 0
      %711 = vmatpush1.bf16.msra.mxu0 0
      %712 = vmatprep.subr.bf16.mxu0 0
      %713 = vmatpush1.bf16.msra.mxu0 0
      %714 = vmatprep.subr.bf16.mxu0 0
      %715 = vmatpush1.bf16.msra.mxu0 0
      %716 = vmatprep.mubr.bf16.mxu0 0
      %717 = vmatmul.mubr.bf16.gmra.mrb[0].mxu0 %v526
      %v718 = vpop.f32.mrb[0].mxu0
      %v719 = vadd.f32 0.0, %v718
      %v720 = vpop.f32.mrb[0].mxu0
      %v721 = vpop.f32.mrb[0].mxu0
      %v722 = vpop.f32.mrb[0].mxu0
      %723 = vdwg.mxu0
      %v724 = vld [vmem:[%s4] sm:$0xf]
      %v725 = vld [vmem:[%s4 + $0x4] sm:$0xf]
      %v726 = vld [vmem:[%s4 + $0x8] sm:$0xf]
      %v727 = vld [vmem:[%s4 + $0xc] sm:$0xf]
      %v728 = vld [vmem:[%s4 + $0x10] sm:$0xf]
      %v729 = vld [vmem:[%s4 + $0x14] sm:$0xf]
      %v730 = vld [vmem:[%s4 + $0x18] sm:$0xf]
      %v731 = vld [vmem:[%s4 + $0x1c] sm:$0xf]
      %v732 = vld [vmem:[%s4 + $0x20] sm:$0xf]
      %v733 = vld [vmem:[%s4 + $0x24] sm:$0xf]
      %v734 = vld [vmem:[%s4 + $0x28] sm:$0xf]
      %v735 = vld [vmem:[%s4 + $0x2c] sm:$0xf]
      %v736 = vld [vmem:[%s4 + $0x30] sm:$0xf]
      %v737 = vld [vmem:[%s4 + $0x34] sm:$0xf]
      %v738 = vld [vmem:[%s4 + $0x38] sm:$0xf]
      %v739 = vld [vmem:[%s4 + $0x3c] sm:$0xf]
      %v744 = vunpack.c.l.b16 %v724
      %v745 = vunpack.c.l.b16 %v725
      %v746 = vunpack.c.l.b16 %v726
      %v747 = vunpack.c.l.b16 %v727
      %v748 = vpack.c.b16 %v745, %v744
      %v749 = vpack.c.b16 %v747, %v746
      %752 = vmatprep.subr.bf16.mxu0 0
      %753 = vmatpush1.bf16.msra.mxu0 %v748
      %754 = vmatprep.subr.bf16.mxu0 0
      %755 = vmatpush1.bf16.msra.mxu0 %v749
      %756 = vmatprep.subr.bf16.mxu0 0
      %757 = vmatpush1.bf16.msra.mxu0 0
      %758 = vmatprep.subr.bf16.mxu0 0
      %759 = vmatpush1.bf16.msra.mxu0 0
      %760 = vmatprep.subr.bf16.mxu0 0
      %761 = vmatpush1.bf16.msra.mxu0 0
      %762 = vmatprep.subr.bf16.mxu0 0
      %763 = vmatpush1.bf16.msra.mxu0 0
      %764 = vmatprep.subr.bf16.mxu0 0
      %765 = vmatpush1.bf16.msra.mxu0 0
      %766 = vmatprep.subr.bf16.mxu0 0
      %767 = vmatpush1.bf16.msra.mxu0 0
      %768 = vmatprep.subr.bf16.mxu0 0
      %769 = vmatpush1.bf16.msra.mxu0 0
      %770 = vmatprep.subr.bf16.mxu0 0
      %771 = vmatpush1.bf16.msra.mxu0 0
      %772 = vmatprep.subr.bf16.mxu0 0
      %773 = vmatpush1.bf16.msra.mxu0 0
      %774 = vmatprep.subr.bf16.mxu0 0
      %775 = vmatpush1.bf16.msra.mxu0 0
      %776 = vmatprep.subr.bf16.mxu0 0
      %777 = vmatpush1.bf16.msra.mxu0 0
      %778 = vmatprep.subr.bf16.mxu0 0
      %779 = vmatpush1.bf16.msra.mxu0 0
      %780 = vmatprep.subr.bf16.mxu0 0
      %781 = vmatpush1.bf16.msra.mxu0 0
      %782 = vmatprep.subr.bf16.mxu0 0
      %783 = vmatpush1.bf16.msra.mxu0 0
      %784 = vmatprep.mubr.bf16.mxu0 0
      %785 = vmatmul.mubr.bf16.gmra.mrb[0].mxu0 %v526
      %v786 = vpop.f32.mrb[0].mxu0
      %v787 = vadd.f32 0.0, %v786
      %v788 = vpop.f32.mrb[0].mxu0
      %v789 = vpop.f32.mrb[0].mxu0
      %v790 = vpop.f32.mrb[0].mxu0
      %791 = vdwg.mxu0
      %v796 = vunpack.c.l.b16 %v728
      %v797 = vunpack.c.l.b16 %v729
      %v798 = vunpack.c.l.b16 %v730
      %v799 = vunpack.c.l.b16 %v731
      %v800 = vpack.c.b16 %v797, %v796
      %v801 = vpack.c.b16 %v799, %v798
      %804 = vmatprep.subr.bf16.mxu0 0
      %805 = vmatpush1.bf16.msra.mxu0 %v800
      %806 = vmatprep.subr.bf16.mxu0 0
      %807 = vmatpush1.bf16.msra.mxu0 %v801
      %808 = vmatprep.subr.bf16.mxu0 0
      %809 = vmatpush1.bf16.msra.mxu0 0
      %810 = vmatprep.subr.bf16.mxu0 0
      %811 = vmatpush1.bf16.msra.mxu0 0
      %812 = vmatprep.subr.bf16.mxu0 0
      %813 = vmatpush1.bf16.msra.mxu0 0
      %814 = vmatprep.subr.bf16.mxu0 0
      %815 = vmatpush1.bf16.msra.mxu0 0
      %816 = vmatprep.subr.bf16.mxu0 0
      %817 = vmatpush1.bf16.msra.mxu0 0
      %818 = vmatprep.subr.bf16.mxu0 0
      %819 = vmatpush1.bf16.msra.mxu0 0
      %820 = vmatprep.subr.bf16.mxu0 0
      %821 = vmatpush1.bf16.msra.mxu0 0
      %822 = vmatprep.subr.bf16.mxu0 0
      %823 = vmatpush1.bf16.msra.mxu0 0
      %824 = vmatprep.subr.bf16.mxu0 0
      %825 = vmatpush1.bf16.msra.mxu0 0
      %826 = vmatprep.subr.bf16.mxu0 0
      %827 = vmatpush1.bf16.msra.mxu0 0
      %828 = vmatprep.subr.bf16.mxu0 0
      %829 = vmatpush1.bf16.msra.mxu0 0
      %830 = vmatprep.subr.bf16.mxu0 0
      %831 = vmatpush1.bf16.msra.mxu0 0
      %832 = vmatprep.subr.bf16.mxu0 0
      %833 = vmatpush1.bf16.msra.mxu0 0
      %834 = vmatprep.subr.bf16.mxu0 0
      %835 = vmatpush1.bf16.msra.mxu0 0
      %836 = vmatprep.mubr.bf16.mxu0 0
      %837 = vmatmul.mubr.bf16.gmra.mrb[0].mxu0 %v526
      %v838 = vpop.f32.mrb[0].mxu0
      %v839 = vadd.f32 0.0, %v838
      %v840 = vpop.f32.mrb[0].mxu0
      %v841 = vpop.f32.mrb[0].mxu0
      %v842 = vpop.f32.mrb[0].mxu0
      %843 = vdwg.mxu0
      %v848 = vunpack.c.l.b16 %v732
      %v849 = vunpack.c.l.b16 %v733
      %v850 = vunpack.c.l.b16 %v734
      %v851 = vunpack.c.l.b16 %v735
      %v852 = vpack.c.b16 %v849, %v848
      %v853 = vpack.c.b16 %v851, %v850
      %856 = vmatprep.subr.bf16.mxu0 0
      %857 = vmatpush1.bf16.msra.mxu0 %v852
      %858 = vmatprep.subr.bf16.mxu0 0
      %859 = vmatpush1.bf16.msra.mxu0 %v853
      %860 = vmatprep.subr.bf16.mxu0 0
      %861 = vmatpush1.bf16.msra.mxu0 0
      %862 = vmatprep.subr.bf16.mxu0 0
      %863 = vmatpush1.bf16.msra.mxu0 0
      %864 = vmatprep.subr.bf16.mxu0 0
      %865 = vmatpush1.bf16.msra.mxu0 0
      %866 = vmatprep.subr.bf16.mxu0 0
      %867 = vmatpush1.bf16.msra.mxu0 0
      %868 = vmatprep.subr.bf16.mxu0 0
      %869 = vmatpush1.bf16.msra.mxu0 0
      %870 = vmatprep.subr.bf16.mxu0 0
      %871 = vmatpush1.bf16.msra.mxu0 0
      %872 = vmatprep.subr.bf16.mxu0 0
      %873 = vmatpush1.bf16.msra.mxu0 0
      %874 = vmatprep.subr.bf16.mxu0 0
      %875 = vmatpush1.bf16.msra.mxu0 0
      %876 = vmatprep.subr.bf16.mxu0 0
      %877 = vmatpush1.bf16.msra.mxu0 0
      %878 = vmatprep.subr.bf16.mxu0 0
      %879 = vmatpush1.bf16.msra.mxu0 0
      %880 = vmatprep.subr.bf16.mxu0 0
      %881 = vmatpush1.bf16.msra.mxu0 0
      %882 = vmatprep.subr.bf16.mxu0 0
      %883 = vmatpush1.bf16.msra.mxu0 0
      %884 = vmatprep.subr.bf16.mxu0 0
      %885 = vmatpush1.bf16.msra.mxu0 0
      %886 = vmatprep.subr.bf16.mxu0 0
      %887 = vmatpush1.bf16.msra.mxu0 0
      %888 = vmatprep.mubr.bf16.mxu0 0
      %889 = vmatmul.mubr.bf16.gmra.mrb[0].mxu0 %v526
      %v890 = vpop.f32.mrb[0].mxu0
      %v891 = vadd.f32 0.0, %v890
      %v892 = vpop.f32.mrb[0].mxu0
      %v893 = vpop.f32.mrb[0].mxu0
      %v894 = vpop.f32.mrb[0].mxu0
      %895 = vdwg.mxu0
      %v900 = vunpack.c.l.b16 %v736
      %v901 = vunpack.c.l.b16 %v737
      %v902 = vunpack.c.l.b16 %v738
      %v903 = vunpack.c.l.b16 %v739
      %v904 = vpack.c.b16 %v901, %v900
      %v905 = vpack.c.b16 %v903, %v902
      %908 = vmatprep.subr.bf16.mxu0 0
      %909 = vmatpush1.bf16.msra.mxu0 %v904
      %910 = vmatprep.subr.bf16.mxu0 0
      %911 = vmatpush1.bf16.msra.mxu0 %v905
      %912 = vmatprep.subr.bf16.mxu0 0
      %913 = vmatpush1.bf16.msra.mxu0 0
      %914 = vmatprep.subr.bf16.mxu0 0
      %915 = vmatpush1.bf16.msra.mxu0 0
      %916 = vmatprep.subr.bf16.mxu0 0
      %917 = vmatpush1.bf16.msra.mxu0 0
      %918 = vmatprep.subr.bf16.mxu0 0
      %919 = vmatpush1.bf16.msra.mxu0 0
      %920 = vmatprep.subr.bf16.mxu0 0
      %921 = vmatpush1.bf16.msra.mxu0 0
      %922 = vmatprep.subr.bf16.mxu0 0
      %923 = vmatpush1.bf16.msra.mxu0 0
      %924 = vmatprep.subr.bf16.mxu0 0
      %925 = vmatpush1.bf16.msra.mxu0 0
      %926 = vmatprep.subr.bf16.mxu0 0
      %927 = vmatpush1.bf16.msra.mxu0 0
      %928 = vmatprep.subr.bf16.mxu0 0
      %929 = vmatpush1.bf16.msra.mxu0 0
      %930 = vmatprep.subr.bf16.mxu0 0
      %931 = vmatpush1.bf16.msra.mxu0 0
      %932 = vmatprep.subr.bf16.mxu0 0
      %933 = vmatpush1.bf16.msra.mxu0 0
      %934 = vmatprep.subr.bf16.mxu0 0
      %935 = vmatpush1.bf16.msra.mxu0 0
      %936 = vmatprep.subr.bf16.mxu0 0
      %937 = vmatpush1.bf16.msra.mxu0 0
      %938 = vmatprep.subr.bf16.mxu0 0
      %939 = vmatpush1.bf16.msra.mxu0 0
      %940 = vmatprep.mubr.bf16.mxu0 0
      %941 = vmatmul.mubr.bf16.gmra.mrb[0].mxu0 %v526
      %v942 = vpop.f32.mrb[0].mxu0
      %v943 = vadd.f32 0.0, %v942
      %v944 = vpop.f32.mrb[0].mxu0
      %v945 = vpop.f32.mrb[0].mxu0
      %v946 = vpop.f32.mrb[0].mxu0
      %947 = vdwg.mxu0
      %v948 = vld [vmem:[%s5] sm:$0xf]
      %v949 = vld [vmem:[%s5 + $0x4] sm:$0xf]
      %v950 = vld [vmem:[%s5 + $0x8] sm:$0xf]
      %v951 = vld [vmem:[%s5 + $0xc] sm:$0xf]
      %v952 = vld [vmem:[%s5 + $0x10] sm:$0xf]
      %v953 = vld [vmem:[%s5 + $0x14] sm:$0xf]
      %v954 = vld [vmem:[%s5 + $0x18] sm:$0xf]
      %v955 = vld [vmem:[%s5 + $0x1c] sm:$0xf]
      %v956 = vld [vmem:[%s5 + $0x20] sm:$0xf]
      %v957 = vld [vmem:[%s5 + $0x24] sm:$0xf]
      %v958 = vld [vmem:[%s5 + $0x28] sm:$0xf]
      %v959 = vld [vmem:[%s5 + $0x2c] sm:$0xf]
      %v960 = vld [vmem:[%s5 + $0x30] sm:$0xf]
      %v961 = vld [vmem:[%s5 + $0x34] sm:$0xf]
      %v962 = vld [vmem:[%s5 + $0x38] sm:$0xf]
      %v963 = vld [vmem:[%s5 + $0x3c] sm:$0xf]
      %v968 = vunpack.c.l.b16 %v948
      %v969 = vunpack.c.l.b16 %v949
      %v970 = vunpack.c.l.b16 %v950
      %v971 = vunpack.c.l.b16 %v951
      %v972 = vpack.c.b16 %v969, %v968
      %v973 = vpack.c.b16 %v971, %v970
      %976 = vmatprep.subr.bf16.mxu0 0
      %977 = vmatpush1.bf16.msra.mxu0 %v972
      %978 = vmatprep.subr.bf16.mxu0 0
      %979 = vmatpush1.bf16.msra.mxu0 %v973
      %980 = vmatprep.subr.bf16.mxu0 0
      %981 = vmatpush1.bf16.msra.mxu0 0
      %982 = vmatprep.subr.bf16.mxu0 0
      %983 = vmatpush1.bf16.msra.mxu0 0
      %984 = vmatprep.subr.bf16.mxu0 0
      %985 = vmatpush1.bf16.msra.mxu0 0
      %986 = vmatprep.subr.bf16.mxu0 0
      %987 = vmatpush1.bf16.msra.mxu0 0
      %988 = vmatprep.subr.bf16.mxu0 0
      %989 = vmatpush1.bf16.msra.mxu0 0
      %990 = vmatprep.subr.bf16.mxu0 0
      %991 = vmatpush1.bf16.msra.mxu0 0
      %992 = vmatprep.subr.bf16.mxu0 0
      %993 = vmatpush1.bf16.msra.mxu0 0
      %994 = vmatprep.subr.bf16.mxu0 0
      %995 = vmatpush1.bf16.msra.mxu0 0
      %996 = vmatprep.subr.bf16.mxu0 0
      %997 = vmatpush1.bf16.msra.mxu0 0
      %998 = vmatprep.subr.bf16.mxu0 0
      %999 = vmatpush1.bf16.msra.mxu0 0
      %1000 = vmatprep.subr.bf16.mxu0 0
      %1001 = vmatpush1.bf16.msra.mxu0 0
      %1002 = vmatprep.subr.bf16.mxu0 0
      %1003 = vmatpush1.bf16.msra.mxu0 0
      %1004 = vmatprep.subr.bf16.mxu0 0
      %1005 = vmatpush1.bf16.msra.mxu0 0
      %1006 = vmatprep.subr.bf16.mxu0 0
      %1007 = vmatpush1.bf16.msra.mxu0 0
      %1008 = vmatprep.mubr.bf16.mxu0 0
      %1009 = vmatmul.mubr.bf16.gmra.mrb[0].mxu0 %v526
      %v1010 = vpop.f32.mrb[0].mxu0
      %v1011 = vadd.f32 0.0, %v1010
      %v1012 = vpop.f32.mrb[0].mxu0
      %v1013 = vpop.f32.mrb[0].mxu0
      %v1014 = vpop.f32.mrb[0].mxu0
      %1015 = vdwg.mxu0
      %v1020 = vunpack.c.l.b16 %v952
      %v1021 = vunpack.c.l.b16 %v953
      %v1022 = vunpack.c.l.b16 %v954
      %v1023 = vunpack.c.l.b16 %v955
      %v1024 = vpack.c.b16 %v1021, %v1020
      %v1025 = vpack.c.b16 %v1023, %v1022
      %1028 = vmatprep.subr.bf16.mxu0 0
      %1029 = vmatpush1.bf16.msra.mxu0 %v1024
      %1030 = vmatprep.subr.bf16.mxu0 0
      %1031 = vmatpush1.bf16.msra.mxu0 %v1025
      %1032 = vmatprep.subr.bf16.mxu0 0
      %1033 = vmatpush1.bf16.msra.mxu0 0
      %1034 = vmatprep.subr.bf16.mxu0 0
      %1035 = vmatpush1.bf16.msra.mxu0 0
      %1036 = vmatprep.subr.bf16.mxu0 0
      %1037 = vmatpush1.bf16.msra.mxu0 0
      %1038 = vmatprep.subr.bf16.mxu0 0
      %1039 = vmatpush1.bf16.msra.mxu0 0
      %1040 = vmatprep.subr.bf16.mxu0 0
      %1041 = vmatpush1.bf16.msra.mxu0 0
      %1042 = vmatprep.subr.bf16.mxu0 0
      %1043 = vmatpush1.bf16.msra.mxu0 0
      %1044 = vmatprep.subr.bf16.mxu0 0
      %1045 = vmatpush1.bf16.msra.mxu0 0
      %1046 = vmatprep.subr.bf16.mxu0 0
      %1047 = vmatpush1.bf16.msra.mxu0 0
      %1048 = vmatprep.subr.bf16.mxu0 0
      %1049 = vmatpush1.bf16.msra.mxu0 0
      %1050 = vmatprep.subr.bf16.mxu0 0
      %1051 = vmatpush1.bf16.msra.mxu0 0
      %1052 = vmatprep.subr.bf16.mxu0 0
      %1053 = vmatpush1.bf16.msra.mxu0 0
      %1054 = vmatprep.subr.bf16.mxu0 0
      %1055 = vmatpush1.bf16.msra.mxu0 0
      %1056 = vmatprep.subr.bf16.mxu0 0
      %1057 = vmatpush1.bf16.msra.mxu0 0
      %1058 = vmatprep.subr.bf16.mxu0 0
      %1059 = vmatpush1.bf16.msra.mxu0 0
      %1060 = vmatprep.mubr.bf16.mxu0 0
      %1061 = vmatmul.mubr.bf16.gmra.mrb[0].mxu0 %v526
      %v1062 = vpop.f32.mrb[0].mxu0
      %v1063 = vadd.f32 0.0, %v1062
      %v1064 = vpop.f32.mrb[0].mxu0
      %v1065 = vpop.f32.mrb[0].mxu0
      %v1066 = vpop.f32.mrb[0].mxu0
      %1067 = vdwg.mxu0
      %v1072 = vunpack.c.l.b16 %v956
      %v1073 = vunpack.c.l.b16 %v957
      %v1074 = vunpack.c.l.b16 %v958
      %v1075 = vunpack.c.l.b16 %v959
      %v1076 = vpack.c.b16 %v1073, %v1072
      %v1077 = vpack.c.b16 %v1075, %v1074
      %1080 = vmatprep.subr.bf16.mxu0 0
      %1081 = vmatpush1.bf16.msra.mxu0 %v1076
      %1082 = vmatprep.subr.bf16.mxu0 0
      %1083 = vmatpush1.bf16.msra.mxu0 %v1077
      %1084 = vmatprep.subr.bf16.mxu0 0
      %1085 = vmatpush1.bf16.msra.mxu0 0
      %1086 = vmatprep.subr.bf16.mxu0 0
      %1087 = vmatpush1.bf16.msra.mxu0 0
      %1088 = vmatprep.subr.bf16.mxu0 0
      %1089 = vmatpush1.bf16.msra.mxu0 0
      %1090 = vmatprep.subr.bf16.mxu0 0
      %1091 = vmatpush1.bf16.msra.mxu0 0
      %1092 = vmatprep.subr.bf16.mxu0 0
      %1093 = vmatpush1.bf16.msra.mxu0 0
      %1094 = vmatprep.subr.bf16.mxu0 0
      %1095 = vmatpush1.bf16.msra.mxu0 0
      %1096 = vmatprep.subr.bf16.mxu0 0
      %1097 = vmatpush1.bf16.msra.mxu0 0
      %1098 = vmatprep.subr.bf16.mxu0 0
      %1099 = vmatpush1.bf16.msra.mxu0 0
      %1100 = vmatprep.subr.bf16.mxu0 0
      %1101 = vmatpush1.bf16.msra.mxu0 0
      %1102 = vmatprep.subr.bf16.mxu0 0
      %1103 = vmatpush1.bf16.msra.mxu0 0
      %1104 = vmatprep.subr.bf16.mxu0 0
      %1105 = vmatpush1.bf16.msra.mxu0 0
      %1106 = vmatprep.subr.bf16.mxu0 0
      %1107 = vmatpush1.bf16.msra.mxu0 0
      %1108 = vmatprep.subr.bf16.mxu0 0
      %1109 = vmatpush1.bf16.msra.mxu0 0
      %1110 = vmatprep.subr.bf16.mxu0 0
      %1111 = vmatpush1.bf16.msra.mxu0 0
      %1112 = vmatprep.mubr.bf16.mxu0 0
      %1113 = vmatmul.mubr.bf16.gmra.mrb[0].mxu0 %v526
      %v1114 = vpop.f32.mrb[0].mxu0
      %v1115 = vadd.f32 0.0, %v1114
      %v1116 = vpop.f32.mrb[0].mxu0
      %v1117 = vpop.f32.mrb[0].mxu0
      %v1118 = vpop.f32.mrb[0].mxu0
      %1119 = vdwg.mxu0
      %v1124 = vunpack.c.l.b16 %v960
      %v1125 = vunpack.c.l.b16 %v961
      %v1126 = vunpack.c.l.b16 %v962
      %v1127 = vunpack.c.l.b16 %v963
      %v1128 = vpack.c.b16 %v1125, %v1124
      %v1129 = vpack.c.b16 %v1127, %v1126
      %1132 = vmatprep.subr.bf16.mxu0 0
      %1133 = vmatpush1.bf16.msra.mxu0 %v1128
      %1134 = vmatprep.subr.bf16.mxu0 0
      %1135 = vmatpush1.bf16.msra.mxu0 %v1129
      %1136 = vmatprep.subr.bf16.mxu0 0
      %1137 = vmatpush1.bf16.msra.mxu0 0
      %1138 = vmatprep.subr.bf16.mxu0 0
      %1139 = vmatpush1.bf16.msra.mxu0 0
      %1140 = vmatprep.subr.bf16.mxu0 0
      %1141 = vmatpush1.bf16.msra.mxu0 0
      %1142 = vmatprep.subr.bf16.mxu0 0
      %1143 = vmatpush1.bf16.msra.mxu0 0
      %1144 = vmatprep.subr.bf16.mxu0 0
      %1145 = vmatpush1.bf16.msra.mxu0 0
      %1146 = vmatprep.subr.bf16.mxu0 0
      %1147 = vmatpush1.bf16.msra.mxu0 0
      %1148 = vmatprep.subr.bf16.mxu0 0
      %1149 = vmatpush1.bf16.msra.mxu0 0
      %1150 = vmatprep.subr.bf16.mxu0 0
      %1151 = vmatpush1.bf16.msra.mxu0 0
      %1152 = vmatprep.subr.bf16.mxu0 0
      %1153 = vmatpush1.bf16.msra.mxu0 0
      %1154 = vmatprep.subr.bf16.mxu0 0
      %1155 = vmatpush1.bf16.msra.mxu0 0
      %1156 = vmatprep.subr.bf16.mxu0 0
      %1157 = vmatpush1.bf16.msra.mxu0 0
      %1158 = vmatprep.subr.bf16.mxu0 0
      %1159 = vmatpush1.bf16.msra.mxu0 0
      %1160 = vmatprep.subr.bf16.mxu0 0
      %1161 = vmatpush1.bf16.msra.mxu0 0
      %1162 = vmatprep.subr.bf16.mxu0 0
      %1163 = vmatpush1.bf16.msra.mxu0 0
      %1164 = vmatprep.mubr.bf16.mxu0 0
      %1165 = vmatmul.mubr.bf16.gmra.mrb[0].mxu0 %v526
      %v1166 = vpop.f32.mrb[0].mxu0
      %v1167 = vadd.f32 0.0, %v1166
      %v1168 = vpop.f32.mrb[0].mxu0
      %v1169 = vpop.f32.mrb[0].mxu0
      %v1170 = vpop.f32.mrb[0].mxu0
      %1171 = vdwg.mxu0
      %v1172 = vpack.c.bf16 %v563, %v563
      %v1173 = vpack.c.bf16 %v615, %v615
      %v1174 = vpack.c.bf16 %v667, %v667
      %v1175 = vpack.c.bf16 %v719, %v719
      %v1176 = vpack.c.bf16 %v787, %v787
      %v1177 = vpack.c.bf16 %v839, %v839
      %v1178 = vpack.c.bf16 %v891, %v891
      %v1179 = vpack.c.bf16 %v943, %v943
      %vm1180 = vcmask 64512
      %v1182 = vsel %vm1180, %v1172, 0
      %v1185 = vsel %vm1180, %v1176, 0
      %1187 = vmatprep.subr.bf16.mxu0 0
      %1188 = vmatpush1.bf16.xpose.msra.mxu0 %v1185
      %1189 = vmatprep.subr.bf16.mxu0 0
      %1190 = vmatpush1.bf16.xpose.msra.mxu0 0
      %1191 = vmatprep.subr.bf16.mxu0 0
      %1192 = vmatpush1.bf16.xpose.msra.mxu0 0
      %1193 = vmatprep.subr.bf16.mxu0 0
      %1194 = vmatpush1.bf16.xpose.msra.mxu0 0
      %1195 = vmatprep.subr.bf16.mxu0 0
      %1196 = vmatpush1.bf16.xpose.msra.mxu0 0
      %1197 = vmatprep.subr.bf16.mxu0 0
      %1198 = vmatpush1.bf16.xpose.msra.mxu0 0
      %1199 = vmatprep.subr.bf16.mxu0 0
      %1200 = vmatpush1.bf16.xpose.msra.mxu0 0
      %1201 = vmatprep.subr.bf16.mxu0 0
      %1202 = vmatpush1.bf16.xpose.msra.mxu0 0
      %1203 = vmatprep.subr.bf16.mxu0 0
      %1204 = vmatpush1.bf16.xpose.msra.mxu0 0
      %1205 = vmatprep.subr.bf16.mxu0 0
      %1206 = vmatpush1.bf16.xpose.msra.mxu0 0
      %1207 = vmatprep.subr.bf16.mxu0 0
      %1208 = vmatpush1.bf16.xpose.msra.mxu0 0
      %1209 = vmatprep.subr.bf16.mxu0 0
      %1210 = vmatpush1.bf16.xpose.msra.mxu0 0
      %1211 = vmatprep.subr.bf16.mxu0 0
      %1212 = vmatpush1.bf16.xpose.msra.mxu0 0
      %1213 = vmatprep.subr.bf16.mxu0 0
      %1214 = vmatpush1.bf16.xpose.msra.mxu0 0
      %1215 = vmatprep.subr.bf16.mxu0 0
      %1216 = vmatpush1.bf16.xpose.msra.mxu0 0
      %1217 = vmatprep.subr.bf16.mxu0 0
      %1218 = vmatpush1.bf16.xpose.msra.mxu0 0
      %1219 = vmatprep.mubr.bf16.mxu0 0
      %1220 = vmatmul.mubr.bf16.gmra.mrb[0].mxu0 %v1182
      %v1221 = vpop.f32.mrb[0].mxu0
      %v1222 = vadd.f32 0.0, %v1221
      %v1223 = vpop.f32.mrb[0].mxu0
      %v1224 = vpop.f32.mrb[0].mxu0
      %v1225 = vpop.f32.mrb[0].mxu0
      %1226 = vdwg.mxu0
      %v1228 = vsel %vm1180, %v1173, 0
      %v1231 = vsel %vm1180, %v1177, 0
      %1233 = vmatprep.subr.bf16.mxu0 0
      %1234 = vmatpush1.bf16.xpose.msra.mxu0 %v1231
      %1235 = vmatprep.subr.bf16.mxu0 0
      %1236 = vmatpush1.bf16.xpose.msra.mxu0 0
      %1237 = vmatprep.subr.bf16.mxu0 0
      %1238 = vmatpush1.bf16.xpose.msra.mxu0 0
      %1239 = vmatprep.subr.bf16.mxu0 0
      %1240 = vmatpush1.bf16.xpose.msra.mxu0 0
      %1241 = vmatprep.subr.bf16.mxu0 0
      %1242 = vmatpush1.bf16.xpose.msra.mxu0 0
      %1243 = vmatprep.subr.bf16.mxu0 0
      %1244 = vmatpush1.bf16.xpose.msra.mxu0 0
      %1245 = vmatprep.subr.bf16.mxu0 0
      %1246 = vmatpush1.bf16.xpose.msra.mxu0 0
      %1247 = vmatprep.subr.bf16.mxu0 0
      %1248 = vmatpush1.bf16.xpose.msra.mxu0 0
      %1249 = vmatprep.subr.bf16.mxu0 0
      %1250 = vmatpush1.bf16.xpose.msra.mxu0 0
      %1251 = vmatprep.subr.bf16.mxu0 0
      %1252 = vmatpush1.bf16.xpose.msra.mxu0 0
      %1253 = vmatprep.subr.bf16.mxu0 0
      %1254 = vmatpush1.bf16.xpose.msra.mxu0 0
      %1255 = vmatprep.subr.bf16.mxu0 0
      %1256 = vmatpush1.bf16.xpose.msra.mxu0 0
      %1257 = vmatprep.subr.bf16.mxu0 0
      %1258 = vmatpush1.bf16.xpose.msra.mxu0 0
      %1259 = vmatprep.subr.bf16.mxu0 0
      %1260 = vmatpush1.bf16.xpose.msra.mxu0 0
      %1261 = vmatprep.subr.bf16.mxu0 0
      %1262 = vmatpush1.bf16.xpose.msra.mxu0 0
      %1263 = vmatprep.subr.bf16.mxu0 0
      %1264 = vmatpush1.bf16.xpose.msra.mxu0 0
      %1265 = vmatprep.mubr.bf16.mxu0 0
      %1266 = vmatmul.mubr.bf16.gmra.mrb[0].mxu0 %v1228
      %v1267 = vpop.f32.mrb[0].mxu0
      %v1268 = vadd.f32 0.0, %v1267
      %v1269 = vpop.f32.mrb[0].mxu0
      %v1270 = vpop.f32.mrb[0].mxu0
      %v1271 = vpop.f32.mrb[0].mxu0
      %1272 = vdwg.mxu0
      %v1274 = vsel %vm1180, %v1174, 0
      %v1277 = vsel %vm1180, %v1178, 0
      %1279 = vmatprep.subr.bf16.mxu0 0
      %1280 = vmatpush1.bf16.xpose.msra.mxu0 %v1277
      %1281 = vmatprep.subr.bf16.mxu0 0
      %1282 = vmatpush1.bf16.xpose.msra.mxu0 0
      %1283 = vmatprep.subr.bf16.mxu0 0
      %1284 = vmatpush1.bf16.xpose.msra.mxu0 0
      %1285 = vmatprep.subr.bf16.mxu0 0
      %1286 = vmatpush1.bf16.xpose.msra.mxu0 0
      %1287 = vmatprep.subr.bf16.mxu0 0
      %1288 = vmatpush1.bf16.xpose.msra.mxu0 0
      %1289 = vmatprep.subr.bf16.mxu0 0
      %1290 = vmatpush1.bf16.xpose.msra.mxu0 0
      %1291 = vmatprep.subr.bf16.mxu0 0
      %1292 = vmatpush1.bf16.xpose.msra.mxu0 0
      %1293 = vmatprep.subr.bf16.mxu0 0
      %1294 = vmatpush1.bf16.xpose.msra.mxu0 0
      %1295 = vmatprep.subr.bf16.mxu0 0
      %1296 = vmatpush1.bf16.xpose.msra.mxu0 0
      %1297 = vmatprep.subr.bf16.mxu0 0
      %1298 = vmatpush1.bf16.xpose.msra.mxu0 0
      %1299 = vmatprep.subr.bf16.mxu0 0
      %1300 = vmatpush1.bf16.xpose.msra.mxu0 0
      %1301 = vmatprep.subr.bf16.mxu0 0
      %1302 = vmatpush1.bf16.xpose.msra.mxu0 0
      %1303 = vmatprep.subr.bf16.mxu0 0
      %1304 = vmatpush1.bf16.xpose.msra.mxu0 0
      %1305 = vmatprep.subr.bf16.mxu0 0
      %1306 = vmatpush1.bf16.xpose.msra.mxu0 0
      %1307 = vmatprep.subr.bf16.mxu0 0
      %1308 = vmatpush1.bf16.xpose.msra.mxu0 0
      %1309 = vmatprep.subr.bf16.mxu0 0
      %1310 = vmatpush1.bf16.xpose.msra.mxu0 0
      %1311 = vmatprep.mubr.bf16.mxu0 0
      %1312 = vmatmul.mubr.bf16.gmra.mrb[0].mxu0 %v1274
      %v1313 = vpop.f32.mrb[0].mxu0
      %v1314 = vadd.f32 0.0, %v1313
      %v1315 = vpop.f32.mrb[0].mxu0
      %v1316 = vpop.f32.mrb[0].mxu0
      %v1317 = vpop.f32.mrb[0].mxu0
      %1318 = vdwg.mxu0
      %v1320 = vsel %vm1180, %v1175, 0
      %v1323 = vsel %vm1180, %v1179, 0
      %1325 = vmatprep.subr.bf16.mxu0 0
      %1326 = vmatpush1.bf16.xpose.msra.mxu0 %v1323
      %1327 = vmatprep.subr.bf16.mxu0 0
      %1328 = vmatpush1.bf16.xpose.msra.mxu0 0
      %1329 = vmatprep.subr.bf16.mxu0 0
      %1330 = vmatpush1.bf16.xpose.msra.mxu0 0
      %1331 = vmatprep.subr.bf16.mxu0 0
      %1332 = vmatpush1.bf16.xpose.msra.mxu0 0
      %1333 = vmatprep.subr.bf16.mxu0 0
      %1334 = vmatpush1.bf16.xpose.msra.mxu0 0
      %1335 = vmatprep.subr.bf16.mxu0 0
      %1336 = vmatpush1.bf16.xpose.msra.mxu0 0
      %1337 = vmatprep.subr.bf16.mxu0 0
      %1338 = vmatpush1.bf16.xpose.msra.mxu0 0
      %1339 = vmatprep.subr.bf16.mxu0 0
      %1340 = vmatpush1.bf16.xpose.msra.mxu0 0
      %1341 = vmatprep.subr.bf16.mxu0 0
      %1342 = vmatpush1.bf16.xpose.msra.mxu0 0
      %1343 = vmatprep.subr.bf16.mxu0 0
      %1344 = vmatpush1.bf16.xpose.msra.mxu0 0
      %1345 = vmatprep.subr.bf16.mxu0 0
      %1346 = vmatpush1.bf16.xpose.msra.mxu0 0
      %1347 = vmatprep.subr.bf16.mxu0 0
      %1348 = vmatpush1.bf16.xpose.msra.mxu0 0
      %1349 = vmatprep.subr.bf16.mxu0 0
      %1350 = vmatpush1.bf16.xpose.msra.mxu0 0
      %1351 = vmatprep.subr.bf16.mxu0 0
      %1352 = vmatpush1.bf16.xpose.msra.mxu0 0
      %1353 = vmatprep.subr.bf16.mxu0 0
      %1354 = vmatpush1.bf16.xpose.msra.mxu0 0
      %1355 = vmatprep.subr.bf16.mxu0 0
      %1356 = vmatpush1.bf16.xpose.msra.mxu0 0
      %1357 = vmatprep.mubr.bf16.mxu0 0
      %1358 = vmatmul.mubr.bf16.gmra.mrb[0].mxu0 %v1320
      %v1359 = vpop.f32.mrb[0].mxu0
      %v1360 = vadd.f32 0.0, %v1359
      %v1361 = vpop.f32.mrb[0].mxu0
      %v1362 = vpop.f32.mrb[0].mxu0
      %v1363 = vpop.f32.mrb[0].mxu0
      %1364 = vdwg.mxu0
      %v1365 = vsel %vm1180, %v1222, -inf
      %1366 = vmax.xlane.f32.xlu0 %v1365
      %v1367 = vpop.xlane.xlu0 %1366
      %v1368 = vsel %vm1180, %v1268, -inf
      %1369 = vmax.xlane.f32.xlu0 %v1368
      %v1370 = vpop.xlane.xlu0 %1369
      %v1371 = vsel %vm1180, %v1314, -inf
      %1372 = vmax.xlane.f32.xlu0 %v1371
      %v1373 = vpop.xlane.xlu0 %1372
      %v1374 = vsel %vm1180, %v1360, -inf
      %1375 = vmax.xlane.f32.xlu0 %v1374
      %v1376 = vpop.xlane.xlu0 %1375
      %v1377 = vsub.f32 %v1222, %v1367
      %v1378 = vsub.f32 %v1268, %v1370
      %v1379 = vsub.f32 %v1314, %v1373
      %v1380 = vsub.f32 %v1360, %v1376
      %v1381 = vmul.f32 %v1377, 1.442695
      %v1382 = vpow.pop %v1381
      %v1383 = vmul.f32 %v1378, 1.442695
      %v1384 = vpow.pop %v1383
      %v1385 = vmul.f32 %v1379, 1.442695
      %v1386 = vpow.pop %v1385
      %v1387 = vmul.f32 %v1380, 1.442695
      %v1388 = vpow.pop %v1387
      %v1389 = vsel %vm1180, %v1382, 0.0
      %1390 = vadd.xlane.f32.xlu0 %v1389
      %v1391 = vpop.xlane.xlu0 %1390
      %v1392 = vsel %vm1180, %v1384, 0.0
      %1393 = vadd.xlane.f32.xlu0 %v1392
      %v1394 = vpop.xlane.xlu0 %1393
      %v1395 = vsel %vm1180, %v1386, 0.0
      %1396 = vadd.xlane.f32.xlu0 %v1395
      %v1397 = vpop.xlane.xlu0 %1396
      %v1398 = vsel %vm1180, %v1388, 0.0
      %1399 = vadd.xlane.f32.xlu0 %v1398
      %v1400 = vpop.xlane.xlu0 %1399
      %v1401 = vrcp.pop %v1391
      %v1402 = vmul.f32 %v1382, %v1401
      %v1403 = vrcp.pop %v1394
      %v1404 = vmul.f32 %v1384, %v1403
      %v1405 = vrcp.pop %v1397
      %v1406 = vmul.f32 %v1386, %v1405
      %v1407 = vrcp.pop %v1400
      %v1408 = vmul.f32 %v1388, %v1407
      %v1409 = vpack.c.bf16 %v1402, %v1402
      %v1410 = vpack.c.bf16 %v1404, %v1404
      %v1411 = vpack.c.bf16 %v1406, %v1406
      %v1412 = vpack.c.bf16 %v1408, %v1408
      %v1413 = vpack.c.bf16 %v1011, %v1011
      %v1414 = vpack.c.bf16 %v1063, %v1063
      %v1415 = vpack.c.bf16 %v1115, %v1115
      %v1416 = vpack.c.bf16 %v1167, %v1167
      %v1418 = vsel %vm1180, %v1409, 0
      %vm1420 = vcmask 1043456
      %v1422 = vsel %vm1420, %v1413, 0
      %1424 = vmatprep.subr.bf16.mxu0 0
      %1425 = vmatpush1.bf16.msra.mxu0 %v1422
      %1426 = vmatprep.subr.bf16.mxu0 0
      %1427 = vmatpush1.bf16.msra.mxu0 0
      %1428 = vmatprep.subr.bf16.mxu0 0
      %1429 = vmatpush1.bf16.msra.mxu0 0
      %1430 = vmatprep.subr.bf16.mxu0 0
      %1431 = vmatpush1.bf16.msra.mxu0 0
      %1432 = vmatprep.subr.bf16.mxu0 0
      %1433 = vmatpush1.bf16.msra.mxu0 0
      %1434 = vmatprep.subr.bf16.mxu0 0
      %1435 = vmatpush1.bf16.msra.mxu0 0
      %1436 = vmatprep.subr.bf16.mxu0 0
      %1437 = vmatpush1.bf16.msra.mxu0 0
      %1438 = vmatprep.subr.bf16.mxu0 0
      %1439 = vmatpush1.bf16.msra.mxu0 0
      %1440 = vmatprep.subr.bf16.mxu0 0
      %1441 = vmatpush1.bf16.msra.mxu0 0
      %1442 = vmatprep.subr.bf16.mxu0 0
      %1443 = vmatpush1.bf16.msra.mxu0 0
      %1444 = vmatprep.subr.bf16.mxu0 0
      %1445 = vmatpush1.bf16.msra.mxu0 0
      %1446 = vmatprep.subr.bf16.mxu0 0
      %1447 = vmatpush1.bf16.msra.mxu0 0
      %1448 = vmatprep.subr.bf16.mxu0 0
      %1449 = vmatpush1.bf16.msra.mxu0 0
      %1450 = vmatprep.subr.bf16.mxu0 0
      %1451 = vmatpush1.bf16.msra.mxu0 0
      %1452 = vmatprep.subr.bf16.mxu0 0
      %1453 = vmatpush1.bf16.msra.mxu0 0
      %1454 = vmatprep.subr.bf16.mxu0 0
      %1455 = vmatpush1.bf16.msra.mxu0 0
      %1456 = vmatprep.mubr.bf16.mxu0 0
      %1457 = vmatmul.mubr.bf16.gmra.mrb[0].mxu0 %v1418
      %v1458 = vpop.f32.mrb[0].mxu0
      %v1459 = vadd.f32 0.0, %v1458
      %v1460 = vpop.f32.mrb[0].mxu0
      %v1461 = vpop.f32.mrb[0].mxu0
      %v1462 = vpop.f32.mrb[0].mxu0
      %1463 = vdwg.mxu0
      %v1465 = vsel %vm1180, %v1410, 0
      %v1468 = vsel %vm1420, %v1414, 0
      %1470 = vmatprep.subr.bf16.mxu0 0
      %1471 = vmatpush1.bf16.msra.mxu0 %v1468
      %1472 = vmatprep.subr.bf16.mxu0 0
      %1473 = vmatpush1.bf16.msra.mxu0 0
      %1474 = vmatprep.subr.bf16.mxu0 0
      %1475 = vmatpush1.bf16.msra.mxu0 0
      %1476 = vmatprep.subr.bf16.mxu0 0
      %1477 = vmatpush1.bf16.msra.mxu0 0
      %1478 = vmatprep.subr.bf16.mxu0 0
      %1479 = vmatpush1.bf16.msra.mxu0 0
      %1480 = vmatprep.subr.bf16.mxu0 0
      %1481 = vmatpush1.bf16.msra.mxu0 0
      %1482 = vmatprep.subr.bf16.mxu0 0
      %1483 = vmatpush1.bf16.msra.mxu0 0
      %1484 = vmatprep.subr.bf16.mxu0 0
      %1485 = vmatpush1.bf16.msra.mxu0 0
      %1486 = vmatprep.subr.bf16.mxu0 0
      %1487 = vmatpush1.bf16.msra.mxu0 0
      %1488 = vmatprep.subr.bf16.mxu0 0
      %1489 = vmatpush1.bf16.msra.mxu0 0
      %1490 = vmatprep.subr.bf16.mxu0 0
      %1491 = vmatpush1.bf16.msra.mxu0 0
      %1492 = vmatprep.subr.bf16.mxu0 0
      %1493 = vmatpush1.bf16.msra.mxu0 0
      %1494 = vmatprep.subr.bf16.mxu0 0
      %1495 = vmatpush1.bf16.msra.mxu0 0
      %1496 = vmatprep.subr.bf16.mxu0 0
      %1497 = vmatpush1.bf16.msra.mxu0 0
      %1498 = vmatprep.subr.bf16.mxu0 0
      %1499 = vmatpush1.bf16.msra.mxu0 0
      %1500 = vmatprep.subr.bf16.mxu0 0
      %1501 = vmatpush1.bf16.msra.mxu0 0
      %1502 = vmatprep.mubr.bf16.mxu0 0
      %1503 = vmatmul.mubr.bf16.gmra.mrb[0].mxu0 %v1465
      %v1504 = vpop.f32.mrb[0].mxu0
      %v1505 = vadd.f32 0.0, %v1504
      %v1506 = vpop.f32.mrb[0].mxu0
      %v1507 = vpop.f32.mrb[0].mxu0
      %v1508 = vpop.f32.mrb[0].mxu0
      %1509 = vdwg.mxu0
      %v1511 = vsel %vm1180, %v1411, 0
      %v1514 = vsel %vm1420, %v1415, 0
      %1516 = vmatprep.subr.bf16.mxu0 0
      %1517 = vmatpush1.bf16.msra.mxu0 %v1514
      %1518 = vmatprep.subr.bf16.mxu0 0
      %1519 = vmatpush1.bf16.msra.mxu0 0
      %1520 = vmatprep.subr.bf16.mxu0 0
      %1521 = vmatpush1.bf16.msra.mxu0 0
      %1522 = vmatprep.subr.bf16.mxu0 0
      %1523 = vmatpush1.bf16.msra.mxu0 0
      %1524 = vmatprep.subr.bf16.mxu0 0
      %1525 = vmatpush1.bf16.msra.mxu0 0
      %1526 = vmatprep.subr.bf16.mxu0 0
      %1527 = vmatpush1.bf16.msra.mxu0 0
      %1528 = vmatprep.subr.bf16.mxu0 0
      %1529 = vmatpush1.bf16.msra.mxu0 0
      %1530 = vmatprep.subr.bf16.mxu0 0
      %1531 = vmatpush1.bf16.msra.mxu0 0
      %1532 = vmatprep.subr.bf16.mxu0 0
      %1533 = vmatpush1.bf16.msra.mxu0 0
      %1534 = vmatprep.subr.bf16.mxu0 0
      %1535 = vmatpush1.bf16.msra.mxu0 0
      %1536 = vmatprep.subr.bf16.mxu0 0
      %1537 = vmatpush1.bf16.msra.mxu0 0
      %1538 = vmatprep.subr.bf16.mxu0 0
      %1539 = vmatpush1.bf16.msra.mxu0 0
      %1540 = vmatprep.subr.bf16.mxu0 0
      %1541 = vmatpush1.bf16.msra.mxu0 0
      %1542 = vmatprep.subr.bf16.mxu0 0
      %1543 = vmatpush1.bf16.msra.mxu0 0
      %1544 = vmatprep.subr.bf16.mxu0 0
      %1545 = vmatpush1.bf16.msra.mxu0 0
      %1546 = vmatprep.subr.bf16.mxu0 0
      %1547 = vmatpush1.bf16.msra.mxu0 0
      %1548 = vmatprep.mubr.bf16.mxu0 0
      %1549 = vmatmul.mubr.bf16.gmra.mrb[0].mxu0 %v1511
      %v1550 = vpop.f32.mrb[0].mxu0
      %v1551 = vadd.f32 0.0, %v1550
      %v1552 = vpop.f32.mrb[0].mxu0
      %v1553 = vpop.f32.mrb[0].mxu0
      %v1554 = vpop.f32.mrb[0].mxu0
      %1555 = vdwg.mxu0
      %v1557 = vsel %vm1180, %v1412, 0
      %v1560 = vsel %vm1420, %v1416, 0
      %1562 = vmatprep.subr.bf16.mxu0 0
      %1563 = vmatpush1.bf16.msra.mxu0 %v1560
      %1564 = vmatprep.subr.bf16.mxu0 0
      %1565 = vmatpush1.bf16.msra.mxu0 0
      %1566 = vmatprep.subr.bf16.mxu0 0
      %1567 = vmatpush1.bf16.msra.mxu0 0
      %1568 = vmatprep.subr.bf16.mxu0 0
      %1569 = vmatpush1.bf16.msra.mxu0 0
      %1570 = vmatprep.subr.bf16.mxu0 0
      %1571 = vmatpush1.bf16.msra.mxu0 0
      %1572 = vmatprep.subr.bf16.mxu0 0
      %1573 = vmatpush1.bf16.msra.mxu0 0
      %1574 = vmatprep.subr.bf16.mxu0 0
      %1575 = vmatpush1.bf16.msra.mxu0 0
      %1576 = vmatprep.subr.bf16.mxu0 0
      %1577 = vmatpush1.bf16.msra.mxu0 0
      %1578 = vmatprep.subr.bf16.mxu0 0
      %1579 = vmatpush1.bf16.msra.mxu0 0
      %1580 = vmatprep.subr.bf16.mxu0 0
      %1581 = vmatpush1.bf16.msra.mxu0 0
      %1582 = vmatprep.subr.bf16.mxu0 0
      %1583 = vmatpush1.bf16.msra.mxu0 0
      %1584 = vmatprep.subr.bf16.mxu0 0
      %1585 = vmatpush1.bf16.msra.mxu0 0
      %1586 = vmatprep.subr.bf16.mxu0 0
      %1587 = vmatpush1.bf16.msra.mxu0 0
      %1588 = vmatprep.subr.bf16.mxu0 0
      %1589 = vmatpush1.bf16.msra.mxu0 0
      %1590 = vmatprep.subr.bf16.mxu0 0
      %1591 = vmatpush1.bf16.msra.mxu0 0
      %1592 = vmatprep.subr.bf16.mxu0 0
      %1593 = vmatpush1.bf16.msra.mxu0 0
      %1594 = vmatprep.mubr.bf16.mxu0 0
      %1595 = vmatmul.mubr.bf16.gmra.mrb[0].mxu0 %v1557
      %v1596 = vpop.f32.mrb[0].mxu0
      %v1597 = vadd.f32 0.0, %v1596
      %v1598 = vpop.f32.mrb[0].mxu0
      %v1599 = vpop.f32.mrb[0].mxu0
      %v1600 = vpop.f32.mrb[0].mxu0
      %1601 = vdwg.mxu0
      %v1602 = vpack.c.bf16 %v1459, %v1459
      %v1603 = vpack.c.bf16 %v1505, %v1505
      %v1604 = vpack.c.bf16 %v1551, %v1551
      %v1605 = vpack.c.bf16 %v1597, %v1597
      %v1606 = vld [vmem:[%s6] sm:$0xf]
      %v1607 = vld [vmem:[%s6 + $0x4] sm:$0xf]
      %v1608 = vld [vmem:[%s6 + $0x8] sm:$0xf]
      %v1609 = vld [vmem:[%s6 + $0xc] sm:$0xf]
      %v1611 = vsel %vm1180, %v1602, 0
      %v1614 = vsel %vm1420, %v1606, 0
      %1616 = vmatprep.subr.bf16.mxu0 0
      %1617 = vmatpush1.bf16.msra.mxu0 %v1614
      %1618 = vmatprep.subr.bf16.mxu0 0
      %1619 = vmatpush1.bf16.msra.mxu0 0
      %1620 = vmatprep.subr.bf16.mxu0 0
      %1621 = vmatpush1.bf16.msra.mxu0 0
      %1622 = vmatprep.subr.bf16.mxu0 0
      %1623 = vmatpush1.bf16.msra.mxu0 0
      %1624 = vmatprep.subr.bf16.mxu0 0
      %1625 = vmatpush1.bf16.msra.mxu0 0
      %1626 = vmatprep.subr.bf16.mxu0 0
      %1627 = vmatpush1.bf16.msra.mxu0 0
      %1628 = vmatprep.subr.bf16.mxu0 0
      %1629 = vmatpush1.bf16.msra.mxu0 0
      %1630 = vmatprep.subr.bf16.mxu0 0
      %1631 = vmatpush1.bf16.msra.mxu0 0
      %1632 = vmatprep.subr.bf16.mxu0 0
      %1633 = vmatpush1.bf16.msra.mxu0 0
      %1634 = vmatprep.subr.bf16.mxu0 0
      %1635 = vmatpush1.bf16.msra.mxu0 0
      %1636 = vmatprep.subr.bf16.mxu0 0
      %1637 = vmatpush1.bf16.msra.mxu0 0
      %1638 = vmatprep.subr.bf16.mxu0 0
      %1639 = vmatpush1.bf16.msra.mxu0 0
      %1640 = vmatprep.subr.bf16.mxu0 0
      %1641 = vmatpush1.bf16.msra.mxu0 0
      %1642 = vmatprep.subr.bf16.mxu0 0
      %1643 = vmatpush1.bf16.msra.mxu0 0
      %1644 = vmatprep.subr.bf16.mxu0 0
      %1645 = vmatpush1.bf16.msra.mxu0 0
      %1646 = vmatprep.subr.bf16.mxu0 0
      %1647 = vmatpush1.bf16.msra.mxu0 0
      %1648 = vmatprep.mubr.bf16.mxu0 0
      %1649 = vmatmul.mubr.bf16.gmra.mrb[0].mxu0 %v1611
      %v1650 = vpop.f32.mrb[0].mxu0
      %v1651 = vadd.f32 0.0, %v1650
      %v1652 = vpop.f32.mrb[0].mxu0
      %v1653 = vpop.f32.mrb[0].mxu0
      %v1654 = vpop.f32.mrb[0].mxu0
      %1655 = vdwg.mxu0
      %v1657 = vsel %vm1180, %v1603, 0
      %v1660 = vsel %vm1420, %v1607, 0
      %1662 = vmatprep.subr.bf16.mxu0 0
      %1663 = vmatpush1.bf16.msra.mxu0 %v1660
      %1664 = vmatprep.subr.bf16.mxu0 0
      %1665 = vmatpush1.bf16.msra.mxu0 0
      %1666 = vmatprep.subr.bf16.mxu0 0
      %1667 = vmatpush1.bf16.msra.mxu0 0
      %1668 = vmatprep.subr.bf16.mxu0 0
      %1669 = vmatpush1.bf16.msra.mxu0 0
      %1670 = vmatprep.subr.bf16.mxu0 0
      %1671 = vmatpush1.bf16.msra.mxu0 0
      %1672 = vmatprep.subr.bf16.mxu0 0
      %1673 = vmatpush1.bf16.msra.mxu0 0
      %1674 = vmatprep.subr.bf16.mxu0 0
      %1675 = vmatpush1.bf16.msra.mxu0 0
      %1676 = vmatprep.subr.bf16.mxu0 0
      %1677 = vmatpush1.bf16.msra.mxu0 0
      %1678 = vmatprep.subr.bf16.mxu0 0
      %1679 = vmatpush1.bf16.msra.mxu0 0
      %1680 = vmatprep.subr.bf16.mxu0 0
      %1681 = vmatpush1.bf16.msra.mxu0 0
      %1682 = vmatprep.subr.bf16.mxu0 0
      %1683 = vmatpush1.bf16.msra.mxu0 0
      %1684 = vmatprep.subr.bf16.mxu0 0
      %1685 = vmatpush1.bf16.msra.mxu0 0
      %1686 = vmatprep.subr.bf16.mxu0 0
      %1687 = vmatpush1.bf16.msra.mxu0 0
      %1688 = vmatprep.subr.bf16.mxu0 0
      %1689 = vmatpush1.bf16.msra.mxu0 0
      %1690 = vmatprep.subr.bf16.mxu0 0
      %1691 = vmatpush1.bf16.msra.mxu0 0
      %1692 = vmatprep.subr.bf16.mxu0 0
      %1693 = vmatpush1.bf16.msra.mxu0 0
      %1694 = vmatprep.mubr.bf16.mxu0 0
      %1695 = vmatmul.mubr.bf16.gmra.mrb[0].mxu0 %v1657
      %v1696 = vpop.f32.mrb[0].mxu0
      %v1697 = vadd.f32 0.0, %v1696
      %v1698 = vpop.f32.mrb[0].mxu0
      %v1699 = vpop.f32.mrb[0].mxu0
      %v1700 = vpop.f32.mrb[0].mxu0
      %1701 = vdwg.mxu0
      %v1703 = vsel %vm1180, %v1604, 0
      %v1706 = vsel %vm1420, %v1608, 0
      %1708 = vmatprep.subr.bf16.mxu0 0
      %1709 = vmatpush1.bf16.msra.mxu0 %v1706
      %1710 = vmatprep.subr.bf16.mxu0 0
      %1711 = vmatpush1.bf16.msra.mxu0 0
      %1712 = vmatprep.subr.bf16.mxu0 0
      %1713 = vmatpush1.bf16.msra.mxu0 0
      %1714 = vmatprep.subr.bf16.mxu0 0
      %1715 = vmatpush1.bf16.msra.mxu0 0
      %1716 = vmatprep.subr.bf16.mxu0 0
      %1717 = vmatpush1.bf16.msra.mxu0 0
      %1718 = vmatprep.subr.bf16.mxu0 0
      %1719 = vmatpush1.bf16.msra.mxu0 0
      %1720 = vmatprep.subr.bf16.mxu0 0
      %1721 = vmatpush1.bf16.msra.mxu0 0
      %1722 = vmatprep.subr.bf16.mxu0 0
      %1723 = vmatpush1.bf16.msra.mxu0 0
      %1724 = vmatprep.subr.bf16.mxu0 0
      %1725 = vmatpush1.bf16.msra.mxu0 0
      %1726 = vmatprep.subr.bf16.mxu0 0
      %1727 = vmatpush1.bf16.msra.mxu0 0
      %1728 = vmatprep.subr.bf16.mxu0 0
      %1729 = vmatpush1.bf16.msra.mxu0 0
      %1730 = vmatprep.subr.bf16.mxu0 0
      %1731 = vmatpush1.bf16.msra.mxu0 0
      %1732 = vmatprep.subr.bf16.mxu0 0
      %1733 = vmatpush1.bf16.msra.mxu0 0
      %1734 = vmatprep.subr.bf16.mxu0 0
      %1735 = vmatpush1.bf16.msra.mxu0 0
      %1736 = vmatprep.subr.bf16.mxu0 0
      %1737 = vmatpush1.bf16.msra.mxu0 0
      %1738 = vmatprep.subr.bf16.mxu0 0
      %1739 = vmatpush1.bf16.msra.mxu0 0
      %1740 = vmatprep.mubr.bf16.mxu0 0
      %1741 = vmatmul.mubr.bf16.gmra.mrb[0].mxu0 %v1703
      %v1742 = vpop.f32.mrb[0].mxu0
      %v1743 = vadd.f32 0.0, %v1742
      %v1744 = vpop.f32.mrb[0].mxu0
      %v1745 = vpop.f32.mrb[0].mxu0
      %v1746 = vpop.f32.mrb[0].mxu0
      %1747 = vdwg.mxu0
      %v1749 = vsel %vm1180, %v1605, 0
      %v1752 = vsel %vm1420, %v1609, 0
      %1754 = vmatprep.subr.bf16.mxu0 0
      %1755 = vmatpush1.bf16.msra.mxu0 %v1752
      %1756 = vmatprep.subr.bf16.mxu0 0
      %1757 = vmatpush1.bf16.msra.mxu0 0
      %1758 = vmatprep.subr.bf16.mxu0 0
      %1759 = vmatpush1.bf16.msra.mxu0 0
      %1760 = vmatprep.subr.bf16.mxu0 0
      %1761 = vmatpush1.bf16.msra.mxu0 0
      %1762 = vmatprep.subr.bf16.mxu0 0
      %1763 = vmatpush1.bf16.msra.mxu0 0
      %1764 = vmatprep.subr.bf16.mxu0 0
      %1765 = vmatpush1.bf16.msra.mxu0 0
      %1766 = vmatprep.subr.bf16.mxu0 0
      %1767 = vmatpush1.bf16.msra.mxu0 0
      %1768 = vmatprep.subr.bf16.mxu0 0
      %1769 = vmatpush1.bf16.msra.mxu0 0
      %1770 = vmatprep.subr.bf16.mxu0 0
      %1771 = vmatpush1.bf16.msra.mxu0 0
      %1772 = vmatprep.subr.bf16.mxu0 0
      %1773 = vmatpush1.bf16.msra.mxu0 0
      %1774 = vmatprep.subr.bf16.mxu0 0
      %1775 = vmatpush1.bf16.msra.mxu0 0
      %1776 = vmatprep.subr.bf16.mxu0 0
      %1777 = vmatpush1.bf16.msra.mxu0 0
      %1778 = vmatprep.subr.bf16.mxu0 0
      %1779 = vmatpush1.bf16.msra.mxu0 0
      %1780 = vmatprep.subr.bf16.mxu0 0
      %1781 = vmatpush1.bf16.msra.mxu0 0
      %1782 = vmatprep.subr.bf16.mxu0 0
      %1783 = vmatpush1.bf16.msra.mxu0 0
      %1784 = vmatprep.subr.bf16.mxu0 0
      %1785 = vmatpush1.bf16.msra.mxu0 0
      %1786 = vmatprep.mubr.bf16.mxu0 0
      %1787 = vmatmul.mubr.bf16.gmra.mrb[0].mxu0 %v1749
      %v1788 = vpop.f32.mrb[0].mxu0
      %v1789 = vadd.f32 0.0, %v1788
      %v1790 = vpop.f32.mrb[0].mxu0
      %v1791 = vpop.f32.mrb[0].mxu0
      %v1792 = vpop.f32.mrb[0].mxu0
      %1793 = vdwg.mxu0
      %v1794 = vsel %vm467, %v1651, 0.0
      %v1795 = vsel %vm467, %v1697, 0.0
      %v1796 = vadd.f32 %v1794, %v1795
      %v1797 = vsel %vm467, %v1743, 0.0
      %v1798 = vadd.f32 %v1796, %v1797
      %v1799 = vsel %vm467, %v1789, 0.0
      %v1800 = vadd.f32 %v1798, %v1799
      %v1801 = vadd.f32 %v464, %v1800
      %v1802 = vld [vmem:[%s7] sm:$0x1]
      %v1804 = vlaneseq
      %v1805 = vshrl.u32 %v1804, 7
      %v1806 = vsub.s32 0, %v1805
      %v1807 = vrot.slane %v1802, %v1806
      %v1809 = vadd.f32 %v1801, %v1807
      %v1810 = vld [vmem:[%s8] sm:$0x1]
      %v1811 = vld [vmem:[%s9] sm:$0x1]
      %v1812 = vsel %vm467, %v1809, 0.0
      %1813 = vadd.xlane.f32.xlu0 %v1812
      %v1814 = vpop.xlane.xlu0 %1813
      %v1815 = vmul.f32 %v1814, %v471
      %v1816 = vsub.f32 %v1809, %v1815
      %v1817 = vmul.f32 %v1816, %v1816
      %v1818 = vsel %vm467, %v1817, 0.0
      %1819 = vadd.xlane.f32.xlu0 %v1818
      %v1820 = vpop.xlane.xlu0 %1819
      %v1821 = vmul.f32 %v1820, %v471
      %v1822 = vadd.f32 %v1821, 1e-05
      %v1823 = vrsqrt.pop %v1822
      %v1824 = vmul.f32 %v1816, %v1823
      %v1826 = vlaneseq
      %v1827 = vshrl.u32 %v1826, 7
      %v1828 = vsub.s32 0, %v1827
      %v1829 = vrot.slane %v1810, %v1828
      %v1831 = vmul.f32 %v1824, %v1829
      %v1833 = vlaneseq
      %v1834 = vshrl.u32 %v1833, 7
      %v1835 = vsub.s32 0, %v1834
      %v1836 = vrot.slane %v1811, %v1835
      %v1838 = vadd.f32 %v1831, %v1836
      %v1839 = vpack.c.bf16 %v1838, %v1838
      %v1840 = vld [vmem:[%s10] sm:$0xf]
      %v1841 = vld [vmem:[%s10 + $0x4] sm:$0xf]
      %v1842 = vld [vmem:[%s10 + $0x8] sm:$0xf]
      %v1843 = vld [vmem:[%s10 + $0xc] sm:$0xf]
      %v1844 = vld [vmem:[%s11] sm:$0x1]
      %v1846 = vlaneseq
      %v1847 = vshrl.u32 %v1846, 7
      %v1848 = vsub.s32 0, %v1847
      %v1849 = vrot.slane %v1844, %v1848
      %v1855 = vunpack.c.l.b16 %v1840
      %v1856 = vunpack.c.l.b16 %v1841
      %v1857 = vunpack.c.l.b16 %v1842
      %v1858 = vunpack.c.l.b16 %v1843
      %v1859 = vpack.c.b16 %v1856, %v1855
      %v1860 = vpack.c.b16 %v1858, %v1857
      %v1864 = vsel %vm467, %v1839, 0
      %1866 = vmatprep.subr.bf16.mxu0 0
      %1867 = vmatpush1.bf16.msra.mxu0 %v1859
      %1868 = vmatprep.subr.bf16.mxu0 0
      %1869 = vmatpush1.bf16.msra.mxu0 %v1860
      %1870 = vmatprep.subr.bf16.mxu0 0
      %1871 = vmatpush1.bf16.msra.mxu0 0
      %1872 = vmatprep.subr.bf16.mxu0 0
      %1873 = vmatpush1.bf16.msra.mxu0 0
      %1874 = vmatprep.subr.bf16.mxu0 0
      %1875 = vmatpush1.bf16.msra.mxu0 0
      %1876 = vmatprep.subr.bf16.mxu0 0
      %1877 = vmatpush1.bf16.msra.mxu0 0
      %1878 = vmatprep.subr.bf16.mxu0 0
      %1879 = vmatpush1.bf16.msra.mxu0 0
      %1880 = vmatprep.subr.bf16.mxu0 0
      %1881 = vmatpush1.bf16.msra.mxu0 0
      %1882 = vmatprep.subr.bf16.mxu0 0
      %1883 = vmatpush1.bf16.msra.mxu0 0
      %1884 = vmatprep.subr.bf16.mxu0 0
      %1885 = vmatpush1.bf16.msra.mxu0 0
      %1886 = vmatprep.subr.bf16.mxu0 0
      %1887 = vmatpush1.bf16.msra.mxu0 0
      %1888 = vmatprep.subr.bf16.mxu0 0
      %1889 = vmatpush1.bf16.msra.mxu0 0
      %1890 = vmatprep.subr.bf16.mxu0 0
      %1891 = vmatpush1.bf16.msra.mxu0 0
      %1892 = vmatprep.subr.bf16.mxu0 0
      %1893 = vmatpush1.bf16.msra.mxu0 0
      %1894 = vmatprep.subr.bf16.mxu0 0
      %1895 = vmatpush1.bf16.msra.mxu0 0
      %1896 = vmatprep.subr.bf16.mxu0 0
      %1897 = vmatpush1.bf16.msra.mxu0 0
      %1898 = vmatprep.mubr.bf16.mxu0 0
      %1899 = vmatmul.mubr.bf16.gmra.mrb[0].mxu0 %v1864
      %v1900 = vpop.f32.mrb[0].mxu0
      %v1901 = vadd.f32 %v1849, %v1900
      %v1902 = vpop.f32.mrb[0].mxu0
      %v1903 = vpop.f32.mrb[0].mxu0
      %v1904 = vpop.f32.mrb[0].mxu0
      %1905 = vdwg.mxu0
      %v1906 = vmul.f32 %v1901, 0.5
      %v1907 = vmul.f32 %v1901, 0.70710677
      %vm1908 = vcmp.ge.f32.partialorder %v1907, 0.0
      %v1909 = vsel %vm1908, 1.0, -1.0
      %v1910 = vand.u32 2147483647, %v1907
      %v1911 = vmul.f32 %v1910, 0.3275911
      %v1912 = vadd.f32 %v1911, 1.0
      %v1913 = vrcp.pop %v1912
      %v1914 = vmul.f32 1.0, %v1913
      %v1915 = vmul.f32 %v1914, 1.0614054
      %v1916 = vadd.f32 %v1915, -1.4531521
      %v1917 = vmul.f32 %v1916, %v1914
      %v1918 = vadd.f32 %v1917, 1.4214138
      %v1919 = vmul.f32 %v1918, %v1914
      %v1920 = vadd.f32 %v1919, -0.28449672
      %v1921 = vmul.f32 %v1920, %v1914
      %v1922 = vadd.f32 %v1921, 0.2548296
      %v1923 = vmul.f32 %v1922, %v1914
      %v1924 = vsub.f32 0.0, %v1910
      %v1925 = vmul.f32 %v1924, %v1910
      %v1926 = vmul.f32 %v1925, 1.442695
      %v1927 = vpow.pop %v1926
      %v1928 = vmul.f32 %v1923, %v1927
      %v1929 = vsub.f32 1.0, %v1928
      %v1930 = vmul.f32 %v1909, %v1929
      %v1931 = vadd.f32 %v1930, 1.0
      %v1932 = vmul.f32 %v1906, %v1931
      %v1933 = vpack.c.bf16 %v1932, %v1932
      %v1934 = vld [vmem:[%s12] sm:$0xf]
      %v1935 = vld [vmem:[%s12 + $0x4] sm:$0xf]
      %v1936 = vld [vmem:[%s12 + $0x8] sm:$0xf]
      %v1937 = vld [vmem:[%s12 + $0xc] sm:$0xf]
      %v1938 = vld [vmem:[%s12 + $0x10] sm:$0xf]
      %v1939 = vld [vmem:[%s12 + $0x14] sm:$0xf]
      %v1940 = vld [vmem:[%s12 + $0x18] sm:$0xf]
      %v1941 = vld [vmem:[%s12 + $0x1c] sm:$0xf]
      %v1942 = vld [vmem:[%s13] sm:$0x1]
      %v1944 = vlaneseq
      %v1945 = vshrl.u32 %v1944, 7
      %v1946 = vsub.s32 0, %v1945
      %v1947 = vrot.slane %v1942, %v1946
      %v1957 = vunpack.c.l.b16 %v1934
      %v1958 = vunpack.c.l.b16 %v1935
      %v1959 = vunpack.c.l.b16 %v1936
      %v1960 = vunpack.c.l.b16 %v1937
      %v1961 = vunpack.c.l.b16 %v1938
      %v1962 = vunpack.c.l.b16 %v1939
      %v1963 = vunpack.c.l.b16 %v1940
      %v1964 = vunpack.c.l.b16 %v1941
      %v1965 = vpack.c.b16 %v1958, %v1957
      %v1966 = vpack.c.b16 %v1960, %v1959
      %v1967 = vpack.c.b16 %v1962, %v1961
      %v1968 = vpack.c.b16 %v1964, %v1963
      %vm1973 = vcmask 523264
      %v1975 = vsel %vm1973, %v1933, 0
      %1977 = vmatprep.subr.bf16.mxu0 0
      %1978 = vmatpush1.bf16.msra.mxu0 %v1965
      %1979 = vmatprep.subr.bf16.mxu0 0
      %1980 = vmatpush1.bf16.msra.mxu0 %v1966
      %1981 = vmatprep.subr.bf16.mxu0 0
      %1982 = vmatpush1.bf16.msra.mxu0 %v1967
      %1983 = vmatprep.subr.bf16.mxu0 0
      %1984 = vmatpush1.bf16.msra.mxu0 %v1968
      %1985 = vmatprep.subr.bf16.mxu0 0
      %1986 = vmatpush1.bf16.msra.mxu0 0
      %1987 = vmatprep.subr.bf16.mxu0 0
      %1988 = vmatpush1.bf16.msra.mxu0 0
      %1989 = vmatprep.subr.bf16.mxu0 0
      %1990 = vmatpush1.bf16.msra.mxu0 0
      %1991 = vmatprep.subr.bf16.mxu0 0
      %1992 = vmatpush1.bf16.msra.mxu0 0
      %1993 = vmatprep.subr.bf16.mxu0 0
      %1994 = vmatpush1.bf16.msra.mxu0 0
      %1995 = vmatprep.subr.bf16.mxu0 0
      %1996 = vmatpush1.bf16.msra.mxu0 0
      %1997 = vmatprep.subr.bf16.mxu0 0
      %1998 = vmatpush1.bf16.msra.mxu0 0
      %1999 = vmatprep.subr.bf16.mxu0 0
      %2000 = vmatpush1.bf16.msra.mxu0 0
      %2001 = vmatprep.subr.bf16.mxu0 0
      %2002 = vmatpush1.bf16.msra.mxu0 0
      %2003 = vmatprep.subr.bf16.mxu0 0
      %2004 = vmatpush1.bf16.msra.mxu0 0
      %2005 = vmatprep.subr.bf16.mxu0 0
      %2006 = vmatpush1.bf16.msra.mxu0 0
      %2007 = vmatprep.subr.bf16.mxu0 0
      %2008 = vmatpush1.bf16.msra.mxu0 0
      %2009 = vmatprep.mubr.bf16.mxu0 0
      %2010 = vmatmul.mubr.bf16.gmra.mrb[0].mxu0 %v1975
      %v2011 = vpop.f32.mrb[0].mxu0
      %v2012 = vadd.f32 %v1947, %v2011
      %v2013 = vpop.f32.mrb[0].mxu0
      %v2014 = vpop.f32.mrb[0].mxu0
      %v2015 = vpop.f32.mrb[0].mxu0
      %2016 = vdwg.mxu0
      %v2017 = vadd.f32 %v1809, %v2012
      %2018 = vst.msk [vmem:[%s462] sm:$0xff] %vm467, %v2017
      %p2019 = scmp.lt.s32.totalorder %s25, 1
      %s2020 = scalar_select %p2019, %s25, 1
      %s2021 = smul.addr %s2020, 8
      %s2022 = scalar_lea.vmem %s14, %s2021
      // Predicated region
      $region77: #{transformer_forward.2} parent=75 // pred_check
        %p2023 = pneg %p342
      $region78: #{transformer_forward.2} parent=75 // pred_check_branch
        %2025 = sbr.rel (%p2023) target = $region80
      $region79: #{transformer_forward.2} parent=75 // pred_region
        _
      $region80: #{transformer_forward.2} parent=75 // pred_fallthru
        _
    $region76: #{transformer_forward.2} parent=5 // pred_fallthru
      _
    %p2026 = scmp.le.s32.totalorder 2, %s20
    // Predicated region
    $region81: #{transformer_forward.2} parent=5 // pred_check
      %p2027 = pneg %p2026
    $region82: #{transformer_forward.2} parent=5 // pred_check_branch
      %2029 = sbr.rel (%p2027) target = $region84
    $region83: #{transformer_forward.2} parent=5 // pred_region
      %s2030 = ssub.s32 %s20, 2
      // Predicated region
      $region85: #{transformer_forward.2} parent=83 // pred_check
        %p2031 = pneg %p348
      $region86: #{transformer_forward.2} parent=83 // pred_check_branch
        %2033 = sbr.rel (%p2031) target = $region88
      $region87: #{transformer_forward.2} parent=83 // pred_region
        %p2034 = scmp.lt.s32.totalorder %s26, 1
        %s2035 = scalar_select %p2034, %s26, 1
        %s2036 = smul.addr %s2035, 8
        %s2037 = scalar_lea.vmem %s14, %s2036
      $region88: #{transformer_forward.2} parent=83 // pred_fallthru
        _
    $region84: #{transformer_forward.2} parent=5 // pred_fallthru
      _
  $region6: #{transformer_forward.2} parent=0 // loop_footer
    %s24 = sadd.s32 1, %s20
  $region7: #{transformer_forward.2} parent=0 // loop_footer_branch
    %19 = sbr.rel target = $region3
  $region8: #{transformer_forward.2} parent=0 // loop_exit
    _

</llo_original>
